<compile_context>
chip_gen: v7x
topology: tpu7x:2x2x1
jax: 0.10.0
libtpu: 0.0.40
codegen_flags: <defaults>
</compile_context>

<pallas_src>
import functools

import numpy as np
import jax
import jax.numpy as jnp
from jax.experimental import pallas as pl
from jax.experimental.pallas import tpu as pltpu


# ---------------------------------------------------------------------------
# Fused kernel: one batch tile of `bt` images -> padded class probabilities.
# ---------------------------------------------------------------------------
def _cnn_mnist_kernel(x_ref, w1f_ref, aff1_ref, w2b_ref, aff2_ref,
                      wfc1_ref, fc1b_ref, fc2w_ref, fc2b_ref, o_ref):
    f32 = jnp.float32
    bf16 = jnp.bfloat16
    bt = x_ref.shape[1]            # batch tile (sublane axis), multiple of 16

    def _pool_width(v):
        # max(v[:, l], v[:, l+1]) is the 2-wide pool at even lanes l; odd
        # lanes are don't-care (the next stage's banded / fc weights are zero
        # there), so no lane compaction is needed.  Values are finite
        # (post-ReLU/BN), so 0 * don't-care stays 0 downstream.
        shifted = jnp.concatenate([v[:, 1:], v[:, :1]], axis=1)
        return jnp.maximum(v, shifted)

    def _pool_height(v, rows_out, lanes):
        v = v.reshape(rows_out, 2, bt, lanes)
        return jnp.maximum(v[:, 0], v[:, 1])           # (rows_out, bt, lanes)

    x = x_ref[...]                                     # (28, bt, 28) bf16

    # ---- conv1 (1->10, k=5): single fused K=140 banded matmul -------------
    # rows = (out_row i1, b), i1 in 0..23 ; lanes = (c1, j1) -> 10*24 = 240
    # K index = kh*28 + input_col; the 5 row-shifted slabs are concatenated
    # along the lane axis (one dot instead of 5 -> ~2.4x fewer MXU pushes).
    xs140 = jnp.concatenate([x[kh:kh + 24] for kh in range(5)], axis=-1)
    xs140 = xs140.reshape(24 * bt, 140)                # (24*bt, 140) bf16
    acc1 = jnp.dot(xs140, w1f_ref[...], preferred_element_type=f32)

    # bias -> relu -> eval-mode BatchNorm (per-channel affine, lane-expanded)
    y1 = jnp.maximum(acc1 + aff1_ref[0:1, :], 0.0)
    y1 = y1 * aff1_ref[1:2, :] + aff1_ref[2:3, :]      # (24*bt, 240) f32

    # ---- 2x2/2 max pool #1 (fused, all in VMEM) ---------------------------
    y1 = _pool_width(y1)
    p1 = _pool_height(y1, 12, 240)                     # (12, bt, 240) f32

    # ---- conv2 (10->20, k=5): 5 banded bf16 matmuls (K=240 each already
    # ~fills the MXU depth); band matrices read only even (valid) lanes ------
    # rows = (out_row i2, b), i2 in 0..7 ; lanes = (c2, j2) -> 20*8 = 160
    ps = p1[0:8].reshape(8 * bt, 240).astype(bf16)
    acc2 = jnp.dot(ps, w2b_ref[0], preferred_element_type=f32)
    for kh in range(1, 5):
        ps = p1[kh:kh + 8].reshape(8 * bt, 240).astype(bf16)
        acc2 = acc2 + jnp.dot(ps, w2b_ref[kh], preferred_element_type=f32)

    y2 = jnp.maximum(acc2 + aff2_ref[0:1, :], 0.0)
    y2 = y2 * aff2_ref[1:2, :] + aff2_ref[2:3, :]      # (8*bt, 160) f32

    # ---- 2x2/2 max pool #2 ------------------------------------------------
    y2 = _pool_width(y2)
    p2 = _pool_height(y2, 4, 160)                      # (4, bt, 160) f32

    # ---- fc1 (320 -> 84): contraction split into 4 bf16 matmuls (one per
    # pooled row i3); torch NCHW flatten order folded into wfc1 --------------
    h = jnp.dot(p2[0].astype(bf16), wfc1_ref[0], preferred_element_type=f32)
    for i3 in range(1, 4):
        h = h + jnp.dot(p2[i3].astype(bf16), wfc1_ref[i3],
                        preferred_element_type=f32)
    h = jnp.maximum(h + fc1b_ref[...], 0.0)            # (bt, 84) f32
    # TODO(synk): F.dropout(training=True) is stochastic/train-time; the
    # eval-mode identity is implemented here (likewise BN uses running stats).

    # ---- fc2 -> softmax over lane-dense padded (128) logits ----------------
    # pad lanes carry logit -1e30 (zero weights + -1e30 bias) -> exp == 0,
    # so the softmax over 128 lanes equals the softmax over the real classes.
    logits = jnp.dot(h.astype(bf16), fc2w_ref[...], preferred_element_type=f32)
    logits = logits + fc2b_ref[...]
    m = jnp.max(logits, axis=-1, keepdims=True)
    e = jnp.exp(logits - m)
    o_ref[...] = e / jnp.sum(e, axis=-1, keepdims=True)


# ---------------------------------------------------------------------------
# One-time parameter preparation (outside the jit hot path).
# ---------------------------------------------------------------------------
def prepare_params(params, eps=1e-5):
    f32 = jnp.float32
    bf16 = jnp.bfloat16
    c1w = params["conv1_w"].astype(f32)                # (10, 1, 5, 5)
    c2w = params["conv2_w"].astype(f32)                # (20, 10, 5, 5)
    fc1w = params["fc1_w"].astype(f32)                 # (84, 320)
    fc2w = params["fc2_w"].astype(f32)                 # (nc, 84)
    nh = fc1w.shape[0]
    nc = fc2w.shape[0]
    nc_pad = max(128, ((nc + 127) // 128) * 128)       # lane-dense output

    # conv1 fused banded matrix: (140, 240); K = kh*28 + in_col,
    # out lane = c1*24 + j1.
    kh, c, j, kw = np.meshgrid(np.arange(5), np.arange(10), np.arange(24),
                               np.arange(5), indexing="ij")
    w1band = jnp.zeros((5, 28, 240), f32)
    w1band = w1band.at[kh, j + kw, c * 24 + j].set(c1w[c, 0, kh, kw])
    w1f = w1band.reshape(140, 240).astype(bf16)

    # conv2 banded matrices: (5, 240, 160);
    # in lane = c1*24 + 2*(j2+kw2) (even = valid pooled cols), out = c2*8 + j2
    kh2, c2, c1i, j2, kw2 = np.meshgrid(np.arange(5), np.arange(20),
                                        np.arange(10), np.arange(8),
                                        np.arange(5), indexing="ij")
    w2band = jnp.zeros((5, 240, 160), f32)
    w2band = w2band.at[kh2, c1i * 24 + 2 * (j2 + kw2),
                       c2 * 8 + j2].set(c2w[c2, c1i, kh2, kw2])
    w2band = w2band.astype(bf16)

    # fc1 split by pooled row i3: (4, 160, 84); in lane = c2*8 + 2*j3,
    # torch NCHW flatten index = c2*16 + i3*4 + j3 folded in here.
    i3, c2b, j3, u = np.meshgrid(np.arange(4), np.arange(20), np.arange(4),
                                 np.arange(nh), indexing="ij")
    wfc1 = jnp.zeros((4, 160, nh), f32)
    wfc1 = wfc1.at[i3, c2b * 8 + 2 * j3, u].set(
        fc1w[u, c2b * 16 + i3 * 4 + j3])
    wfc1 = wfc1.astype(bf16)

    # eval-mode BN folded to per-lane scale/shift, packed with the conv bias
    # (kept f32; elementwise math stays f32 in the kernel).
    s1 = params["bn1_gamma"] / jnp.sqrt(params["bn1_var"] + eps)
    t1 = params["bn1_beta"] - params["bn1_mean"] * s1
    aff1 = jnp.stack([jnp.repeat(params["conv1_b"].astype(f32), 24),
                      jnp.repeat(s1.astype(f32), 24),
                      jnp.repeat(t1.astype(f32), 24)], axis=0)       # (3, 240)
    s2 = params["bn2_gamma"] / jnp.sqrt(params["bn2_var"] + eps)
    t2 = params["bn2_beta"] - params["bn2_mean"] * s2
    aff2 = jnp.stack([jnp.repeat(params["conv2_b"].astype(f32), 8),
                      jnp.repeat(s2.astype(f32), 8),
                      jnp.repeat(t2.astype(f32), 8)], axis=0)        # (3, 160)

    # fc2, padded lane-dense: zero weight columns + -1e30 bias on pad lanes.
    fc2_wT = jnp.zeros((nh, nc_pad), f32).at[:, :nc].set(fc2w.T).astype(bf16)
    fc2_b = jnp.full((1, nc_pad), -1e30, f32).at[0, :nc].set(
        params["fc2_b"].astype(f32))

    return {
        "w1f": w1f, "aff1": aff1,
        "w2band": w2band, "aff2": aff2,
        "wfc1": wfc1,
        "fc1_b": params["fc1_b"].astype(f32)[None, :],
        "fc2_wT": fc2_wT,
        "fc2_b": fc2_b,
    }


# ---------------------------------------------------------------------------
# Forward pass: a single pallas_call, grid over batch tiles.
# ---------------------------------------------------------------------------
def cnn_mnist_forward(x_nchw, prep, num_classes, batch_tile=128):
    assert batch_tile % 16 == 0 and batch_tile >= 16
    n = x_nchw.shape[0]
    assert x_nchw.shape[1:] == (1, 28, 28)
    # Cap the tile at the (16-aligned) padded batch so tiny batches don't pad
    # all the way to batch_tile.
    bt = min(batch_tile, ((n + 15) // 16) * 16)
    n_pad = ((n + bt - 1) // bt) * bt

    x = x_nchw.reshape(n, 28, 28)
    if n_pad != n:
        x = jnp.pad(x, ((0, n_pad - n), (0, 0), (0, 0)))
    # (row, batch, col): batch on the sublane axis so every per-spatial-row op
    # inside the kernel is a cheap leading-axis op.  Shipped as bf16 (halves
    # the input DMA; conv1 operands are bf16 anyway).  jit fuses pad +
    # transpose + convert into one copy.
    x_t = jnp.transpose(x, (1, 0, 2)).astype(jnp.bfloat16)   # (28, n_pad, 28)

    nc_pad = prep["fc2_wT"].shape[1]
    grid = (n_pad // bt,)

    out = pl.pallas_call(
        _cnn_mnist_kernel,
        out_shape=jax.ShapeDtypeStruct((n_pad, nc_pad), jnp.float32),
        grid=grid,
        in_specs=[
            pl.BlockSpec((28, bt, 28), lambda i: (0, i, 0)),
            pl.BlockSpec(prep["w1f"].shape, lambda i: (0, 0)),
            pl.BlockSpec(prep["aff1"].shape, lambda i: (0, 0)),
            pl.BlockSpec(prep["w2band"].shape, lambda i: (0, 0, 0)),
            pl.BlockSpec(prep["aff2"].shape, lambda i: (0, 0)),
            pl.BlockSpec(prep["wfc1"].shape, lambda i: (0, 0, 0)),
            pl.BlockSpec(prep["fc1_b"].shape, lambda i: (0, 0)),
            pl.BlockSpec(prep["fc2_wT"].shape, lambda i: (0, 0)),
            pl.BlockSpec(prep["fc2_b"].shape, lambda i: (0, 0)),
        ],
        out_specs=pl.BlockSpec((bt, nc_pad), lambda i: (i, 0)),
        compiler_params=pltpu.CompilerParams(
            dimension_semantics=("parallel",),
            vmem_limit_bytes=48 * 1024 * 1024),
    )(x_t, prep["w1f"], prep["aff1"], prep["w2band"], prep["aff2"],
      prep["wfc1"], prep["fc1_b"], prep["fc2_wT"], prep["fc2_b"])
    return out[:n, :num_classes]


# ---------------------------------------------------------------------------
# Pure-JAX reference (eval-mode semantics of CNNMnist.forward).
# ---------------------------------------------------------------------------
def _reference_forward(x, params, eps=1e-5):
    hi = jax.lax.Precision.HIGHEST

    def bn(y, g, b, m, v):
        s = g / jnp.sqrt(v + eps)
        return y * s[None, :, None, None] + (b - m * s)[None, :, None, None]

    def pool(y):
        return jax.lax.reduce_window(y, -jnp.inf, jax.lax.max,
                                     (1, 1, 2, 2), (1, 1, 2, 2), "VALID")

    y = jax.lax.conv_general_dilated(
        x, params["conv1_w"], (1, 1), "VALID",
        dimension_numbers=("NCHW", "OIHW", "NCHW"), precision=hi)
    y = jnp.maximum(y + params["conv1_b"][None, :, None, None], 0.0)
    y = bn(y, params["bn1_gamma"], params["bn1_beta"],
           params["bn1_mean"], params["bn1_var"])
    y = pool(y)
    y = jax.lax.conv_general_dilated(
        y, params["conv2_w"], (1, 1), "VALID",
        dimension_numbers=("NCHW", "OIHW", "NCHW"), precision=hi)
    y = jnp.maximum(y + params["conv2_b"][None, :, None, None], 0.0)
    y = bn(y, params["bn2_gamma"], params["bn2_beta"],
           params["bn2_mean"], params["bn2_var"])
    y = pool(y)
    feat = y.reshape(y.shape[0], -1)
    h = jnp.maximum(jnp.dot(feat, params["fc1_w"].T, precision=hi)
                    + params["fc1_b"], 0.0)
    logits = jnp.dot(h, params["fc2_w"].T, precision=hi) + params["fc2_b"]
    return jax.nn.softmax(logits, axis=1)


# ---------------------------------------------------------------------------
if __name__ == "__main__":
    num_classes = 10
    key = jax.random.PRNGKey(0)
    ks = jax.random.split(key, 17)
    f32 = jnp.float32
    params = {
        "conv1_w": 0.1 * jax.random.normal(ks[0], (10, 1, 5, 5), f32),
        "conv1_b": 0.1 * jax.random.normal(ks[1], (10,), f32),
        "bn1_gamma": 1.0 + 0.1 * jax.random.normal(ks[2], (10,), f32),
        "bn1_beta": 0.1 * jax.random.normal(ks[3], (10,), f32),
        "bn1_mean": 0.1 * jax.random.normal(ks[4], (10,), f32),
        "bn1_var": jax.random.uniform(ks[5], (10,), f32, 0.5, 1.5),
        "conv2_w": 0.1 * jax.random.normal(ks[6], (20, 10, 5, 5), f32),
        "conv2_b": 0.1 * jax.random.normal(ks[7], (20,), f32),
        "bn2_gamma": 1.0 + 0.1 * jax.random.normal(ks[8], (20,), f32),
        "bn2_beta": 0.1 * jax.random.normal(ks[9], (20,), f32),
        "bn2_mean": 0.1 * jax.random.normal(ks[10], (20,), f32),
        "bn2_var": jax.random.uniform(ks[11], (20,), f32, 0.5, 1.5),
        "fc1_w": 0.1 * jax.random.normal(ks[12], (84, 320), f32),
        "fc1_b": 0.1 * jax.random.normal(ks[13], (84,), f32),
        "fc2_w": 0.1 * jax.random.normal(ks[14], (num_classes, 84), f32),
        "fc2_b": 0.1 * jax.random.normal(ks[15], (num_classes,), f32),
    }
    # MNIST-shaped input (28x28 so the flatten yields 320 = fc1 in-features).
    # 40 images with batch_tile=16 -> 3 grid steps (exercises the pipeline and
    # the batch-padding path).  Production default is batch_tile=128.
    x = jax.random.normal(ks[16], (40, 1, 28, 28), f32)

    prep = prepare_params(params)                       # outside the hot path
    fwd = jax.jit(functools.partial(cnn_mnist_forward,
                                    num_classes=num_classes, batch_tile=16))
    probs = jax.block_until_ready(fwd(x, prep))

    ref = jax.block_until_ready(_reference_forward(x, params))

    assert probs.shape == (40, num_classes)
    assert bool(jnp.all(jnp.isfinite(probs)))
    assert bool(jnp.allclose(jnp.sum(probs, axis=1), 1.0, atol=1e-5))
    assert bool(jnp.allclose(probs, ref, atol=2e-2, rtol=2e-2))
    print("KERNEL_OK")
</pallas_src>

<mosaic_0001>
module attributes {stable_mosaic.version = 11 : i64} {
  func.func @_cnn_mnist_kernel(%arg0: i32, %arg1: memref<28x16x28xbf16, #tpu.memory_space<vmem>>, %arg2: memref<140x240xbf16, #tpu.memory_space<vmem>>, %arg3: memref<3x240xf32, #tpu.memory_space<vmem>>, %arg4: memref<5x240x160xbf16, #tpu.memory_space<vmem>>, %arg5: memref<3x160xf32, #tpu.memory_space<vmem>>, %arg6: memref<4x160x84xbf16, #tpu.memory_space<vmem>>, %arg7: memref<1x84xf32, #tpu.memory_space<vmem>>, %arg8: memref<84x128xbf16, #tpu.memory_space<vmem>>, %arg9: memref<1x128xf32, #tpu.memory_space<vmem>>, %arg10: memref<16x128xf32, #tpu.memory_space<vmem>>) attributes {dimension_semantics = [#tpu.dimension_semantics<parallel>], iteration_bounds = array<i64: 3>, scalar_prefetch = 0 : i64, scratch_operands = 0 : i64, tpu.core_type = #tpu.core_type<tc>, window_params = [{transform_indices = @transform_0, window_bounds = array<i64: 28, 16, 28>}, {pipeline_mode = #tpu.pipeline_mode<synchronous>, transform_indices = @transform_1, window_bounds = array<i64: 140, 240>}, {pipeline_mode = #tpu.pipeline_mode<synchronous>, transform_indices = @transform_2, window_bounds = array<i64: 3, 240>}, {pipeline_mode = #tpu.pipeline_mode<synchronous>, transform_indices = @transform_3, window_bounds = array<i64: 5, 240, 160>}, {pipeline_mode = #tpu.pipeline_mode<synchronous>, transform_indices = @transform_4, window_bounds = array<i64: 3, 160>}, {pipeline_mode = #tpu.pipeline_mode<synchronous>, transform_indices = @transform_5, window_bounds = array<i64: 4, 160, 84>}, {pipeline_mode = #tpu.pipeline_mode<synchronous>, transform_indices = @transform_6, window_bounds = array<i64: 1, 84>}, {pipeline_mode = #tpu.pipeline_mode<synchronous>, transform_indices = @transform_7, window_bounds = array<i64: 84, 128>}, {pipeline_mode = #tpu.pipeline_mode<synchronous>, transform_indices = @transform_8, window_bounds = array<i64: 1, 128>}, {transform_indices = @transform_9, window_bounds = array<i64: 16, 128>}]} {
    %c0 = arith.constant 0 : index
    %c0_0 = arith.constant 0 : index
    %c0_1 = arith.constant 0 : index
    %0 = vector.load %arg1[%c0, %c0_0, %c0_1] : memref<28x16x28xbf16, #tpu.memory_space<vmem>>, vector<28x16x28xbf16>
    %1 = vector.extract_strided_slice %0 {offsets = [0, 0, 0], sizes = [24, 16, 28], strides = [1, 1, 1]} : vector<28x16x28xbf16> to vector<24x16x28xbf16>
    %2 = vector.extract_strided_slice %0 {offsets = [1, 0, 0], sizes = [24, 16, 28], strides = [1, 1, 1]} : vector<28x16x28xbf16> to vector<24x16x28xbf16>
    %3 = vector.extract_strided_slice %0 {offsets = [2, 0, 0], sizes = [24, 16, 28], strides = [1, 1, 1]} : vector<28x16x28xbf16> to vector<24x16x28xbf16>
    %4 = vector.extract_strided_slice %0 {offsets = [3, 0, 0], sizes = [24, 16, 28], strides = [1, 1, 1]} : vector<28x16x28xbf16> to vector<24x16x28xbf16>
    %5 = vector.extract_strided_slice %0 {offsets = [4, 0, 0], sizes = [24, 16, 28], strides = [1, 1, 1]} : vector<28x16x28xbf16> to vector<24x16x28xbf16>
    %6 = tpu.concatenate %1, %2, %3, %4, %5 in 2 : vector<24x16x28xbf16>, vector<24x16x28xbf16>, vector<24x16x28xbf16>, vector<24x16x28xbf16>, vector<24x16x28xbf16> -> vector<24x16x140xbf16>
    %7 = vector.shape_cast %6 : vector<24x16x140xbf16> to vector<384x140xbf16>
    %c0_2 = arith.constant 0 : index
    %c0_3 = arith.constant 0 : index
    %8 = vector.load %arg2[%c0_2, %c0_3] : memref<140x240xbf16, #tpu.memory_space<vmem>>, vector<140x240xbf16>
    %cst = arith.constant dense<0.000000e+00> : vector<384x240xf32>
    %9 = tpu.matmul %7, %8, %cst {dimension_numbers = #tpu.dot_dimension_numbers<[1], [0], [0], [1], [0, 0, 1, 1], [], []>} : vector<384x140xbf16>, vector<140x240xbf16>, vector<384x240xf32> -> vector<384x240xf32>
    %c0_4 = arith.constant 0 : index
    %c0_5 = arith.constant 0 : index
    %10 = vector.load %arg3[%c0_4, %c0_5] : memref<3x240xf32, #tpu.memory_space<vmem>>, vector<1x240xf32>
    %11 = vector.broadcast %10 : vector<1x240xf32> to vector<384x240xf32>
    %12 = arith.addf %9, %11 : vector<384x240xf32>
    %cst_6 = arith.constant 0.000000e+00 : f32
    %13 = vector.broadcast %cst_6 : f32 to vector<384x240xf32>
    %14 = arith.maximumf %12, %13 : vector<384x240xf32>
    %c1 = arith.constant 1 : index
    %c0_7 = arith.constant 0 : index
    %15 = vector.load %arg3[%c1, %c0_7] : memref<3x240xf32, #tpu.memory_space<vmem>>, vector<1x240xf32>
    %16 = vector.broadcast %15 : vector<1x240xf32> to vector<384x240xf32>
    %17 = arith.mulf %14, %16 : vector<384x240xf32>
    %c2 = arith.constant 2 : index
    %c0_8 = arith.constant 0 : index
    %18 = vector.load %arg3[%c2, %c0_8] : memref<3x240xf32, #tpu.memory_space<vmem>>, vector<1x240xf32>
    %19 = vector.broadcast %18 : vector<1x240xf32> to vector<384x240xf32>
    %20 = arith.addf %17, %19 : vector<384x240xf32>
    %21 = vector.extract_strided_slice %20 {offsets = [0, 1], sizes = [384, 239], strides = [1, 1]} : vector<384x240xf32> to vector<384x239xf32>
    %22 = vector.extract_strided_slice %20 {offsets = [0, 0], sizes = [384, 1], strides = [1, 1]} : vector<384x240xf32> to vector<384x1xf32>
    %23 = tpu.concatenate %21, %22 in 1 : vector<384x239xf32>, vector<384x1xf32> -> vector<384x240xf32>
    %24 = arith.maximumf %20, %23 : vector<384x240xf32>
    %25 = vector.shape_cast %24 : vector<384x240xf32> to vector<12x2x16x240xf32>
    %26 = vector.extract_strided_slice %25 {offsets = [0, 0, 0, 0], sizes = [12, 1, 16, 240], strides = [1, 1, 1, 1]} : vector<12x2x16x240xf32> to vector<12x1x16x240xf32>
    %27 = vector.shape_cast %26 : vector<12x1x16x240xf32> to vector<12x16x240xf32>
    %28 = vector.extract_strided_slice %25 {offsets = [0, 1, 0, 0], sizes = [12, 1, 16, 240], strides = [1, 1, 1, 1]} : vector<12x2x16x240xf32> to vector<12x1x16x240xf32>
    %29 = vector.shape_cast %28 : vector<12x1x16x240xf32> to vector<12x16x240xf32>
    %30 = arith.maximumf %27, %29 : vector<12x16x240xf32>
    %31 = vector.extract_strided_slice %30 {offsets = [0, 0, 0], sizes = [8, 16, 240], strides = [1, 1, 1]} : vector<12x16x240xf32> to vector<8x16x240xf32>
    %32 = vector.shape_cast %31 : vector<8x16x240xf32> to vector<128x240xf32>
    %33 = arith.truncf %32 : vector<128x240xf32> to vector<128x240xbf16>
    %c0_9 = arith.constant 0 : index
    %c0_10 = arith.constant 0 : index
    %c0_11 = arith.constant 0 : index
    %34 = vector.load %arg4[%c0_9, %c0_10, %c0_11] : memref<5x240x160xbf16, #tpu.memory_space<vmem>>, vector<1x240x160xbf16>
    %35 = vector.shape_cast %34 : vector<1x240x160xbf16> to vector<240x160xbf16>
    %cst_12 = arith.constant dense<0.000000e+00> : vector<128x160xf32>
    %36 = tpu.matmul %33, %35, %cst_12 {dimension_numbers = #tpu.dot_dimension_numbers<[1], [0], [0], [1], [0, 0, 1, 1], [], []>} : vector<128x240xbf16>, vector<240x160xbf16>, vector<128x160xf32> -> vector<128x160xf32>
    %37 = vector.extract_strided_slice %30 {offsets = [1, 0, 0], sizes = [8, 16, 240], strides = [1, 1, 1]} : vector<12x16x240xf32> to vector<8x16x240xf32>
    %38 = vector.shape_cast %37 : vector<8x16x240xf32> to vector<128x240xf32>
    %39 = arith.truncf %38 : vector<128x240xf32> to vector<128x240xbf16>
    %c1_13 = arith.constant 1 : index
    %c0_14 = arith.constant 0 : index
    %c0_15 = arith.constant 0 : index
    %40 = vector.load %arg4[%c1_13, %c0_14, %c0_15] : memref<5x240x160xbf16, #tpu.memory_space<vmem>>, vector<1x240x160xbf16>
    %41 = vector.shape_cast %40 : vector<1x240x160xbf16> to vector<240x160xbf16>
    %cst_16 = arith.constant dense<0.000000e+00> : vector<128x160xf32>
    %42 = tpu.matmul %39, %41, %cst_16 {dimension_numbers = #tpu.dot_dimension_numbers<[1], [0], [0], [1], [0, 0, 1, 1], [], []>} : vector<128x240xbf16>, vector<240x160xbf16>, vector<128x160xf32> -> vector<128x160xf32>
    %43 = arith.addf %36, %42 : vector<128x160xf32>
    %44 = vector.extract_strided_slice %30 {offsets = [2, 0, 0], sizes = [8, 16, 240], strides = [1, 1, 1]} : vector<12x16x240xf32> to vector<8x16x240xf32>
    %45 = vector.shape_cast %44 : vector<8x16x240xf32> to vector<128x240xf32>
    %46 = arith.truncf %45 : vector<128x240xf32> to vector<128x240xbf16>
    %c2_17 = arith.constant 2 : index
    %c0_18 = arith.constant 0 : index
    %c0_19 = arith.constant 0 : index
    %47 = vector.load %arg4[%c2_17, %c0_18, %c0_19] : memref<5x240x160xbf16, #tpu.memory_space<vmem>>, vector<1x240x160xbf16>
    %48 = vector.shape_cast %47 : vector<1x240x160xbf16> to vector<240x160xbf16>
    %cst_20 = arith.constant dense<0.000000e+00> : vector<128x160xf32>
    %49 = tpu.matmul %46, %48, %cst_20 {dimension_numbers = #tpu.dot_dimension_numbers<[1], [0], [0], [1], [0, 0, 1, 1], [], []>} : vector<128x240xbf16>, vector<240x160xbf16>, vector<128x160xf32> -> vector<128x160xf32>
    %50 = arith.addf %43, %49 : vector<128x160xf32>
    %51 = vector.extract_strided_slice %30 {offsets = [3, 0, 0], sizes = [8, 16, 240], strides = [1, 1, 1]} : vector<12x16x240xf32> to vector<8x16x240xf32>
    %52 = vector.shape_cast %51 : vector<8x16x240xf32> to vector<128x240xf32>
    %53 = arith.truncf %52 : vector<128x240xf32> to vector<128x240xbf16>
    %c3 = arith.constant 3 : index
    %c0_21 = arith.constant 0 : index
    %c0_22 = arith.constant 0 : index
    %54 = vector.load %arg4[%c3, %c0_21, %c0_22] : memref<5x240x160xbf16, #tpu.memory_space<vmem>>, vector<1x240x160xbf16>
    %55 = vector.shape_cast %54 : vector<1x240x160xbf16> to vector<240x160xbf16>
    %cst_23 = arith.constant dense<0.000000e+00> : vector<128x160xf32>
    %56 = tpu.matmul %53, %55, %cst_23 {dimension_numbers = #tpu.dot_dimension_numbers<[1], [0], [0], [1], [0, 0, 1, 1], [], []>} : vector<128x240xbf16>, vector<240x160xbf16>, vector<128x160xf32> -> vector<128x160xf32>
    %57 = arith.addf %50, %56 : vector<128x160xf32>
    %58 = vector.extract_strided_slice %30 {offsets = [4, 0, 0], sizes = [8, 16, 240], strides = [1, 1, 1]} : vector<12x16x240xf32> to vector<8x16x240xf32>
    %59 = vector.shape_cast %58 : vector<8x16x240xf32> to vector<128x240xf32>
    %60 = arith.truncf %59 : vector<128x240xf32> to vector<128x240xbf16>
    %c4 = arith.constant 4 : index
    %c0_24 = arith.constant 0 : index
    %c0_25 = arith.constant 0 : index
    %61 = vector.load %arg4[%c4, %c0_24, %c0_25] : memref<5x240x160xbf16, #tpu.memory_space<vmem>>, vector<1x240x160xbf16>
    %62 = vector.shape_cast %61 : vector<1x240x160xbf16> to vector<240x160xbf16>
    %cst_26 = arith.constant dense<0.000000e+00> : vector<128x160xf32>
    %63 = tpu.matmul %60, %62, %cst_26 {dimension_numbers = #tpu.dot_dimension_numbers<[1], [0], [0], [1], [0, 0, 1, 1], [], []>} : vector<128x240xbf16>, vector<240x160xbf16>, vector<128x160xf32> -> vector<128x160xf32>
    %64 = arith.addf %57, %63 : vector<128x160xf32>
    %c0_27 = arith.constant 0 : index
    %c0_28 = arith.constant 0 : index
    %65 = vector.load %arg5[%c0_27, %c0_28] : memref<3x160xf32, #tpu.memory_space<vmem>>, vector<1x160xf32>
    %66 = vector.broadcast %65 : vector<1x160xf32> to vector<128x160xf32>
    %67 = arith.addf %64, %66 : vector<128x160xf32>
    %cst_29 = arith.constant 0.000000e+00 : f32
    %68 = vector.broadcast %cst_29 : f32 to vector<128x160xf32>
    %69 = arith.maximumf %67, %68 : vector<128x160xf32>
    %c1_30 = arith.constant 1 : index
    %c0_31 = arith.constant 0 : index
    %70 = vector.load %arg5[%c1_30, %c0_31] : memref<3x160xf32, #tpu.memory_space<vmem>>, vector<1x160xf32>
    %71 = vector.broadcast %70 : vector<1x160xf32> to vector<128x160xf32>
    %72 = arith.mulf %69, %71 : vector<128x160xf32>
    %c2_32 = arith.constant 2 : index
    %c0_33 = arith.constant 0 : index
    %73 = vector.load %arg5[%c2_32, %c0_33] : memref<3x160xf32, #tpu.memory_space<vmem>>, vector<1x160xf32>
    %74 = vector.broadcast %73 : vector<1x160xf32> to vector<128x160xf32>
    %75 = arith.addf %72, %74 : vector<128x160xf32>
    %76 = vector.extract_strided_slice %75 {offsets = [0, 1], sizes = [128, 159], strides = [1, 1]} : vector<128x160xf32> to vector<128x159xf32>
    %77 = vector.extract_strided_slice %75 {offsets = [0, 0], sizes = [128, 1], strides = [1, 1]} : vector<128x160xf32> to vector<128x1xf32>
    %78 = tpu.concatenate %76, %77 in 1 : vector<128x159xf32>, vector<128x1xf32> -> vector<128x160xf32>
    %79 = arith.maximumf %75, %78 : vector<128x160xf32>
    %80 = vector.shape_cast %79 : vector<128x160xf32> to vector<4x2x16x160xf32>
    %81 = vector.extract_strided_slice %80 {offsets = [0, 0, 0, 0], sizes = [4, 1, 16, 160], strides = [1, 1, 1, 1]} : vector<4x2x16x160xf32> to vector<4x1x16x160xf32>
    %82 = vector.shape_cast %81 : vector<4x1x16x160xf32> to vector<4x16x160xf32>
    %83 = vector.extract_strided_slice %80 {offsets = [0, 1, 0, 0], sizes = [4, 1, 16, 160], strides = [1, 1, 1, 1]} : vector<4x2x16x160xf32> to vector<4x1x16x160xf32>
    %84 = vector.shape_cast %83 : vector<4x1x16x160xf32> to vector<4x16x160xf32>
    %85 = arith.maximumf %82, %84 : vector<4x16x160xf32>
    %86 = vector.extract_strided_slice %85 {offsets = [0, 0, 0], sizes = [1, 16, 160], strides = [1, 1, 1]} : vector<4x16x160xf32> to vector<1x16x160xf32>
    %87 = vector.shape_cast %86 : vector<1x16x160xf32> to vector<16x160xf32>
    %88 = arith.truncf %87 : vector<16x160xf32> to vector<16x160xbf16>
    %c0_34 = arith.constant 0 : index
    %c0_35 = arith.constant 0 : index
    %c0_36 = arith.constant 0 : index
    %89 = vector.load %arg6[%c0_34, %c0_35, %c0_36] : memref<4x160x84xbf16, #tpu.memory_space<vmem>>, vector<1x160x84xbf16>
    %90 = vector.shape_cast %89 : vector<1x160x84xbf16> to vector<160x84xbf16>
    %cst_37 = arith.constant dense<0.000000e+00> : vector<16x84xf32>
    %91 = tpu.matmul %88, %90, %cst_37 {dimension_numbers = #tpu.dot_dimension_numbers<[1], [0], [0], [1], [0, 0, 1, 1], [], []>} : vector<16x160xbf16>, vector<160x84xbf16>, vector<16x84xf32> -> vector<16x84xf32>
    %92 = vector.extract_strided_slice %85 {offsets = [1, 0, 0], sizes = [1, 16, 160], strides = [1, 1, 1]} : vector<4x16x160xf32> to vector<1x16x160xf32>
    %93 = vector.shape_cast %92 : vector<1x16x160xf32> to vector<16x160xf32>
    %94 = arith.truncf %93 : vector<16x160xf32> to vector<16x160xbf16>
    %c1_38 = arith.constant 1 : index
    %c0_39 = arith.constant 0 : index
    %c0_40 = arith.constant 0 : index
    %95 = vector.load %arg6[%c1_38, %c0_39, %c0_40] : memref<4x160x84xbf16, #tpu.memory_space<vmem>>, vector<1x160x84xbf16>
    %96 = vector.shape_cast %95 : vector<1x160x84xbf16> to vector<160x84xbf16>
    %cst_41 = arith.constant dense<0.000000e+00> : vector<16x84xf32>
    %97 = tpu.matmul %94, %96, %cst_41 {dimension_numbers = #tpu.dot_dimension_numbers<[1], [0], [0], [1], [0, 0, 1, 1], [], []>} : vector<16x160xbf16>, vector<160x84xbf16>, vector<16x84xf32> -> vector<16x84xf32>
    %98 = arith.addf %91, %97 : vector<16x84xf32>
    %99 = vector.extract_strided_slice %85 {offsets = [2, 0, 0], sizes = [1, 16, 160], strides = [1, 1, 1]} : vector<4x16x160xf32> to vector<1x16x160xf32>
    %100 = vector.shape_cast %99 : vector<1x16x160xf32> to vector<16x160xf32>
    %101 = arith.truncf %100 : vector<16x160xf32> to vector<16x160xbf16>
    %c2_42 = arith.constant 2 : index
    %c0_43 = arith.constant 0 : index
    %c0_44 = arith.constant 0 : index
    %102 = vector.load %arg6[%c2_42, %c0_43, %c0_44] : memref<4x160x84xbf16, #tpu.memory_space<vmem>>, vector<1x160x84xbf16>
    %103 = vector.shape_cast %102 : vector<1x160x84xbf16> to vector<160x84xbf16>
    %cst_45 = arith.constant dense<0.000000e+00> : vector<16x84xf32>
    %104 = tpu.matmul %101, %103, %cst_45 {dimension_numbers = #tpu.dot_dimension_numbers<[1], [0], [0], [1], [0, 0, 1, 1], [], []>} : vector<16x160xbf16>, vector<160x84xbf16>, vector<16x84xf32> -> vector<16x84xf32>
    %105 = arith.addf %98, %104 : vector<16x84xf32>
    %106 = vector.extract_strided_slice %85 {offsets = [3, 0, 0], sizes = [1, 16, 160], strides = [1, 1, 1]} : vector<4x16x160xf32> to vector<1x16x160xf32>
    %107 = vector.shape_cast %106 : vector<1x16x160xf32> to vector<16x160xf32>
    %108 = arith.truncf %107 : vector<16x160xf32> to vector<16x160xbf16>
    %c3_46 = arith.constant 3 : index
    %c0_47 = arith.constant 0 : index
    %c0_48 = arith.constant 0 : index
    %109 = vector.load %arg6[%c3_46, %c0_47, %c0_48] : memref<4x160x84xbf16, #tpu.memory_space<vmem>>, vector<1x160x84xbf16>
    %110 = vector.shape_cast %109 : vector<1x160x84xbf16> to vector<160x84xbf16>
    %cst_49 = arith.constant dense<0.000000e+00> : vector<16x84xf32>
    %111 = tpu.matmul %108, %110, %cst_49 {dimension_numbers = #tpu.dot_dimension_numbers<[1], [0], [0], [1], [0, 0, 1, 1], [], []>} : vector<16x160xbf16>, vector<160x84xbf16>, vector<16x84xf32> -> vector<16x84xf32>
    %112 = arith.addf %105, %111 : vector<16x84xf32>
    %c0_50 = arith.constant 0 : index
    %c0_51 = arith.constant 0 : index
    %113 = vector.load %arg7[%c0_50, %c0_51] : memref<1x84xf32, #tpu.memory_space<vmem>>, vector<1x84xf32>
    %114 = vector.broadcast %113 : vector<1x84xf32> to vector<16x84xf32>
    %115 = arith.addf %112, %114 : vector<16x84xf32>
    %cst_52 = arith.constant 0.000000e+00 : f32
    %116 = vector.broadcast %cst_52 : f32 to vector<16x84xf32>
    %117 = arith.maximumf %115, %116 : vector<16x84xf32>
    %118 = arith.truncf %117 : vector<16x84xf32> to vector<16x84xbf16>
    %c0_53 = arith.constant 0 : index
    %c0_54 = arith.constant 0 : index
    %119 = vector.load %arg8[%c0_53, %c0_54] : memref<84x128xbf16, #tpu.memory_space<vmem>>, vector<84x128xbf16>
    %cst_55 = arith.constant dense<0.000000e+00> : vector<16x128xf32>
    %120 = tpu.matmul %118, %119, %cst_55 {dimension_numbers = #tpu.dot_dimension_numbers<[1], [0], [0], [1], [0, 0, 1, 1], [], []>} : vector<16x84xbf16>, vector<84x128xbf16>, vector<16x128xf32> -> vector<16x128xf32>
    %c0_56 = arith.constant 0 : index
    %c0_57 = arith.constant 0 : index
    %121 = vector.load %arg9[%c0_56, %c0_57] : memref<1x128xf32, #tpu.memory_space<vmem>>, vector<1x128xf32>
    %122 = vector.broadcast %121 : vector<1x128xf32> to vector<16x128xf32>
    %123 = arith.addf %120, %122 : vector<16x128xf32>
    %cst_58 = arith.constant dense<0xFF800000> : vector<16xf32>
    %124 = vector.multi_reduction <maximumf>, %123, %cst_58 [1] : vector<16x128xf32> to vector<16xf32>
    %125 = vector.shape_cast %124 : vector<16xf32> to vector<16x1xf32>
    %126 = vector.broadcast %125 : vector<16x1xf32> to vector<16x128xf32>
    %127 = arith.subf %123, %126 : vector<16x128xf32>
    %128 = math.exp %127 : vector<16x128xf32>
    %cst_59 = arith.constant dense<0.000000e+00> : vector<16xf32>
    %129 = vector.multi_reduction <add>, %128, %cst_59 [1] : vector<16x128xf32> to vector<16xf32>
    %130 = vector.shape_cast %129 : vector<16xf32> to vector<16x1xf32>
    %131 = vector.broadcast %130 : vector<16x1xf32> to vector<16x128xf32>
    %132 = arith.divf %128, %131 : vector<16x128xf32>
    %c0_60 = arith.constant 0 : index
    %c0_61 = arith.constant 0 : index
    %133 = vector.load %arg10[%c0_60, %c0_61] : memref<16x128xf32, #tpu.memory_space<vmem>>, vector<16x128xf32>
    tpu.vector_store %arg10[%c0_60, %c0_61], %132 {strides = array<i32>} : memref<16x128xf32, #tpu.memory_space<vmem>>, vector<16x128xf32>,
    return
  }
  func.func @transform_0(%arg0: i32) -> (i32, i32, i32) {
    %c0_i32 = arith.constant 0 : i32
    %c0_i32_0 = arith.constant 0 : i32
    %c0_i32_1 = arith.constant 0 : i32
    return %c0_i32, %arg0, %c0_i32_0 : i32, i32, i32
  }
  func.func @transform_1(%arg0: i32) -> (i32, i32) {
    %c0_i32 = arith.constant 0 : i32
    %c0_i32_0 = arith.constant 0 : i32
    %c0_i32_1 = arith.constant 0 : i32
    return %c0_i32, %c0_i32_0 : i32, i32
  }
  func.func @transform_2(%arg0: i32) -> (i32, i32) {
    %c0_i32 = arith.constant 0 : i32
    %c0_i32_0 = arith.constant 0 : i32
    %c0_i32_1 = arith.constant 0 : i32
    return %c0_i32, %c0_i32_0 : i32, i32
  }
  func.func @transform_3(%arg0: i32) -> (i32, i32, i32) {
    %c0_i32 = arith.constant 0 : i32
    %c0_i32_0 = arith.constant 0 : i32
    %c0_i32_1 = arith.constant 0 : i32
    %c0_i32_2 = arith.constant 0 : i32
    return %c0_i32, %c0_i32_0, %c0_i32_1 : i32, i32, i32
  }
  func.func @transform_4(%arg0: i32) -> (i32, i32) {
    %c0_i32 = arith.constant 0 : i32
    %c0_i32_0 = arith.constant 0 : i32
    %c0_i32_1 = arith.constant 0 : i32
    return %c0_i32, %c0_i32_0 : i32, i32
  }
  func.func @transform_5(%arg0: i32) -> (i32, i32, i32) {
    %c0_i32 = arith.constant 0 : i32
    %c0_i32_0 = arith.constant 0 : i32
    %c0_i32_1 = arith.constant 0 : i32
    %c0_i32_2 = arith.constant 0 : i32
    return %c0_i32, %c0_i32_0, %c0_i32_1 : i32, i32, i32
  }
  func.func @transform_6(%arg0: i32) -> (i32, i32) {
    %c0_i32 = arith.constant 0 : i32
    %c0_i32_0 = arith.constant 0 : i32
    %c0_i32_1 = arith.constant 0 : i32
    return %c0_i32, %c0_i32_0 : i32, i32
  }
  func.func @transform_7(%arg0: i32) -> (i32, i32) {
    %c0_i32 = arith.constant 0 : i32
    %c0_i32_0 = arith.constant 0 : i32
    %c0_i32_1 = arith.constant 0 : i32
    return %c0_i32, %c0_i32_0 : i32, i32
  }
  func.func @transform_8(%arg0: i32) -> (i32, i32) {
    %c0_i32 = arith.constant 0 : i32
    %c0_i32_0 = arith.constant 0 : i32
    %c0_i32_1 = arith.constant 0 : i32
    return %c0_i32, %c0_i32_0 : i32, i32
  }
  func.func @transform_9(%arg0: i32) -> (i32, i32) {
    %c0_i32 = arith.constant 0 : i32
    %c0_i32_0 = arith.constant 0 : i32
    return %arg0, %c0_i32 : i32, i32
  }
}

</mosaic_0001>

<llo_original>
// kernel: cnn_mnist_forward.1
$region0: #{cnn_mnist_forward.1}
  #allocation0 [shape = 'u32[]', space=smem, size = 0x4, offset = 0x4, fixed_abs, tag = 'smem constant byte address 0x4 - core index']
  #allocation1 [shape = 'u32[144,128]{1,0:T(1,128)}', space=vmem, size = 0x12000, scoped, tag = 'internal scratch']
  %s0 = inlined_call_operand.vmem [shape: bf16[28,48,28], index: 0, kind: input, shape index: {}]
  %s1 = inlined_call_operand.vmem [shape: bf16[140,240], index: 1, kind: input, shape index: {}]
  %s2 = inlined_call_operand.vmem [shape: f32[3,240], index: 2, kind: input, shape index: {}]
  %s3 = inlined_call_operand.vmem [shape: bf16[5,240,160], index: 3, kind: input, shape index: {}]
  %s4 = inlined_call_operand.vmem [shape: f32[3,160], index: 4, kind: input, shape index: {}]
  %s5 = inlined_call_operand.vmem [shape: bf16[4,160,84], index: 5, kind: input, shape index: {}]
  %s6 = inlined_call_operand.vmem [shape: f32[1,84], index: 6, kind: input, shape index: {}]
  %s7 = inlined_call_operand.vmem [shape: bf16[84,128], index: 7, kind: input, shape index: {}]
  %s8 = inlined_call_operand.vmem [shape: f32[1,128], index: 8, kind: input, shape index: {}]
  %s9 = inlined_call_operand.vmem [shape: f32[48,128], index: 9, kind: output, shape index: {}]
  %s10 = sld [smem:[#allocation0]]
  $region110: #{cnn_mnist_forward.1} parent=0
    _
  %s12 = ssub.s32 1, %s10
  %s13 = scalar_select 0, %s12, %s10
  $region1: #{cnn_mnist_forward.1} parent=0
    #allocation2 [shape = 'u8[229376]{0}', space=vmem, size = 0x38000, scoped, tag = 'input window, operand 0']
    loop: start=0, step=1, limit=5
    $region2: #{cnn_mnist_forward.1} parent=1 // loop_pre_header
      _
    $region3: #{cnn_mnist_forward.1} parent=1 // loop_header
      %s15 = sphi 0, %s19
      %p16 = scmp.ge.s32.totalorder %s15, 5
      %s25 = sphi 0, %s27
      %s28 = sphi 0, %s25
      %s29 = sphi 0, %s28
      %s45 = sphi 0, %s29
      %s49 = sphi 0, %s49
      %s51 = sphi 0, %s49
      %s52 = sphi 0, %s51
      %s66 = sphi 0, %s52
      %s70 = sphi 0, %s70
      %s72 = sphi 0, %s70
      %s73 = sphi 0, %s72
      %s87 = sphi 0, %s73
      %s91 = sphi 0, %s91
      %s93 = sphi 0, %s91
      %s94 = sphi 0, %s93
      %s108 = sphi 0, %s94
      %s112 = sphi 0, %s112
      %s114 = sphi 0, %s112
      %s115 = sphi 0, %s114
      %s129 = sphi 0, %s115
      %s133 = sphi 0, %s133
      %s135 = sphi 0, %s133
      %s136 = sphi 0, %s135
      %s150 = sphi 0, %s136
      %s154 = sphi 0, %s154
      %s156 = sphi 0, %s154
      %s157 = sphi 0, %s156
      %s171 = sphi 0, %s157
      %s175 = sphi 0, %s175
      %s177 = sphi 0, %s175
      %s178 = sphi 0, %s177
      %s192 = sphi 0, %s178
      %s196 = sphi 0, %s196
      %s198 = sphi 0, %s196
      %s199 = sphi 0, %s198
      %s213 = sphi 0, %s199
      %s219 = sphi 0, %s221
      %s222 = sphi 0, %s219
      %s223 = sphi 0, %s222
      %s239 = sphi 0, %s223
    $region4: #{cnn_mnist_forward.1} parent=1 // loop_header_branch
      %18 = sbr.rel (%p16) target = $region8
    $region5: #{cnn_mnist_forward.1} parent=1 // loop_body
      %s20 = ssub.s32 %s15, 1
      %s21 = ssub.s32 %s15, 2
      %s22 = sadd.s32 %s15, 1
      %s23 = ssub.s32 %s15, %s22
      %p24 = scmp.eq.s32.totalorder %s23, 0
      %s26 = sadd.s32 %s25, 1
      %s27 = scalar_select %p24, %s25, %s26
      %p30 = pneg %p24
      %p31 = scmp.eq.s32.totalorder %s15, 2
      %p32 = por %p30, %p31
      %p33 = scmp.ne.s32.totalorder %s25, %s28
      %p34 = scmp.eq.s32.totalorder %s15, 0
      %p35 = por %p33, %p34
      %p36 = scmp.ne.s32.totalorder %s25, %s28
      %p37 = scmp.eq.s32.totalorder %s20, 2
      %p38 = por %p36, %p37
      %p39 = scmp.ne.s32.totalorder %s28, %s29
      %p40 = scmp.eq.s32.totalorder %s20, 0
      %p41 = por %p39, %p40
      %p42 = scmp.ne.s32.totalorder %s28, %s29
      %p43 = scmp.eq.s32.totalorder %s21, 2
      %p44 = por %p42, %p43
      %p46 = scmp.ne.s32.totalorder %s29, %s45
      %p47 = scmp.eq.s32.totalorder %s21, 0
      %p48 = por %p46, %p47
      %s50 = sadd.s32 %s49, 1
      %p53 = scmp.eq.s32.totalorder %s15, 2
      %p54 = scmp.ne.s32.totalorder %s49, %s51
      %p55 = scmp.eq.s32.totalorder %s15, 0
      %p56 = por %p54, %p55
      %p57 = scmp.ne.s32.totalorder %s49, %s51
      %p58 = scmp.eq.s32.totalorder %s20, 2
      %p59 = por %p57, %p58
      %p60 = scmp.ne.s32.totalorder %s51, %s52
      %p61 = scmp.eq.s32.totalorder %s20, 0
      %p62 = por %p60, %p61
      %p63 = scmp.ne.s32.totalorder %s51, %s52
      %p64 = scmp.eq.s32.totalorder %s21, 2
      %p65 = por %p63, %p64
      %p67 = scmp.ne.s32.totalorder %s52, %s66
      %p68 = scmp.eq.s32.totalorder %s21, 0
      %p69 = por %p67, %p68
      %s71 = sadd.s32 %s70, 1
      %p74 = scmp.eq.s32.totalorder %s15, 2
      %p75 = scmp.ne.s32.totalorder %s70, %s72
      %p76 = scmp.eq.s32.totalorder %s15, 0
      %p77 = por %p75, %p76
      %p78 = scmp.ne.s32.totalorder %s70, %s72
      %p79 = scmp.eq.s32.totalorder %s20, 2
      %p80 = por %p78, %p79
      %p81 = scmp.ne.s32.totalorder %s72, %s73
      %p82 = scmp.eq.s32.totalorder %s20, 0
      %p83 = por %p81, %p82
      %p84 = scmp.ne.s32.totalorder %s72, %s73
      %p85 = scmp.eq.s32.totalorder %s21, 2
      %p86 = por %p84, %p85
      %p88 = scmp.ne.s32.totalorder %s73, %s87
      %p89 = scmp.eq.s32.totalorder %s21, 0
      %p90 = por %p88, %p89
      %s92 = sadd.s32 %s91, 1
      %p95 = scmp.eq.s32.totalorder %s15, 2
      %p96 = scmp.ne.s32.totalorder %s91, %s93
      %p97 = scmp.eq.s32.totalorder %s15, 0
      %p98 = por %p96, %p97
      %p99 = scmp.ne.s32.totalorder %s91, %s93
      %p100 = scmp.eq.s32.totalorder %s20, 2
      %p101 = por %p99, %p100
      %p102 = scmp.ne.s32.totalorder %s93, %s94
      %p103 = scmp.eq.s32.totalorder %s20, 0
      %p104 = por %p102, %p103
      %p105 = scmp.ne.s32.totalorder %s93, %s94
      %p106 = scmp.eq.s32.totalorder %s21, 2
      %p107 = por %p105, %p106
      %p109 = scmp.ne.s32.totalorder %s94, %s108
      %p110 = scmp.eq.s32.totalorder %s21, 0
      %p111 = por %p109, %p110
      %s113 = sadd.s32 %s112, 1
      %p116 = scmp.eq.s32.totalorder %s15, 2
      %p117 = scmp.ne.s32.totalorder %s112, %s114
      %p118 = scmp.eq.s32.totalorder %s15, 0
      %p119 = por %p117, %p118
      %p120 = scmp.ne.s32.totalorder %s112, %s114
      %p121 = scmp.eq.s32.totalorder %s20, 2
      %p122 = por %p120, %p121
      %p123 = scmp.ne.s32.totalorder %s114, %s115
      %p124 = scmp.eq.s32.totalorder %s20, 0
      %p125 = por %p123, %p124
      %p126 = scmp.ne.s32.totalorder %s114, %s115
      %p127 = scmp.eq.s32.totalorder %s21, 2
      %p128 = por %p126, %p127
      %p130 = scmp.ne.s32.totalorder %s115, %s129
      %p131 = scmp.eq.s32.totalorder %s21, 0
      %p132 = por %p130, %p131
      %s134 = sadd.s32 %s133, 1
      %p137 = scmp.eq.s32.totalorder %s15, 2
      %p138 = scmp.ne.s32.totalorder %s133, %s135
      %p139 = scmp.eq.s32.totalorder %s15, 0
      %p140 = por %p138, %p139
      %p141 = scmp.ne.s32.totalorder %s133, %s135
      %p142 = scmp.eq.s32.totalorder %s20, 2
      %p143 = por %p141, %p142
      %p144 = scmp.ne.s32.totalorder %s135, %s136
      %p145 = scmp.eq.s32.totalorder %s20, 0
      %p146 = por %p144, %p145
      %p147 = scmp.ne.s32.totalorder %s135, %s136
      %p148 = scmp.eq.s32.totalorder %s21, 2
      %p149 = por %p147, %p148
      %p151 = scmp.ne.s32.totalorder %s136, %s150
      %p152 = scmp.eq.s32.totalorder %s21, 0
      %p153 = por %p151, %p152
      %s155 = sadd.s32 %s154, 1
      %p158 = scmp.eq.s32.totalorder %s15, 2
      %p159 = scmp.ne.s32.totalorder %s154, %s156
      %p160 = scmp.eq.s32.totalorder %s15, 0
      %p161 = por %p159, %p160
      %p162 = scmp.ne.s32.totalorder %s154, %s156
      %p163 = scmp.eq.s32.totalorder %s20, 2
      %p164 = por %p162, %p163
      %p165 = scmp.ne.s32.totalorder %s156, %s157
      %p166 = scmp.eq.s32.totalorder %s20, 0
      %p167 = por %p165, %p166
      %p168 = scmp.ne.s32.totalorder %s156, %s157
      %p169 = scmp.eq.s32.totalorder %s21, 2
      %p170 = por %p168, %p169
      %p172 = scmp.ne.s32.totalorder %s157, %s171
      %p173 = scmp.eq.s32.totalorder %s21, 0
      %p174 = por %p172, %p173
      %s176 = sadd.s32 %s175, 1
      %p179 = scmp.eq.s32.totalorder %s15, 2
      %p180 = scmp.ne.s32.totalorder %s175, %s177
      %p181 = scmp.eq.s32.totalorder %s15, 0
      %p182 = por %p180, %p181
      %p183 = scmp.ne.s32.totalorder %s175, %s177
      %p184 = scmp.eq.s32.totalorder %s20, 2
      %p185 = por %p183, %p184
      %p186 = scmp.ne.s32.totalorder %s177, %s178
      %p187 = scmp.eq.s32.totalorder %s20, 0
      %p188 = por %p186, %p187
      %p189 = scmp.ne.s32.totalorder %s177, %s178
      %p190 = scmp.eq.s32.totalorder %s21, 2
      %p191 = por %p189, %p190
      %p193 = scmp.ne.s32.totalorder %s178, %s192
      %p194 = scmp.eq.s32.totalorder %s21, 0
      %p195 = por %p193, %p194
      %s197 = sadd.s32 %s196, 1
      %p200 = scmp.eq.s32.totalorder %s15, 2
      %p201 = scmp.ne.s32.totalorder %s196, %s198
      %p202 = scmp.eq.s32.totalorder %s15, 0
      %p203 = por %p201, %p202
      %p204 = scmp.ne.s32.totalorder %s196, %s198
      %p205 = scmp.eq.s32.totalorder %s20, 2
      %p206 = por %p204, %p205
      %p207 = scmp.ne.s32.totalorder %s198, %s199
      %p208 = scmp.eq.s32.totalorder %s20, 0
      %p209 = por %p207, %p208
      %p210 = scmp.ne.s32.totalorder %s198, %s199
      %p211 = scmp.eq.s32.totalorder %s21, 2
      %p212 = por %p210, %p211
      %p214 = scmp.ne.s32.totalorder %s199, %s213
      %p215 = scmp.eq.s32.totalorder %s21, 0
      %p216 = por %p214, %p215
      %s217 = ssub.s32 %s15, %s22
      %p218 = scmp.eq.s32.totalorder %s217, 0
      %s220 = sadd.s32 %s219, 1
      %s221 = scalar_select %p218, %s219, %s220
      %p224 = pneg %p218
      %p225 = scmp.eq.s32.totalorder %s15, 2
      %p226 = por %p224, %p225
      %p227 = scmp.ne.s32.totalorder %s219, %s222
      %p228 = scmp.eq.s32.totalorder %s15, 0
      %p229 = por %p227, %p228
      %p230 = scmp.ne.s32.totalorder %s219, %s222
      %p231 = scmp.eq.s32.totalorder %s20, 2
      %p232 = por %p230, %p231
      %p233 = scmp.ne.s32.totalorder %s222, %s223
      %p234 = scmp.eq.s32.totalorder %s20, 0
      %p235 = por %p233, %p234
      %p236 = scmp.ne.s32.totalorder %s222, %s223
      %p237 = scmp.eq.s32.totalorder %s21, 2
      %p238 = por %p236, %p237
      %p240 = scmp.ne.s32.totalorder %s223, %s239
      %p241 = scmp.eq.s32.totalorder %s21, 0
      %p242 = por %p240, %p241
      %p243 = scmp.le.s32.totalorder 1, %s15
      %p244 = scmp.lt.s32.totalorder %s15, 4
      %p245 = pnand %p243, %p244
      %p246 = pneg %p245
      // Predicated region
      $region9: #{cnn_mnist_forward.1} parent=5 // pred_check
        _
      $region10: #{cnn_mnist_forward.1} parent=5 // pred_check_branch
        %248 = sbr.rel (%p245) target = $region12
      $region11: #{cnn_mnist_forward.1} parent=5 // pred_region
        %s249 = ssub.s32 %s15, 1
        // Predicated region
        $region13: #{cnn_mnist_forward.1} parent=11 // pred_check
          %p250 = pneg %p62
        $region14: #{cnn_mnist_forward.1} parent=11 // pred_check_branch
          %252 = sbr.rel (%p250) target = $region16
        $region15: #{cnn_mnist_forward.1} parent=11 // pred_region
          _
        $region16: #{cnn_mnist_forward.1} parent=11 // pred_fallthru
          _
        // Predicated region
        $region17: #{cnn_mnist_forward.1} parent=11 // pred_check
          %p253 = pneg %p83
        $region18: #{cnn_mnist_forward.1} parent=11 // pred_check_branch
          %255 = sbr.rel (%p253) target = $region20
        $region19: #{cnn_mnist_forward.1} parent=11 // pred_region
          _
        $region20: #{cnn_mnist_forward.1} parent=11 // pred_fallthru
          _
        // Predicated region
        $region21: #{cnn_mnist_forward.1} parent=11 // pred_check
          %p256 = pneg %p104
        $region22: #{cnn_mnist_forward.1} parent=11 // pred_check_branch
          %258 = sbr.rel (%p256) target = $region24
        $region23: #{cnn_mnist_forward.1} parent=11 // pred_region
          _
        $region24: #{cnn_mnist_forward.1} parent=11 // pred_fallthru
          _
        // Predicated region
        $region25: #{cnn_mnist_forward.1} parent=11 // pred_check
          %p259 = pneg %p125
        $region26: #{cnn_mnist_forward.1} parent=11 // pred_check_branch
          %261 = sbr.rel (%p259) target = $region28
        $region27: #{cnn_mnist_forward.1} parent=11 // pred_region
          _
        $region28: #{cnn_mnist_forward.1} parent=11 // pred_fallthru
          _
        // Predicated region
        $region29: #{cnn_mnist_forward.1} parent=11 // pred_check
          %p262 = pneg %p146
        $region30: #{cnn_mnist_forward.1} parent=11 // pred_check_branch
          %264 = sbr.rel (%p262) target = $region32
        $region31: #{cnn_mnist_forward.1} parent=11 // pred_region
          _
        $region32: #{cnn_mnist_forward.1} parent=11 // pred_fallthru
          _
        // Predicated region
        $region33: #{cnn_mnist_forward.1} parent=11 // pred_check
          %p265 = pneg %p167
        $region34: #{cnn_mnist_forward.1} parent=11 // pred_check_branch
          %267 = sbr.rel (%p265) target = $region36
        $region35: #{cnn_mnist_forward.1} parent=11 // pred_region
          _
        $region36: #{cnn_mnist_forward.1} parent=11 // pred_fallthru
          _
        // Predicated region
        $region37: #{cnn_mnist_forward.1} parent=11 // pred_check
          %p268 = pneg %p188
        $region38: #{cnn_mnist_forward.1} parent=11 // pred_check_branch
          %270 = sbr.rel (%p268) target = $region40
        $region39: #{cnn_mnist_forward.1} parent=11 // pred_region
          _
        $region40: #{cnn_mnist_forward.1} parent=11 // pred_fallthru
          _
        // Predicated region
        $region41: #{cnn_mnist_forward.1} parent=11 // pred_check
          %p271 = pneg %p209
        $region42: #{cnn_mnist_forward.1} parent=11 // pred_check_branch
          %273 = sbr.rel (%p271) target = $region44
        $region43: #{cnn_mnist_forward.1} parent=11 // pred_region
          _
        $region44: #{cnn_mnist_forward.1} parent=11 // pred_fallthru
          _
      $region12: #{cnn_mnist_forward.1} parent=5 // pred_fallthru
        _
      %p274 = scmp.lt.s32.totalorder %s15, 3
      // Predicated region
      $region45: #{cnn_mnist_forward.1} parent=5 // pred_check
        %p275 = pneg %p274
      $region46: #{cnn_mnist_forward.1} parent=5 // pred_check_branch
        %277 = sbr.rel (%p275) target = $region48
      $region47: #{cnn_mnist_forward.1} parent=5 // pred_region
        // Predicated region
        $region49: #{cnn_mnist_forward.1} parent=47 // pred_check
          %p278 = pneg %p35
        $region50: #{cnn_mnist_forward.1} parent=47 // pred_check_branch
          %280 = sbr.rel (%p278) target = $region52
        $region51: #{cnn_mnist_forward.1} parent=47 // pred_region
          %s281 = sand.u32 %s25, 1
          %s282 = sand.u32 %s25, 1
          %s283 = smul.addr %s282, 224
          %s284 = scalar_lea.vmem [#allocation2], %s283
          %s285 = smul.u32 2, %s15
          %s286 = smul.addr %s285, 4
          %s287 = scalar_lea.vmem %s0, %s286
          // Predicated region
          $region53: #{cnn_mnist_forward.1} parent=51 // pred_check
            _
          $region54: #{cnn_mnist_forward.1} parent=51 // pred_check_branch
            %289 = sbr.rel (0) target = $region56
          $region55: #{cnn_mnist_forward.1} parent=51 // pred_region
            // Predicated region
            $region57: #{cnn_mnist_forward.1} parent=55 // pred_check
              _
            $region58: #{cnn_mnist_forward.1} parent=55 // pred_check_branch
              %291 = sbr.rel target = $region60
            $region59: #{cnn_mnist_forward.1} parent=55 // pred_region
              // Predicated region
              $region72: #{cnn_mnist_forward.1} parent=59 // pred_check
                _
              $region73: #{cnn_mnist_forward.1} parent=59 // pred_check_branch
                %416 = sbr.rel (0) target = $region75
              $region74: #{cnn_mnist_forward.1} parent=59 // pred_region
                loop: start=0, step=1, limit=1
                $region76: #{cnn_mnist_forward.1} parent=74 // loop_pre_header
                  _
                $region77: #{cnn_mnist_forward.1} parent=74 // loop_header
                  %s418 = sphi 0, %s422
                  %p419 = scmp.ge.s32.totalorder %s418, 1
                  %s423 = sphi %s287, %s287
                  %s424 = sphi %s284, %s284
                $region78: #{cnn_mnist_forward.1} parent=74 // loop_header_branch
                  %421 = sbr.rel (%p419) target = $region82
                $region79: #{cnn_mnist_forward.1} parent=74 // loop_body
                  _
                $region80: #{cnn_mnist_forward.1} parent=74 // loop_footer
                  %s422 = sadd.s32 1, %s418
                $region81: #{cnn_mnist_forward.1} parent=74 // loop_footer_branch
                  %417 = sbr.rel target = $region77
                $region82: #{cnn_mnist_forward.1} parent=74 // loop_exit
                  _
                loop: start=0, step=1, limit=1
                $region83: #{cnn_mnist_forward.1} parent=74 // loop_pre_header
                  _
                $region84: #{cnn_mnist_forward.1} parent=74 // loop_header
                  %s427 = sphi 0, %s431
                  %p428 = scmp.ge.s32.totalorder %s427, 1
                  %s432 = sphi %s287, %s287
                  %s433 = sphi %s284, %s284
                $region85: #{cnn_mnist_forward.1} parent=74 // loop_header_branch
                  %430 = sbr.rel (%p428) target = $region89
                $region86: #{cnn_mnist_forward.1} parent=74 // loop_body
                  %v434 = vld [vmem:[%s432] sm:$0xf]
                  %435 = vst [vmem:[%s433] sm:$0xf] %v434
                  %v436 = vld [vmem:[%s432 + $0x4] sm:$0xf]
                  %437 = vst [vmem:[%s433 + $0x4] sm:$0xf] %v436
                  %v438 = vld [vmem:[%s432 + $0x18] sm:$0xf]
                  %439 = vst [vmem:[%s433 + $0x8] sm:$0xf] %v438
                  %v440 = vld [vmem:[%s432 + $0x1c] sm:$0xf]
                  %441 = vst [vmem:[%s433 + $0xc] sm:$0xf] %v440
                  %v442 = vld [vmem:[%s432 + $0x30] sm:$0xf]
                  %443 = vst [vmem:[%s433 + $0x10] sm:$0xf] %v442
                  %v444 = vld [vmem:[%s432 + $0x34] sm:$0xf]
                  %445 = vst [vmem:[%s433 + $0x14] sm:$0xf] %v444
                  %v446 = vld [vmem:[%s432 + $0x48] sm:$0xf]
                  %447 = vst [vmem:[%s433 + $0x18] sm:$0xf] %v446
                  %v448 = vld [vmem:[%s432 + $0x4c] sm:$0xf]
                  %449 = vst [vmem:[%s433 + $0x1c] sm:$0xf] %v448
                  %v450 = vld [vmem:[%s432 + $0x60] sm:$0xf]
                  %451 = vst [vmem:[%s433 + $0x20] sm:$0xf] %v450
                  %v452 = vld [vmem:[%s432 + $0x64] sm:$0xf]
                  %453 = vst [vmem:[%s433 + $0x24] sm:$0xf] %v452
                  %v454 = vld [vmem:[%s432 + $0x78] sm:$0xf]
                  %455 = vst [vmem:[%s433 + $0x28] sm:$0xf] %v454
                  %v456 = vld [vmem:[%s432 + $0x7c] sm:$0xf]
                  %457 = vst [vmem:[%s433 + $0x2c] sm:$0xf] %v456
                  %v458 = vld [vmem:[%s432 + $0x90] sm:$0xf]
                  %459 = vst [vmem:[%s433 + $0x30] sm:$0xf] %v458
                  %v460 = vld [vmem:[%s432 + $0x94] sm:$0xf]
                  %461 = vst [vmem:[%s433 + $0x34] sm:$0xf] %v460
                  %v462 = vld [vmem:[%s432 + $0xa8] sm:$0xf]
                  %463 = vst [vmem:[%s433 + $0x38] sm:$0xf] %v462
                  %v464 = vld [vmem:[%s432 + $0xac] sm:$0xf]
                  %465 = vst [vmem:[%s433 + $0x3c] sm:$0xf] %v464
                  %v466 = vld [vmem:[%s432 + $0xc0] sm:$0xf]
                  %467 = vst [vmem:[%s433 + $0x40] sm:$0xf] %v466
                  %v468 = vld [vmem:[%s432 + $0xc4] sm:$0xf]
                  %469 = vst [vmem:[%s433 + $0x44] sm:$0xf] %v468
                  %v470 = vld [vmem:[%s432 + $0xd8] sm:$0xf]
                  %471 = vst [vmem:[%s433 + $0x48] sm:$0xf] %v470
                  %v472 = vld [vmem:[%s432 + $0xdc] sm:$0xf]
                  %473 = vst [vmem:[%s433 + $0x4c] sm:$0xf] %v472
                  %v474 = vld [vmem:[%s432 + $0xf0] sm:$0xf]
                  %475 = vst [vmem:[%s433 + $0x50] sm:$0xf] %v474
                  %v476 = vld [vmem:[%s432 + $0xf4] sm:$0xf]
                  %477 = vst [vmem:[%s433 + $0x54] sm:$0xf] %v476
                  %v478 = vld [vmem:[%s432 + $0x108] sm:$0xf]
                  %479 = vst [vmem:[%s433 + $0x58] sm:$0xf] %v478
                  %v480 = vld [vmem:[%s432 + $0x10c] sm:$0xf]
                  %481 = vst [vmem:[%s433 + $0x5c] sm:$0xf] %v480
                  %v482 = vld [vmem:[%s432 + $0x120] sm:$0xf]
                  %483 = vst [vmem:[%s433 + $0x60] sm:$0xf] %v482
                  %v484 = vld [vmem:[%s432 + $0x124] sm:$0xf]
                  %485 = vst [vmem:[%s433 + $0x64] sm:$0xf] %v484
                  %v486 = vld [vmem:[%s432 + $0x138] sm:$0xf]
                  %487 = vst [vmem:[%s433 + $0x68] sm:$0xf] %v486
                  %v488 = vld [vmem:[%s432 + $0x13c] sm:$0xf]
                  %489 = vst [vmem:[%s433 + $0x6c] sm:$0xf] %v488
                  %v490 = vld [vmem:[%s432 + $0x150] sm:$0xf]
                  %491 = vst [vmem:[%s433 + $0x70] sm:$0xf] %v490
                  %v492 = vld [vmem:[%s432 + $0x154] sm:$0xf]
                  %493 = vst [vmem:[%s433 + $0x74] sm:$0xf] %v492
                  %v494 = vld [vmem:[%s432 + $0x168] sm:$0xf]
                  %495 = vst [vmem:[%s433 + $0x78] sm:$0xf] %v494
                  %v496 = vld [vmem:[%s432 + $0x16c] sm:$0xf]
                  %497 = vst [vmem:[%s433 + $0x7c] sm:$0xf] %v496
                  %v498 = vld [vmem:[%s432 + $0x180] sm:$0xf]
                  %499 = vst [vmem:[%s433 + $0x80] sm:$0xf] %v498
                  %v500 = vld [vmem:[%s432 + $0x184] sm:$0xf]
                  %501 = vst [vmem:[%s433 + $0x84] sm:$0xf] %v500
                  %v502 = vld [vmem:[%s432 + $0x198] sm:$0xf]
                  %503 = vst [vmem:[%s433 + $0x88] sm:$0xf] %v502
                  %v504 = vld [vmem:[%s432 + $0x19c] sm:$0xf]
                  %505 = vst [vmem:[%s433 + $0x8c] sm:$0xf] %v504
                  %v506 = vld [vmem:[%s432 + $0x1b0] sm:$0xf]
                  %507 = vst [vmem:[%s433 + $0x90] sm:$0xf] %v506
                  %v508 = vld [vmem:[%s432 + $0x1b4] sm:$0xf]
                  %509 = vst [vmem:[%s433 + $0x94] sm:$0xf] %v508
                  %v510 = vld [vmem:[%s432 + $0x1c8] sm:$0xf]
                  %511 = vst [vmem:[%s433 + $0x98] sm:$0xf] %v510
                  %v512 = vld [vmem:[%s432 + $0x1cc] sm:$0xf]
                  %513 = vst [vmem:[%s433 + $0x9c] sm:$0xf] %v512
                  %v514 = vld [vmem:[%s432 + $0x1e0] sm:$0xf]
                  %515 = vst [vmem:[%s433 + $0xa0] sm:$0xf] %v514
                  %v516 = vld [vmem:[%s432 + $0x1e4] sm:$0xf]
                  %517 = vst [vmem:[%s433 + $0xa4] sm:$0xf] %v516
                  %v518 = vld [vmem:[%s432 + $0x1f8] sm:$0xf]
                  %519 = vst [vmem:[%s433 + $0xa8] sm:$0xf] %v518
                  %v520 = vld [vmem:[%s432 + $0x1fc] sm:$0xf]
                  %521 = vst [vmem:[%s433 + $0xac] sm:$0xf] %v520
                  %v522 = vld [vmem:[%s432 + $0x210] sm:$0xf]
                  %523 = vst [vmem:[%s433 + $0xb0] sm:$0xf] %v522
                  %v524 = vld [vmem:[%s432 + $0x214] sm:$0xf]
                  %525 = vst [vmem:[%s433 + $0xb4] sm:$0xf] %v524
                  %v526 = vld [vmem:[%s432 + $0x228] sm:$0xf]
                  %527 = vst [vmem:[%s433 + $0xb8] sm:$0xf] %v526
                  %v528 = vld [vmem:[%s432 + $0x22c] sm:$0xf]
                  %529 = vst [vmem:[%s433 + $0xbc] sm:$0xf] %v528
                  %v530 = vld [vmem:[%s432 + $0x240] sm:$0xf]
                  %531 = vst [vmem:[%s433 + $0xc0] sm:$0xf] %v530
                  %v532 = vld [vmem:[%s432 + $0x244] sm:$0xf]
                  %533 = vst [vmem:[%s433 + $0xc4] sm:$0xf] %v532
                  %v534 = vld [vmem:[%s432 + $0x258] sm:$0xf]
                  %535 = vst [vmem:[%s433 + $0xc8] sm:$0xf] %v534
                  %v536 = vld [vmem:[%s432 + $0x25c] sm:$0xf]
                  %537 = vst [vmem:[%s433 + $0xcc] sm:$0xf] %v536
                  %v538 = vld [vmem:[%s432 + $0x270] sm:$0xf]
                  %539 = vst [vmem:[%s433 + $0xd0] sm:$0xf] %v538
                  %v540 = vld [vmem:[%s432 + $0x274] sm:$0xf]
                  %541 = vst [vmem:[%s433 + $0xd4] sm:$0xf] %v540
                  %v542 = vld [vmem:[%s432 + $0x288] sm:$0xf]
                  %543 = vst [vmem:[%s433 + $0xd8] sm:$0xf] %v542
                  %v544 = vld [vmem:[%s432 + $0x28c] sm:$0xf]
                  %545 = vst [vmem:[%s433 + $0xdc] sm:$0xf] %v544
                $region87: #{cnn_mnist_forward.1} parent=74 // loop_footer
                  %s431 = sadd.s32 1, %s427
                $region88: #{cnn_mnist_forward.1} parent=74 // loop_footer_branch
                  %426 = sbr.rel target = $region84
                $region89: #{cnn_mnist_forward.1} parent=74 // loop_exit
                  _
              $region75: #{cnn_mnist_forward.1} parent=59 // pred_fallthru
                _
            $region60: #{cnn_mnist_forward.1} parent=55 // pred_fallthru
              _
            // Predicated region
            $region61: #{cnn_mnist_forward.1} parent=55 // pred_check
              _
            $region62: #{cnn_mnist_forward.1} parent=55 // pred_check_branch
              %293 = sbr.rel (0) target = $region64
            $region63: #{cnn_mnist_forward.1} parent=55 // pred_region
              loop: start=0, step=1, limit=1
              $region65: #{cnn_mnist_forward.1} parent=63 // loop_pre_header
                _
              $region66: #{cnn_mnist_forward.1} parent=63 // loop_header
                %s296 = sphi 0, %s300
                %p297 = scmp.ge.s32.totalorder %s296, 1
                %s301 = sphi %s287, %s287
                %s302 = sphi %s284, %s284
              $region67: #{cnn_mnist_forward.1} parent=63 // loop_header_branch
                %299 = sbr.rel (%p297) target = $region71
              $region68: #{cnn_mnist_forward.1} parent=63 // loop_body
                %v303 = vld [vmem:[%s301] sm:$0xf]
                %304 = vst [vmem:[%s302] sm:$0xf] %v303
                %v305 = vld [vmem:[%s301 + $0x4] sm:$0xf]
                %306 = vst [vmem:[%s302 + $0x4] sm:$0xf] %v305
                %v307 = vld [vmem:[%s301 + $0x18] sm:$0xf]
                %308 = vst [vmem:[%s302 + $0x8] sm:$0xf] %v307
                %v309 = vld [vmem:[%s301 + $0x1c] sm:$0xf]
                %310 = vst [vmem:[%s302 + $0xc] sm:$0xf] %v309
                %v311 = vld [vmem:[%s301 + $0x30] sm:$0xf]
                %312 = vst [vmem:[%s302 + $0x10] sm:$0xf] %v311
                %v313 = vld [vmem:[%s301 + $0x34] sm:$0xf]
                %314 = vst [vmem:[%s302 + $0x14] sm:$0xf] %v313
                %v315 = vld [vmem:[%s301 + $0x48] sm:$0xf]
                %316 = vst [vmem:[%s302 + $0x18] sm:$0xf] %v315
                %v317 = vld [vmem:[%s301 + $0x4c] sm:$0xf]
                %318 = vst [vmem:[%s302 + $0x1c] sm:$0xf] %v317
                %v319 = vld [vmem:[%s301 + $0x60] sm:$0xf]
                %320 = vst [vmem:[%s302 + $0x20] sm:$0xf] %v319
                %v321 = vld [vmem:[%s301 + $0x64] sm:$0xf]
                %322 = vst [vmem:[%s302 + $0x24] sm:$0xf] %v321
                %v323 = vld [vmem:[%s301 + $0x78] sm:$0xf]
                %324 = vst [vmem:[%s302 + $0x28] sm:$0xf] %v323
                %v325 = vld [vmem:[%s301 + $0x7c] sm:$0xf]
                %326 = vst [vmem:[%s302 + $0x2c] sm:$0xf] %v325
                %v327 = vld [vmem:[%s301 + $0x90] sm:$0xf]
                %328 = vst [vmem:[%s302 + $0x30] sm:$0xf] %v327
                %v329 = vld [vmem:[%s301 + $0x94] sm:$0xf]
                %330 = vst [vmem:[%s302 + $0x34] sm:$0xf] %v329
                %v331 = vld [vmem:[%s301 + $0xa8] sm:$0xf]
                %332 = vst [vmem:[%s302 + $0x38] sm:$0xf] %v331
                %v333 = vld [vmem:[%s301 + $0xac] sm:$0xf]
                %334 = vst [vmem:[%s302 + $0x3c] sm:$0xf] %v333
                %v335 = vld [vmem:[%s301 + $0xc0] sm:$0xf]
                %336 = vst [vmem:[%s302 + $0x40] sm:$0xf] %v335
                %v337 = vld [vmem:[%s301 + $0xc4] sm:$0xf]
                %338 = vst [vmem:[%s302 + $0x44] sm:$0xf] %v337
                %v339 = vld [vmem:[%s301 + $0xd8] sm:$0xf]
                %340 = vst [vmem:[%s302 + $0x48] sm:$0xf] %v339
                %v341 = vld [vmem:[%s301 + $0xdc] sm:$0xf]
                %342 = vst [vmem:[%s302 + $0x4c] sm:$0xf] %v341
                %v343 = vld [vmem:[%s301 + $0xf0] sm:$0xf]
                %344 = vst [vmem:[%s302 + $0x50] sm:$0xf] %v343
                %v345 = vld [vmem:[%s301 + $0xf4] sm:$0xf]
                %346 = vst [vmem:[%s302 + $0x54] sm:$0xf] %v345
                %v347 = vld [vmem:[%s301 + $0x108] sm:$0xf]
                %348 = vst [vmem:[%s302 + $0x58] sm:$0xf] %v347
                %v349 = vld [vmem:[%s301 + $0x10c] sm:$0xf]
                %350 = vst [vmem:[%s302 + $0x5c] sm:$0xf] %v349
                %v351 = vld [vmem:[%s301 + $0x120] sm:$0xf]
                %352 = vst [vmem:[%s302 + $0x60] sm:$0xf] %v351
                %v353 = vld [vmem:[%s301 + $0x124] sm:$0xf]
                %354 = vst [vmem:[%s302 + $0x64] sm:$0xf] %v353
                %v355 = vld [vmem:[%s301 + $0x138] sm:$0xf]
                %356 = vst [vmem:[%s302 + $0x68] sm:$0xf] %v355
                %v357 = vld [vmem:[%s301 + $0x13c] sm:$0xf]
                %358 = vst [vmem:[%s302 + $0x6c] sm:$0xf] %v357
                %v359 = vld [vmem:[%s301 + $0x150] sm:$0xf]
                %360 = vst [vmem:[%s302 + $0x70] sm:$0xf] %v359
                %v361 = vld [vmem:[%s301 + $0x154] sm:$0xf]
                %362 = vst [vmem:[%s302 + $0x74] sm:$0xf] %v361
                %v363 = vld [vmem:[%s301 + $0x168] sm:$0xf]
                %364 = vst [vmem:[%s302 + $0x78] sm:$0xf] %v363
                %v365 = vld [vmem:[%s301 + $0x16c] sm:$0xf]
                %366 = vst [vmem:[%s302 + $0x7c] sm:$0xf] %v365
                %v367 = vld [vmem:[%s301 + $0x180] sm:$0xf]
                %368 = vst [vmem:[%s302 + $0x80] sm:$0xf] %v367
                %v369 = vld [vmem:[%s301 + $0x184] sm:$0xf]
                %370 = vst [vmem:[%s302 + $0x84] sm:$0xf] %v369
                %v371 = vld [vmem:[%s301 + $0x198] sm:$0xf]
                %372 = vst [vmem:[%s302 + $0x88] sm:$0xf] %v371
                %v373 = vld [vmem:[%s301 + $0x19c] sm:$0xf]
                %374 = vst [vmem:[%s302 + $0x8c] sm:$0xf] %v373
                %v375 = vld [vmem:[%s301 + $0x1b0] sm:$0xf]
                %376 = vst [vmem:[%s302 + $0x90] sm:$0xf] %v375
                %v377 = vld [vmem:[%s301 + $0x1b4] sm:$0xf]
                %378 = vst [vmem:[%s302 + $0x94] sm:$0xf] %v377
                %v379 = vld [vmem:[%s301 + $0x1c8] sm:$0xf]
                %380 = vst [vmem:[%s302 + $0x98] sm:$0xf] %v379
                %v381 = vld [vmem:[%s301 + $0x1cc] sm:$0xf]
                %382 = vst [vmem:[%s302 + $0x9c] sm:$0xf] %v381
                %v383 = vld [vmem:[%s301 + $0x1e0] sm:$0xf]
                %384 = vst [vmem:[%s302 + $0xa0] sm:$0xf] %v383
                %v385 = vld [vmem:[%s301 + $0x1e4] sm:$0xf]
                %386 = vst [vmem:[%s302 + $0xa4] sm:$0xf] %v385
                %v387 = vld [vmem:[%s301 + $0x1f8] sm:$0xf]
                %388 = vst [vmem:[%s302 + $0xa8] sm:$0xf] %v387
                %v389 = vld [vmem:[%s301 + $0x1fc] sm:$0xf]
                %390 = vst [vmem:[%s302 + $0xac] sm:$0xf] %v389
                %v391 = vld [vmem:[%s301 + $0x210] sm:$0xf]
                %392 = vst [vmem:[%s302 + $0xb0] sm:$0xf] %v391
                %v393 = vld [vmem:[%s301 + $0x214] sm:$0xf]
                %394 = vst [vmem:[%s302 + $0xb4] sm:$0xf] %v393
                %v395 = vld [vmem:[%s301 + $0x228] sm:$0xf]
                %396 = vst [vmem:[%s302 + $0xb8] sm:$0xf] %v395
                %v397 = vld [vmem:[%s301 + $0x22c] sm:$0xf]
                %398 = vst [vmem:[%s302 + $0xbc] sm:$0xf] %v397
                %v399 = vld [vmem:[%s301 + $0x240] sm:$0xf]
                %400 = vst [vmem:[%s302 + $0xc0] sm:$0xf] %v399
                %v401 = vld [vmem:[%s301 + $0x244] sm:$0xf]
                %402 = vst [vmem:[%s302 + $0xc4] sm:$0xf] %v401
                %v403 = vld [vmem:[%s301 + $0x258] sm:$0xf]
                %404 = vst [vmem:[%s302 + $0xc8] sm:$0xf] %v403
                %v405 = vld [vmem:[%s301 + $0x25c] sm:$0xf]
                %406 = vst [vmem:[%s302 + $0xcc] sm:$0xf] %v405
                %v407 = vld [vmem:[%s301 + $0x270] sm:$0xf]
                %408 = vst [vmem:[%s302 + $0xd0] sm:$0xf] %v407
                %v409 = vld [vmem:[%s301 + $0x274] sm:$0xf]
                %410 = vst [vmem:[%s302 + $0xd4] sm:$0xf] %v409
                %v411 = vld [vmem:[%s301 + $0x288] sm:$0xf]
                %412 = vst [vmem:[%s302 + $0xd8] sm:$0xf] %v411
                %v413 = vld [vmem:[%s301 + $0x28c] sm:$0xf]
                %414 = vst [vmem:[%s302 + $0xdc] sm:$0xf] %v413
              $region69: #{cnn_mnist_forward.1} parent=63 // loop_footer
                %s300 = sadd.s32 1, %s296
              $region70: #{cnn_mnist_forward.1} parent=63 // loop_footer_branch
                %295 = sbr.rel target = $region66
              $region71: #{cnn_mnist_forward.1} parent=63 // loop_exit
                _
            $region64: #{cnn_mnist_forward.1} parent=55 // pred_fallthru
              _
          $region56: #{cnn_mnist_forward.1} parent=51 // pred_fallthru
            _
          %546 = vnop
        $region52: #{cnn_mnist_forward.1} parent=47 // pred_fallthru
          _
      $region48: #{cnn_mnist_forward.1} parent=5 // pred_fallthru
        _
      %p547 = scmp.le.s32.totalorder 1, %s15
      %p548 = scmp.lt.s32.totalorder %s15, 4
      %p549 = pnand %p547, %p548
      %p550 = pneg %p549
      // Predicated region
      $region90: #{cnn_mnist_forward.1} parent=5 // pred_check
        _
      $region91: #{cnn_mnist_forward.1} parent=5 // pred_check_branch
        %552 = sbr.rel (%p549) target = $region93
      $region92: #{cnn_mnist_forward.1} parent=5 // pred_region
        %s553 = ssub.s32 %s15, 1
        %s554 = sand.u32 %s28, 1
        %s555 = sand.u32 %s28, 1
        %s556 = smul.addr %s555, 224
        %s557 = scalar_lea.vmem [#allocation2], %s556
        // Predicated region
        $region94: #{cnn_mnist_forward.1} parent=92 // pred_check
          %p558 = pneg %p41
        $region95: #{cnn_mnist_forward.1} parent=92 // pred_check_branch
          %560 = sbr.rel (%p558) target = $region97
        $region96: #{cnn_mnist_forward.1} parent=92 // pred_region
          _
        $region97: #{cnn_mnist_forward.1} parent=92 // pred_fallthru
          _
        %s561 = sand.u32 %s28, 1
        %s562 = sand.u32 %s28, 1
        %s563 = smul.addr %s562, 224
        %s564 = scalar_lea.vmem [#allocation2], %s563
        %p565 = pneg %p41
        %p566 = pneg %p38
        %p567 = pneg %p62
        %p568 = pneg %p59
        %p569 = pneg %p83
        %p570 = pneg %p80
        %p571 = pneg %p104
        %p572 = pneg %p101
        %p573 = pneg %p125
        %p574 = pneg %p122
        %p575 = pneg %p146
        %p576 = pneg %p143
        %p577 = pneg %p167
        %p578 = pneg %p164
        %p579 = pneg %p188
        %p580 = pneg %p185
        %p581 = pneg %p209
        %p582 = pneg %p206
        %p583 = pneg %p235
        %p584 = pneg %p232
        %s585 = smul.u32 2, %s20
        %p586 = scmp.lt.s32.totalorder %s585, 5
        %s587 = scalar_select %p586, %s585, 5
        %s588 = smul.addr %s587, 8
        %s589 = scalar_lea.vmem %s9, %s588
        %s590 = smul.u32 2, %s20
        %s591 = smul.u32 2, %s20
        %p592 = scmp.lt.s32.totalorder %s591, 5
        %s593 = scalar_select %p592, %s591, 5
        %s594 = smul.addr %s593, 8
        %s595 = scalar_lea.vmem %s9, %s594
        %s596 = smul.u32 2, %s20
        %v598 = vld [vmem:[%s557] sm:$0xf]
        %v599 = vld [vmem:[%s557 + $0x4] sm:$0xf]
        %v600 = vld [vmem:[%s557 + $0x8] sm:$0xf]
        %v601 = vld [vmem:[%s557 + $0xc] sm:$0xf]
        %v602 = vld [vmem:[%s557 + $0x10] sm:$0xf]
        %v603 = vld [vmem:[%s557 + $0x14] sm:$0xf]
        %v604 = vld [vmem:[%s557 + $0x18] sm:$0xf]
        %v605 = vld [vmem:[%s557 + $0x1c] sm:$0xf]
        %v606 = vld [vmem:[%s557 + $0x20] sm:$0xf]
        %v607 = vld [vmem:[%s557 + $0x24] sm:$0xf]
        %v608 = vld [vmem:[%s557 + $0x28] sm:$0xf]
        %v609 = vld [vmem:[%s557 + $0x2c] sm:$0xf]
        %v610 = vld [vmem:[%s557 + $0x30] sm:$0xf]
        %v611 = vld [vmem:[%s557 + $0x34] sm:$0xf]
        %v612 = vld [vmem:[%s557 + $0x38] sm:$0xf]
        %v613 = vld [vmem:[%s557 + $0x3c] sm:$0xf]
        %v614 = vld [vmem:[%s557 + $0x40] sm:$0xf]
        %v615 = vld [vmem:[%s557 + $0x44] sm:$0xf]
        %v616 = vld [vmem:[%s557 + $0x48] sm:$0xf]
        %v617 = vld [vmem:[%s557 + $0x4c] sm:$0xf]
        %v618 = vld [vmem:[%s557 + $0x50] sm:$0xf]
        %v619 = vld [vmem:[%s557 + $0x54] sm:$0xf]
        %v620 = vld [vmem:[%s557 + $0x58] sm:$0xf]
        %v621 = vld [vmem:[%s557 + $0x5c] sm:$0xf]
        %v622 = vld [vmem:[%s557 + $0x60] sm:$0xf]
        %v623 = vld [vmem:[%s557 + $0x64] sm:$0xf]
        %v624 = vld [vmem:[%s557 + $0x68] sm:$0xf]
        %v625 = vld [vmem:[%s557 + $0x6c] sm:$0xf]
        %v626 = vld [vmem:[%s557 + $0x70] sm:$0xf]
        %v627 = vld [vmem:[%s557 + $0x74] sm:$0xf]
        %v628 = vld [vmem:[%s557 + $0x78] sm:$0xf]
        %v629 = vld [vmem:[%s557 + $0x7c] sm:$0xf]
        %v630 = vld [vmem:[%s557 + $0x80] sm:$0xf]
        %v631 = vld [vmem:[%s557 + $0x84] sm:$0xf]
        %v632 = vld [vmem:[%s557 + $0x88] sm:$0xf]
        %v633 = vld [vmem:[%s557 + $0x8c] sm:$0xf]
        %v634 = vld [vmem:[%s557 + $0x90] sm:$0xf]
        %v635 = vld [vmem:[%s557 + $0x94] sm:$0xf]
        %v636 = vld [vmem:[%s557 + $0x98] sm:$0xf]
        %v637 = vld [vmem:[%s557 + $0x9c] sm:$0xf]
        %v638 = vld [vmem:[%s557 + $0xa0] sm:$0xf]
        %v639 = vld [vmem:[%s557 + $0xa4] sm:$0xf]
        %v640 = vld [vmem:[%s557 + $0xa8] sm:$0xf]
        %v641 = vld [vmem:[%s557 + $0xac] sm:$0xf]
        %v642 = vld [vmem:[%s557 + $0xb0] sm:$0xf]
        %v643 = vld [vmem:[%s557 + $0xb4] sm:$0xf]
        %v644 = vld [vmem:[%s557 + $0xb8] sm:$0xf]
        %v645 = vld [vmem:[%s557 + $0xbc] sm:$0xf]
        %v646 = vld [vmem:[%s557 + $0xc0] sm:$0xf]
        %v647 = vld [vmem:[%s557 + $0xc4] sm:$0xf]
        %v648 = vld [vmem:[%s557 + $0xc8] sm:$0xf]
        %v649 = vld [vmem:[%s557 + $0xcc] sm:$0xf]
        %v650 = vld [vmem:[%s557 + $0xd0] sm:$0xf]
        %v651 = vld [vmem:[%s557 + $0xd4] sm:$0xf]
        %v652 = vld [vmem:[%s557 + $0xd8] sm:$0xf]
        %v653 = vld [vmem:[%s557 + $0xdc] sm:$0xf]
        %v702 = vunpack.c.l.b16 %v598
        %v703 = vunpack.c.l.b16 %v599
        %v704 = vunpack.c.l.b16 %v600
        %v705 = vunpack.c.l.b16 %v601
        %v706 = vunpack.c.l.b16 %v602
        %v707 = vunpack.c.l.b16 %v603
        %v708 = vunpack.c.l.b16 %v604
        %v709 = vunpack.c.l.b16 %v605
        %v710 = vunpack.c.l.b16 %v606
        %v711 = vunpack.c.l.b16 %v607
        %v712 = vunpack.c.l.b16 %v608
        %v713 = vunpack.c.l.b16 %v609
        %v714 = vunpack.c.l.b16 %v610
        %v715 = vunpack.c.l.b16 %v611
        %v716 = vunpack.c.l.b16 %v612
        %v717 = vunpack.c.l.b16 %v613
        %v718 = vunpack.c.l.b16 %v614
        %v719 = vunpack.c.l.b16 %v615
        %v720 = vunpack.c.l.b16 %v616
        %v721 = vunpack.c.l.b16 %v617
        %v722 = vunpack.c.l.b16 %v618
        %v723 = vunpack.c.l.b16 %v619
        %v724 = vunpack.c.l.b16 %v620
        %v725 = vunpack.c.l.b16 %v621
        %v726 = vunpack.c.l.b16 %v622
        %v727 = vunpack.c.l.b16 %v623
        %v728 = vunpack.c.l.b16 %v624
        %v729 = vunpack.c.l.b16 %v625
        %v730 = vunpack.c.l.b16 %v626
        %v731 = vunpack.c.l.b16 %v627
        %v732 = vunpack.c.l.b16 %v628
        %v733 = vunpack.c.l.b16 %v629
        %v734 = vunpack.c.l.b16 %v630
        %v735 = vunpack.c.l.b16 %v631
        %v736 = vunpack.c.l.b16 %v632
        %v737 = vunpack.c.l.b16 %v633
        %v738 = vunpack.c.l.b16 %v634
        %v739 = vunpack.c.l.b16 %v635
        %v740 = vunpack.c.l.b16 %v636
        %v741 = vunpack.c.l.b16 %v637
        %v742 = vunpack.c.l.b16 %v638
        %v743 = vunpack.c.l.b16 %v639
        %v744 = vunpack.c.l.b16 %v640
        %v745 = vunpack.c.l.b16 %v641
        %v746 = vunpack.c.l.b16 %v642
        %v747 = vunpack.c.l.b16 %v643
        %v748 = vunpack.c.l.b16 %v644
        %v749 = vunpack.c.l.b16 %v645
        %v750 = vpack.c.b16 %v703, %v702
        %v751 = vpack.c.b16 %v705, %v704
        %v752 = vpack.c.b16 %v707, %v706
        %v753 = vpack.c.b16 %v709, %v708
        %v754 = vpack.c.b16 %v711, %v710
        %v755 = vpack.c.b16 %v713, %v712
        %v756 = vpack.c.b16 %v715, %v714
        %v757 = vpack.c.b16 %v717, %v716
        %v758 = vpack.c.b16 %v719, %v718
        %v759 = vpack.c.b16 %v721, %v720
        %v760 = vpack.c.b16 %v723, %v722
        %v761 = vpack.c.b16 %v725, %v724
        %v762 = vpack.c.b16 %v727, %v726
        %v763 = vpack.c.b16 %v729, %v728
        %v764 = vpack.c.b16 %v731, %v730
        %v765 = vpack.c.b16 %v733, %v732
        %v766 = vpack.c.b16 %v735, %v734
        %v767 = vpack.c.b16 %v737, %v736
        %v768 = vpack.c.b16 %v739, %v738
        %v769 = vpack.c.b16 %v741, %v740
        %v770 = vpack.c.b16 %v743, %v742
        %v771 = vpack.c.b16 %v745, %v744
        %v772 = vpack.c.b16 %v747, %v746
        %v773 = vpack.c.b16 %v749, %v748
        %v776 = vunpack.c.l.b16 %v646
        %v777 = vunpack.c.l.b16 %v647
        %v778 = vpack.c.b16 %v777, %v776
        %779 = vrot.lane.b32.xlu0 %v751, 28
        %v780 = vpop.permute.xlu0 %779
        %781 = vrot.lane.b32.xlu0 %v752, 28
        %v782 = vpop.permute.xlu0 %781
        %783 = vrot.lane.b32.xlu0 %v753, 28
        %v784 = vpop.permute.xlu0 %783
        %785 = vrot.lane.b32.xlu0 %v754, 28
        %v786 = vpop.permute.xlu0 %785
        %787 = vrot.lane.b32.xlu0 %v755, 28
        %v788 = vpop.permute.xlu0 %787
        %789 = vrot.lane.b32.xlu0 %v756, 28
        %v790 = vpop.permute.xlu0 %789
        %791 = vrot.lane.b32.xlu0 %v757, 28
        %v792 = vpop.permute.xlu0 %791
        %793 = vrot.lane.b32.xlu0 %v758, 28
        %v794 = vpop.permute.xlu0 %793
        %795 = vrot.lane.b32.xlu0 %v759, 28
        %v796 = vpop.permute.xlu0 %795
        %797 = vrot.lane.b32.xlu0 %v760, 28
        %v798 = vpop.permute.xlu0 %797
        %799 = vrot.lane.b32.xlu0 %v761, 28
        %v800 = vpop.permute.xlu0 %799
        %801 = vrot.lane.b32.xlu0 %v762, 28
        %v802 = vpop.permute.xlu0 %801
        %803 = vrot.lane.b32.xlu0 %v763, 28
        %v804 = vpop.permute.xlu0 %803
        %805 = vrot.lane.b32.xlu0 %v764, 28
        %v806 = vpop.permute.xlu0 %805
        %807 = vrot.lane.b32.xlu0 %v765, 28
        %v808 = vpop.permute.xlu0 %807
        %809 = vrot.lane.b32.xlu0 %v766, 28
        %v810 = vpop.permute.xlu0 %809
        %811 = vrot.lane.b32.xlu0 %v767, 28
        %v812 = vpop.permute.xlu0 %811
        %813 = vrot.lane.b32.xlu0 %v768, 28
        %v814 = vpop.permute.xlu0 %813
        %815 = vrot.lane.b32.xlu0 %v769, 28
        %v816 = vpop.permute.xlu0 %815
        %817 = vrot.lane.b32.xlu0 %v770, 28
        %v818 = vpop.permute.xlu0 %817
        %819 = vrot.lane.b32.xlu0 %v771, 28
        %v820 = vpop.permute.xlu0 %819
        %821 = vrot.lane.b32.xlu0 %v772, 28
        %v822 = vpop.permute.xlu0 %821
        %823 = vrot.lane.b32.xlu0 %v773, 28
        %v824 = vpop.permute.xlu0 %823
        %825 = vrot.lane.b32.xlu0 %v778, 28
        %v826 = vpop.permute.xlu0 %825
        %v829 = vunpack.c.l.b16 %v648
        %v830 = vunpack.c.l.b16 %v649
        %v831 = vpack.c.b16 %v830, %v829
        %832 = vrot.lane.b32.xlu0 %v752, 56
        %v833 = vpop.permute.xlu0 %832
        %834 = vrot.lane.b32.xlu0 %v753, 56
        %v835 = vpop.permute.xlu0 %834
        %836 = vrot.lane.b32.xlu0 %v754, 56
        %v837 = vpop.permute.xlu0 %836
        %838 = vrot.lane.b32.xlu0 %v755, 56
        %v839 = vpop.permute.xlu0 %838
        %840 = vrot.lane.b32.xlu0 %v756, 56
        %v841 = vpop.permute.xlu0 %840
        %842 = vrot.lane.b32.xlu0 %v757, 56
        %v843 = vpop.permute.xlu0 %842
        %844 = vrot.lane.b32.xlu0 %v758, 56
        %v845 = vpop.permute.xlu0 %844
        %846 = vrot.lane.b32.xlu0 %v759, 56
        %v847 = vpop.permute.xlu0 %846
        %848 = vrot.lane.b32.xlu0 %v760, 56
        %v849 = vpop.permute.xlu0 %848
        %850 = vrot.lane.b32.xlu0 %v761, 56
        %v851 = vpop.permute.xlu0 %850
        %852 = vrot.lane.b32.xlu0 %v762, 56
        %v853 = vpop.permute.xlu0 %852
        %854 = vrot.lane.b32.xlu0 %v763, 56
        %v855 = vpop.permute.xlu0 %854
        %856 = vrot.lane.b32.xlu0 %v764, 56
        %v857 = vpop.permute.xlu0 %856
        %858 = vrot.lane.b32.xlu0 %v765, 56
        %v859 = vpop.permute.xlu0 %858
        %860 = vrot.lane.b32.xlu0 %v766, 56
        %v861 = vpop.permute.xlu0 %860
        %862 = vrot.lane.b32.xlu0 %v767, 56
        %v863 = vpop.permute.xlu0 %862
        %864 = vrot.lane.b32.xlu0 %v768, 56
        %v865 = vpop.permute.xlu0 %864
        %866 = vrot.lane.b32.xlu0 %v769, 56
        %v867 = vpop.permute.xlu0 %866
        %868 = vrot.lane.b32.xlu0 %v770, 56
        %v869 = vpop.permute.xlu0 %868
        %870 = vrot.lane.b32.xlu0 %v771, 56
        %v871 = vpop.permute.xlu0 %870
        %872 = vrot.lane.b32.xlu0 %v772, 56
        %v873 = vpop.permute.xlu0 %872
        %874 = vrot.lane.b32.xlu0 %v773, 56
        %v875 = vpop.permute.xlu0 %874
        %876 = vrot.lane.b32.xlu0 %v778, 56
        %v877 = vpop.permute.xlu0 %876
        %878 = vrot.lane.b32.xlu0 %v831, 56
        %v879 = vpop.permute.xlu0 %878
        %v882 = vunpack.c.l.b16 %v650
        %v883 = vunpack.c.l.b16 %v651
        %v884 = vpack.c.b16 %v883, %v882
        %885 = vrot.lane.b32.xlu0 %v753, 84
        %v886 = vpop.permute.xlu0 %885
        %887 = vrot.lane.b32.xlu0 %v754, 84
        %v888 = vpop.permute.xlu0 %887
        %889 = vrot.lane.b32.xlu0 %v755, 84
        %v890 = vpop.permute.xlu0 %889
        %891 = vrot.lane.b32.xlu0 %v756, 84
        %v892 = vpop.permute.xlu0 %891
        %893 = vrot.lane.b32.xlu0 %v757, 84
        %v894 = vpop.permute.xlu0 %893
        %895 = vrot.lane.b32.xlu0 %v758, 84
        %v896 = vpop.permute.xlu0 %895
        %897 = vrot.lane.b32.xlu0 %v759, 84
        %v898 = vpop.permute.xlu0 %897
        %899 = vrot.lane.b32.xlu0 %v760, 84
        %v900 = vpop.permute.xlu0 %899
        %901 = vrot.lane.b32.xlu0 %v761, 84
        %v902 = vpop.permute.xlu0 %901
        %903 = vrot.lane.b32.xlu0 %v762, 84
        %v904 = vpop.permute.xlu0 %903
        %905 = vrot.lane.b32.xlu0 %v763, 84
        %v906 = vpop.permute.xlu0 %905
        %907 = vrot.lane.b32.xlu0 %v764, 84
        %v908 = vpop.permute.xlu0 %907
        %909 = vrot.lane.b32.xlu0 %v765, 84
        %v910 = vpop.permute.xlu0 %909
        %911 = vrot.lane.b32.xlu0 %v766, 84
        %v912 = vpop.permute.xlu0 %911
        %913 = vrot.lane.b32.xlu0 %v767, 84
        %v914 = vpop.permute.xlu0 %913
        %915 = vrot.lane.b32.xlu0 %v768, 84
        %v916 = vpop.permute.xlu0 %915
        %917 = vrot.lane.b32.xlu0 %v769, 84
        %v918 = vpop.permute.xlu0 %917
        %919 = vrot.lane.b32.xlu0 %v770, 84
        %v920 = vpop.permute.xlu0 %919
        %921 = vrot.lane.b32.xlu0 %v771, 84
        %v922 = vpop.permute.xlu0 %921
        %923 = vrot.lane.b32.xlu0 %v772, 84
        %v924 = vpop.permute.xlu0 %923
        %925 = vrot.lane.b32.xlu0 %v773, 84
        %v926 = vpop.permute.xlu0 %925
        %927 = vrot.lane.b32.xlu0 %v778, 84
        %v928 = vpop.permute.xlu0 %927
        %929 = vrot.lane.b32.xlu0 %v831, 84
        %v930 = vpop.permute.xlu0 %929
        %931 = vrot.lane.b32.xlu0 %v884, 84
        %v932 = vpop.permute.xlu0 %931
        %v935 = vunpack.c.l.b16 %v652
        %v936 = vunpack.c.l.b16 %v653
        %v937 = vpack.c.b16 %v936, %v935
        %938 = vrot.lane.b32.xlu0 %v754, 112
        %v939 = vpop.permute.xlu0 %938
        %940 = vrot.lane.b32.xlu0 %v755, 112
        %v941 = vpop.permute.xlu0 %940
        %942 = vrot.lane.b32.xlu0 %v756, 112
        %v943 = vpop.permute.xlu0 %942
        %944 = vrot.lane.b32.xlu0 %v757, 112
        %v945 = vpop.permute.xlu0 %944
        %946 = vrot.lane.b32.xlu0 %v758, 112
        %v947 = vpop.permute.xlu0 %946
        %948 = vrot.lane.b32.xlu0 %v759, 112
        %v949 = vpop.permute.xlu0 %948
        %950 = vrot.lane.b32.xlu0 %v760, 112
        %v951 = vpop.permute.xlu0 %950
        %952 = vrot.lane.b32.xlu0 %v761, 112
        %v953 = vpop.permute.xlu0 %952
        %954 = vrot.lane.b32.xlu0 %v762, 112
        %v955 = vpop.permute.xlu0 %954
        %956 = vrot.lane.b32.xlu0 %v763, 112
        %v957 = vpop.permute.xlu0 %956
        %958 = vrot.lane.b32.xlu0 %v764, 112
        %v959 = vpop.permute.xlu0 %958
        %960 = vrot.lane.b32.xlu0 %v765, 112
        %v961 = vpop.permute.xlu0 %960
        %962 = vrot.lane.b32.xlu0 %v766, 112
        %v963 = vpop.permute.xlu0 %962
        %964 = vrot.lane.b32.xlu0 %v767, 112
        %v965 = vpop.permute.xlu0 %964
        %966 = vrot.lane.b32.xlu0 %v768, 112
        %v967 = vpop.permute.xlu0 %966
        %968 = vrot.lane.b32.xlu0 %v769, 112
        %v969 = vpop.permute.xlu0 %968
        %970 = vrot.lane.b32.xlu0 %v770, 112
        %v971 = vpop.permute.xlu0 %970
        %972 = vrot.lane.b32.xlu0 %v771, 112
        %v973 = vpop.permute.xlu0 %972
        %974 = vrot.lane.b32.xlu0 %v772, 112
        %v975 = vpop.permute.xlu0 %974
        %976 = vrot.lane.b32.xlu0 %v773, 112
        %v977 = vpop.permute.xlu0 %976
        %978 = vrot.lane.b32.xlu0 %v778, 112
        %v979 = vpop.permute.xlu0 %978
        %980 = vrot.lane.b32.xlu0 %v831, 112
        %v981 = vpop.permute.xlu0 %980
        %982 = vrot.lane.b32.xlu0 %v884, 112
        %v983 = vpop.permute.xlu0 %982
        %984 = vrot.lane.b32.xlu0 %v937, 112
        %v985 = vpop.permute.xlu0 %984
        %vm986 = vcmask 228352
        %v989 = vsel %vm986, %v750, %v780
        %v992 = vsel %vm986, %v751, %v782
        %v995 = vsel %vm986, %v752, %v784
        %v998 = vsel %vm986, %v753, %v786
        %v1001 = vsel %vm986, %v754, %v788
        %v1004 = vsel %vm986, %v755, %v790
        %v1007 = vsel %vm986, %v756, %v792
        %v1010 = vsel %vm986, %v757, %v794
        %v1013 = vsel %vm986, %v758, %v796
        %v1016 = vsel %vm986, %v759, %v798
        %v1019 = vsel %vm986, %v760, %v800
        %v1022 = vsel %vm986, %v761, %v802
        %v1025 = vsel %vm986, %v762, %v804
        %v1028 = vsel %vm986, %v763, %v806
        %v1031 = vsel %vm986, %v764, %v808
        %v1034 = vsel %vm986, %v765, %v810
        %v1037 = vsel %vm986, %v766, %v812
        %v1040 = vsel %vm986, %v767, %v814
        %v1043 = vsel %vm986, %v768, %v816
        %v1046 = vsel %vm986, %v769, %v818
        %v1049 = vsel %vm986, %v770, %v820
        %v1052 = vsel %vm986, %v771, %v822
        %v1055 = vsel %vm986, %v772, %v824
        %v1058 = vsel %vm986, %v773, %v826
        %vm1059 = vcmask 457728
        %v1061 = vsel %vm1059, %v989, %v833
        %v1063 = vsel %vm1059, %v992, %v835
        %v1065 = vsel %vm1059, %v995, %v837
        %v1067 = vsel %vm1059, %v998, %v839
        %v1069 = vsel %vm1059, %v1001, %v841
        %v1071 = vsel %vm1059, %v1004, %v843
        %v1073 = vsel %vm1059, %v1007, %v845
        %v1075 = vsel %vm1059, %v1010, %v847
        %v1077 = vsel %vm1059, %v1013, %v849
        %v1079 = vsel %vm1059, %v1016, %v851
        %v1081 = vsel %vm1059, %v1019, %v853
        %v1083 = vsel %vm1059, %v1022, %v855
        %v1085 = vsel %vm1059, %v1025, %v857
        %v1087 = vsel %vm1059, %v1028, %v859
        %v1089 = vsel %vm1059, %v1031, %v861
        %v1091 = vsel %vm1059, %v1034, %v863
        %v1093 = vsel %vm1059, %v1037, %v865
        %v1095 = vsel %vm1059, %v1040, %v867
        %v1097 = vsel %vm1059, %v1043, %v869
        %v1099 = vsel %vm1059, %v1046, %v871
        %v1101 = vsel %vm1059, %v1049, %v873
        %v1103 = vsel %vm1059, %v1052, %v875
        %v1105 = vsel %vm1059, %v1055, %v877
        %v1107 = vsel %vm1059, %v1058, %v879
        %vm1108 = vcmask 687104
        %v1110 = vsel %vm1108, %v1061, %v886
        %v1112 = vsel %vm1108, %v1063, %v888
        %v1114 = vsel %vm1108, %v1065, %v890
        %v1116 = vsel %vm1108, %v1067, %v892
        %v1118 = vsel %vm1108, %v1069, %v894
        %v1120 = vsel %vm1108, %v1071, %v896
        %v1122 = vsel %vm1108, %v1073, %v898
        %v1124 = vsel %vm1108, %v1075, %v900
        %v1126 = vsel %vm1108, %v1077, %v902
        %v1128 = vsel %vm1108, %v1079, %v904
        %v1130 = vsel %vm1108, %v1081, %v906
        %v1132 = vsel %vm1108, %v1083, %v908
        %v1134 = vsel %vm1108, %v1085, %v910
        %v1136 = vsel %vm1108, %v1087, %v912
        %v1138 = vsel %vm1108, %v1089, %v914
        %v1140 = vsel %vm1108, %v1091, %v916
        %v1142 = vsel %vm1108, %v1093, %v918
        %v1144 = vsel %vm1108, %v1095, %v920
        %v1146 = vsel %vm1108, %v1097, %v922
        %v1148 = vsel %vm1108, %v1099, %v924
        %v1150 = vsel %vm1108, %v1101, %v926
        %v1152 = vsel %vm1108, %v1103, %v928
        %v1154 = vsel %vm1108, %v1105, %v930
        %v1156 = vsel %vm1108, %v1107, %v932
        %vm1157 = vcmask 916480
        %v1159 = vsel %vm1157, %v1110, %v939
        %v1162 = vsel %vm1157, %v1112, %v941
        %v1165 = vsel %vm1157, %v1114, %v943
        %v1168 = vsel %vm1157, %v1116, %v945
        %v1171 = vsel %vm1157, %v1118, %v947
        %v1174 = vsel %vm1157, %v1120, %v949
        %v1177 = vsel %vm1157, %v1122, %v951
        %v1180 = vsel %vm1157, %v1124, %v953
        %v1183 = vsel %vm1157, %v1126, %v955
        %v1186 = vsel %vm1157, %v1128, %v957
        %v1189 = vsel %vm1157, %v1130, %v959
        %v1192 = vsel %vm1157, %v1132, %v961
        %v1195 = vsel %vm1157, %v1134, %v963
        %v1198 = vsel %vm1157, %v1136, %v965
        %v1201 = vsel %vm1157, %v1138, %v967
        %v1204 = vsel %vm1157, %v1140, %v969
        %v1207 = vsel %vm1157, %v1142, %v971
        %v1210 = vsel %vm1157, %v1144, %v973
        %v1213 = vsel %vm1157, %v1146, %v975
        %v1216 = vsel %vm1157, %v1148, %v977
        %v1219 = vsel %vm1157, %v1150, %v979
        %v1222 = vsel %vm1157, %v1152, %v981
        %v1225 = vsel %vm1157, %v1154, %v983
        %v1228 = vsel %vm1157, %v1156, %v985
        %v1230 = vld [vmem:[%s1] sm:$0xff]
        %v1231 = vld [vmem:[%s1 + $0x8] sm:$0xff]
        %v1232 = vld [vmem:[%s1 + $0x10] sm:$0xff]
        %v1233 = vld [vmem:[%s1 + $0x18] sm:$0xff]
        %v1234 = vld [vmem:[%s1 + $0x20] sm:$0xff]
        %v1235 = vld [vmem:[%s1 + $0x28] sm:$0xff]
        %v1236 = vld [vmem:[%s1 + $0x30] sm:$0xff]
        %v1237 = vld [vmem:[%s1 + $0x38] sm:$0xff]
        %v1238 = vld [vmem:[%s1 + $0x40] sm:$0xff]
        %v1239 = vld [vmem:[%s1 + $0x48] sm:$0xff]
        %v1240 = vld [vmem:[%s1 + $0x50] sm:$0xff]
        %v1241 = vld [vmem:[%s1 + $0x58] sm:$0xff]
        %v1242 = vld [vmem:[%s1 + $0x60] sm:$0xff]
        %v1243 = vld [vmem:[%s1 + $0x68] sm:$0xff]
        %v1244 = vld [vmem:[%s1 + $0x70] sm:$0xff]
        %v1245 = vld [vmem:[%s1 + $0x78] sm:$0xff]
        %v1246 = vld [vmem:[%s1 + $0x80] sm:$0xff]
        %v1247 = vld [vmem:[%s1 + $0x88] sm:$0x33]
        %v1248 = vld [vmem:[%s2] ss:$4 sm:$0x3]
        %v1250 = vlaneseq
        %v1251 = vshrl.u32 %v1250, 7
        %v1252 = vsub.s32 0, %v1251
        %v1253 = vrot.slane %v1248, %v1252
        %v1254 = vlaneseq
        %v1255 = vshrl.u32 %v1254, 7
        %v1256 = vsub.s32 1, %v1255
        %v1257 = vrot.slane %v1248, %v1256
        %v1278 = vunpack.c.l.b16 %v1230
        %v1279 = vunpack.c.h.b16 %v1230
        %v1280 = vunpack.c.l.b16 %v1231
        %v1281 = vunpack.c.h.b16 %v1231
        %v1282 = vunpack.c.l.b16 %v1232
        %v1283 = vunpack.c.h.b16 %v1232
        %v1284 = vunpack.c.l.b16 %v1233
        %v1285 = vunpack.c.h.b16 %v1233
        %v1286 = vunpack.c.l.b16 %v1234
        %v1287 = vunpack.c.h.b16 %v1234
        %v1288 = vunpack.c.l.b16 %v1235
        %v1289 = vunpack.c.h.b16 %v1235
        %v1290 = vunpack.c.l.b16 %v1236
        %v1291 = vunpack.c.h.b16 %v1236
        %v1292 = vunpack.c.l.b16 %v1237
        %v1293 = vunpack.c.h.b16 %v1237
        %v1294 = vunpack.c.l.b16 %v1238
        %v1295 = vunpack.c.h.b16 %v1238
        %v1296 = vunpack.c.l.b16 %v1239
        %v1297 = vunpack.c.h.b16 %v1239
        %v1298 = vunpack.c.l.b16 %v1240
        %v1299 = vunpack.c.h.b16 %v1240
        %v1300 = vunpack.c.l.b16 %v1241
        %v1301 = vunpack.c.h.b16 %v1241
        %v1302 = vunpack.c.l.b16 %v1242
        %v1303 = vunpack.c.h.b16 %v1242
        %v1304 = vunpack.c.l.b16 %v1243
        %v1305 = vunpack.c.h.b16 %v1243
        %v1306 = vunpack.c.l.b16 %v1244
        %v1307 = vunpack.c.h.b16 %v1244
        %v1308 = vunpack.c.l.b16 %v1245
        %v1309 = vunpack.c.h.b16 %v1245
        %v1310 = vunpack.c.l.b16 %v1246
        %v1311 = vunpack.c.h.b16 %v1246
        %v1312 = vunpack.c.l.b16 %v1247
        %v1313 = vunpack.c.h.b16 %v1247
        %v1314 = vpack.c.b16 %v1280, %v1278
        %v1315 = vpack.c.b16 %v1281, %v1279
        %v1316 = vpack.c.b16 %v1284, %v1282
        %v1317 = vpack.c.b16 %v1285, %v1283
        %v1318 = vpack.c.b16 %v1288, %v1286
        %v1319 = vpack.c.b16 %v1289, %v1287
        %v1320 = vpack.c.b16 %v1292, %v1290
        %v1321 = vpack.c.b16 %v1293, %v1291
        %v1322 = vpack.c.b16 %v1296, %v1294
        %v1323 = vpack.c.b16 %v1297, %v1295
        %v1324 = vpack.c.b16 %v1300, %v1298
        %v1325 = vpack.c.b16 %v1301, %v1299
        %v1326 = vpack.c.b16 %v1304, %v1302
        %v1327 = vpack.c.b16 %v1305, %v1303
        %v1328 = vpack.c.b16 %v1308, %v1306
        %v1329 = vpack.c.b16 %v1309, %v1307
        %v1330 = vpack.c.b16 %v1312, %v1310
        %v1331 = vpack.c.b16 %v1313, %v1311
        %vm1348 = vcmask 97280
        %v1349 = vsel %vm1348, %v939, 0
        %v1351 = vsel %vm1348, %v941, 0
        %v1353 = vsel %vm1348, %v943, 0
        %v1355 = vsel %vm1348, %v945, 0
        %v1357 = vsel %vm1348, %v947, 0
        %v1359 = vsel %vm1348, %v949, 0
        %v1361 = vsel %vm1348, %v951, 0
        %v1363 = vsel %vm1348, %v953, 0
        %v1365 = vsel %vm1348, %v955, 0
        %v1367 = vsel %vm1348, %v957, 0
        %v1369 = vsel %vm1348, %v959, 0
        %v1371 = vsel %vm1348, %v961, 0
        %v1373 = vsel %vm1348, %v963, 0
        %v1375 = vsel %vm1348, %v965, 0
        %v1377 = vsel %vm1348, %v967, 0
        %v1379 = vsel %vm1348, %v969, 0
        %v1381 = vsel %vm1348, %v971, 0
        %v1383 = vsel %vm1348, %v973, 0
        %v1385 = vsel %vm1348, %v975, 0
        %v1387 = vsel %vm1348, %v977, 0
        %v1389 = vsel %vm1348, %v979, 0
        %v1391 = vsel %vm1348, %v981, 0
        %v1393 = vsel %vm1348, %v983, 0
        %v1395 = vsel %vm1348, %v985, 0
        %vm1397 = vcmask 1045504
        %v1399 = vsel %vm1397, %v1330, 0
        %v1402 = vsel %vm1397, %v1331, 0
        %1404 = vmatprep.subr.bf16.mxu0 %v1315
        %1405 = vmatpush1.bf16.msra.mxu0 %v1314
        %1406 = vmatprep.subr.bf16.mxu0 %v1317
        %1407 = vmatpush1.bf16.msra.mxu0 %v1316
        %1408 = vmatprep.subr.bf16.mxu0 %v1319
        %1409 = vmatpush1.bf16.msra.mxu0 %v1318
        %1410 = vmatprep.subr.bf16.mxu0 %v1321
        %1411 = vmatpush1.bf16.msra.mxu0 %v1320
        %1412 = vmatprep.subr.bf16.mxu0 %v1323
        %1413 = vmatpush1.bf16.msra.mxu0 %v1322
        %1414 = vmatprep.subr.bf16.mxu0 %v1325
        %1415 = vmatpush1.bf16.msra.mxu0 %v1324
        %1416 = vmatprep.subr.bf16.mxu0 %v1327
        %1417 = vmatpush1.bf16.msra.mxu0 %v1326
        %1418 = vmatprep.subr.bf16.mxu0 %v1329
        %1419 = vmatpush1.bf16.msra.mxu0 %v1328
        %1420 = vmatprep.subr.bf16.mxu0 %v1402
        %1421 = vmatpush1.bf16.msra.mxu0 %v1399
        %1422 = vmatprep.subr.bf16.mxu0 0
        %1423 = vmatpush1.bf16.msra.mxu0 0
        %1424 = vmatprep.subr.bf16.mxu0 0
        %1425 = vmatpush1.bf16.msra.mxu0 0
        %1426 = vmatprep.subr.bf16.mxu0 0
        %1427 = vmatpush1.bf16.msra.mxu0 0
        %1428 = vmatprep.subr.bf16.mxu0 0
        %1429 = vmatpush1.bf16.msra.mxu0 0
        %1430 = vmatprep.subr.bf16.mxu0 0
        %1431 = vmatpush1.bf16.msra.mxu0 0
        %1432 = vmatprep.subr.bf16.mxu0 0
        %1433 = vmatpush1.bf16.msra.mxu0 0
        %1434 = vmatprep.subr.bf16.mxu0 0
        %1435 = vmatpush1.bf16.msra.mxu0 0
        %1436 = vmatprep.mubr.bf16.mxu0 %v1349
        %1437 = vmatmul.mubr.bf16.gmra.mrb[0].mxu0 %v1159
        %v1438 = vpop.f32.mrb[0].mxu0
        %v1439 = vadd.f32 %v1253, %v1438
        %v1440 = vpop.f32.mrb[0].mxu0
        %v1441 = vadd.f32 %v1257, %v1440
        %v1442 = vpop.f32.mrb[0].mxu0
        %v1443 = vadd.f32 %v1253, %v1442
        %v1444 = vpop.f32.mrb[0].mxu0
        %v1445 = vadd.f32 %v1257, %v1444
        %1446 = vmatprep.mubr.bf16.mxu0 %v1351
        %1447 = vmatmul.mubr.bf16.gmra.mrb[0].mxu0 %v1162
        %v1448 = vpop.f32.mrb[0].mxu0
        %v1449 = vadd.f32 %v1253, %v1448
        %v1450 = vpop.f32.mrb[0].mxu0
        %v1451 = vadd.f32 %v1257, %v1450
        %v1452 = vpop.f32.mrb[0].mxu0
        %v1453 = vadd.f32 %v1253, %v1452
        %v1454 = vpop.f32.mrb[0].mxu0
        %v1455 = vadd.f32 %v1257, %v1454
        %1456 = vmatprep.mubr.bf16.mxu0 %v1353
        %1457 = vmatmul.mubr.bf16.gmra.mrb[0].mxu0 %v1165
        %v1458 = vpop.f32.mrb[0].mxu0
        %v1459 = vadd.f32 %v1253, %v1458
        %v1460 = vpop.f32.mrb[0].mxu0
        %v1461 = vadd.f32 %v1257, %v1460
        %v1462 = vpop.f32.mrb[0].mxu0
        %v1463 = vadd.f32 %v1253, %v1462
        %v1464 = vpop.f32.mrb[0].mxu0
        %v1465 = vadd.f32 %v1257, %v1464
        %1466 = vmatprep.mubr.bf16.mxu0 %v1355
        %1467 = vmatmul.mubr.bf16.gmra.mrb[0].mxu0 %v1168
        %v1468 = vpop.f32.mrb[0].mxu0
        %v1469 = vadd.f32 %v1253, %v1468
        %v1470 = vpop.f32.mrb[0].mxu0
        %v1471 = vadd.f32 %v1257, %v1470
        %v1472 = vpop.f32.mrb[0].mxu0
        %v1473 = vadd.f32 %v1253, %v1472
        %v1474 = vpop.f32.mrb[0].mxu0
        %v1475 = vadd.f32 %v1257, %v1474
        %1476 = vmatprep.mubr.bf16.mxu0 %v1357
        %1477 = vmatmul.mubr.bf16.gmra.mrb[0].mxu0 %v1171
        %v1478 = vpop.f32.mrb[0].mxu0
        %v1479 = vadd.f32 %v1253, %v1478
        %v1480 = vpop.f32.mrb[0].mxu0
        %v1481 = vadd.f32 %v1257, %v1480
        %v1482 = vpop.f32.mrb[0].mxu0
        %v1483 = vadd.f32 %v1253, %v1482
        %v1484 = vpop.f32.mrb[0].mxu0
        %v1485 = vadd.f32 %v1257, %v1484
        %1486 = vmatprep.mubr.bf16.mxu0 %v1359
        %1487 = vmatmul.mubr.bf16.gmra.mrb[0].mxu0 %v1174
        %v1488 = vpop.f32.mrb[0].mxu0
        %v1489 = vadd.f32 %v1253, %v1488
        %v1490 = vpop.f32.mrb[0].mxu0
        %v1491 = vadd.f32 %v1257, %v1490
        %v1492 = vpop.f32.mrb[0].mxu0
        %v1493 = vadd.f32 %v1253, %v1492
        %v1494 = vpop.f32.mrb[0].mxu0
        %v1495 = vadd.f32 %v1257, %v1494
        %1496 = vmatprep.mubr.bf16.mxu0 %v1361
        %1497 = vmatmul.mubr.bf16.gmra.mrb[0].mxu0 %v1177
        %v1498 = vpop.f32.mrb[0].mxu0
        %v1499 = vadd.f32 %v1253, %v1498
        %v1500 = vpop.f32.mrb[0].mxu0
        %v1501 = vadd.f32 %v1257, %v1500
        %v1502 = vpop.f32.mrb[0].mxu0
        %v1503 = vadd.f32 %v1253, %v1502
        %v1504 = vpop.f32.mrb[0].mxu0
        %v1505 = vadd.f32 %v1257, %v1504
        %1506 = vmatprep.mubr.bf16.mxu0 %v1363
        %1507 = vmatmul.mubr.bf16.gmra.mrb[0].mxu0 %v1180
        %v1508 = vpop.f32.mrb[0].mxu0
        %v1509 = vadd.f32 %v1253, %v1508
        %v1510 = vpop.f32.mrb[0].mxu0
        %v1511 = vadd.f32 %v1257, %v1510
        %v1512 = vpop.f32.mrb[0].mxu0
        %v1513 = vadd.f32 %v1253, %v1512
        %v1514 = vpop.f32.mrb[0].mxu0
        %v1515 = vadd.f32 %v1257, %v1514
        %1516 = vmatprep.mubr.bf16.mxu0 %v1365
        %1517 = vmatmul.mubr.bf16.gmra.mrb[0].mxu0 %v1183
        %v1518 = vpop.f32.mrb[0].mxu0
        %v1519 = vadd.f32 %v1253, %v1518
        %v1520 = vpop.f32.mrb[0].mxu0
        %v1521 = vadd.f32 %v1257, %v1520
        %v1522 = vpop.f32.mrb[0].mxu0
        %v1523 = vadd.f32 %v1253, %v1522
        %v1524 = vpop.f32.mrb[0].mxu0
        %v1525 = vadd.f32 %v1257, %v1524
        %1526 = vmatprep.mubr.bf16.mxu0 %v1367
        %1527 = vmatmul.mubr.bf16.gmra.mrb[0].mxu0 %v1186
        %v1528 = vpop.f32.mrb[0].mxu0
        %v1529 = vadd.f32 %v1253, %v1528
        %v1530 = vpop.f32.mrb[0].mxu0
        %v1531 = vadd.f32 %v1257, %v1530
        %v1532 = vpop.f32.mrb[0].mxu0
        %v1533 = vadd.f32 %v1253, %v1532
        %v1534 = vpop.f32.mrb[0].mxu0
        %v1535 = vadd.f32 %v1257, %v1534
        %1536 = vmatprep.mubr.bf16.mxu0 %v1369
        %1537 = vmatmul.mubr.bf16.gmra.mrb[0].mxu0 %v1189
        %v1538 = vpop.f32.mrb[0].mxu0
        %v1539 = vadd.f32 %v1253, %v1538
        %v1540 = vpop.f32.mrb[0].mxu0
        %v1541 = vadd.f32 %v1257, %v1540
        %v1542 = vpop.f32.mrb[0].mxu0
        %v1543 = vadd.f32 %v1253, %v1542
        %v1544 = vpop.f32.mrb[0].mxu0
        %v1545 = vadd.f32 %v1257, %v1544
        %1546 = vmatprep.mubr.bf16.mxu0 %v1371
        %1547 = vmatmul.mubr.bf16.gmra.mrb[0].mxu0 %v1192
        %v1548 = vpop.f32.mrb[0].mxu0
        %v1549 = vadd.f32 %v1253, %v1548
        %v1550 = vpop.f32.mrb[0].mxu0
        %v1551 = vadd.f32 %v1257, %v1550
        %v1552 = vpop.f32.mrb[0].mxu0
        %v1553 = vadd.f32 %v1253, %v1552
        %v1554 = vpop.f32.mrb[0].mxu0
        %v1555 = vadd.f32 %v1257, %v1554
        %1556 = vmatprep.mubr.bf16.mxu0 %v1373
        %1557 = vmatmul.mubr.bf16.gmra.mrb[0].mxu0 %v1195
        %v1558 = vpop.f32.mrb[0].mxu0
        %v1559 = vadd.f32 %v1253, %v1558
        %v1560 = vpop.f32.mrb[0].mxu0
        %v1561 = vadd.f32 %v1257, %v1560
        %v1562 = vpop.f32.mrb[0].mxu0
        %v1563 = vadd.f32 %v1253, %v1562
        %v1564 = vpop.f32.mrb[0].mxu0
        %v1565 = vadd.f32 %v1257, %v1564
        %1566 = vmatprep.mubr.bf16.mxu0 %v1375
        %1567 = vmatmul.mubr.bf16.gmra.mrb[0].mxu0 %v1198
        %v1568 = vpop.f32.mrb[0].mxu0
        %v1569 = vadd.f32 %v1253, %v1568
        %v1570 = vpop.f32.mrb[0].mxu0
        %v1571 = vadd.f32 %v1257, %v1570
        %v1572 = vpop.f32.mrb[0].mxu0
        %v1573 = vadd.f32 %v1253, %v1572
        %v1574 = vpop.f32.mrb[0].mxu0
        %v1575 = vadd.f32 %v1257, %v1574
        %1576 = vmatprep.mubr.bf16.mxu0 %v1377
        %1577 = vmatmul.mubr.bf16.gmra.mrb[0].mxu0 %v1201
        %v1578 = vpop.f32.mrb[0].mxu0
        %v1579 = vadd.f32 %v1253, %v1578
        %v1580 = vpop.f32.mrb[0].mxu0
        %v1581 = vadd.f32 %v1257, %v1580
        %v1582 = vpop.f32.mrb[0].mxu0
        %v1583 = vadd.f32 %v1253, %v1582
        %v1584 = vpop.f32.mrb[0].mxu0
        %v1585 = vadd.f32 %v1257, %v1584
        %1586 = vmatprep.mubr.bf16.mxu0 %v1379
        %1587 = vmatmul.mubr.bf16.gmra.mrb[0].mxu0 %v1204
        %v1588 = vpop.f32.mrb[0].mxu0
        %v1589 = vadd.f32 %v1253, %v1588
        %v1590 = vpop.f32.mrb[0].mxu0
        %v1591 = vadd.f32 %v1257, %v1590
        %v1592 = vpop.f32.mrb[0].mxu0
        %v1593 = vadd.f32 %v1253, %v1592
        %v1594 = vpop.f32.mrb[0].mxu0
        %v1595 = vadd.f32 %v1257, %v1594
        %1596 = vmatprep.mubr.bf16.mxu0 %v1381
        %1597 = vmatmul.mubr.bf16.gmra.mrb[0].mxu0 %v1207
        %v1598 = vpop.f32.mrb[0].mxu0
        %v1599 = vadd.f32 %v1253, %v1598
        %v1600 = vpop.f32.mrb[0].mxu0
        %v1601 = vadd.f32 %v1257, %v1600
        %v1602 = vpop.f32.mrb[0].mxu0
        %v1603 = vadd.f32 %v1253, %v1602
        %v1604 = vpop.f32.mrb[0].mxu0
        %v1605 = vadd.f32 %v1257, %v1604
        %1606 = vmatprep.mubr.bf16.mxu0 %v1383
        %1607 = vmatmul.mubr.bf16.gmra.mrb[0].mxu0 %v1210
        %v1608 = vpop.f32.mrb[0].mxu0
        %v1609 = vadd.f32 %v1253, %v1608
        %v1610 = vpop.f32.mrb[0].mxu0
        %v1611 = vadd.f32 %v1257, %v1610
        %v1612 = vpop.f32.mrb[0].mxu0
        %v1613 = vadd.f32 %v1253, %v1612
        %v1614 = vpop.f32.mrb[0].mxu0
        %v1615 = vadd.f32 %v1257, %v1614
        %1616 = vmatprep.mubr.bf16.mxu0 %v1385
        %1617 = vmatmul.mubr.bf16.gmra.mrb[0].mxu0 %v1213
        %v1618 = vpop.f32.mrb[0].mxu0
        %v1619 = vadd.f32 %v1253, %v1618
        %v1620 = vpop.f32.mrb[0].mxu0
        %v1621 = vadd.f32 %v1257, %v1620
        %v1622 = vpop.f32.mrb[0].mxu0
        %v1623 = vadd.f32 %v1253, %v1622
        %v1624 = vpop.f32.mrb[0].mxu0
        %v1625 = vadd.f32 %v1257, %v1624
        %1626 = vmatprep.mubr.bf16.mxu0 %v1387
        %1627 = vmatmul.mubr.bf16.gmra.mrb[0].mxu0 %v1216
        %v1628 = vpop.f32.mrb[0].mxu0
        %v1629 = vadd.f32 %v1253, %v1628
        %v1630 = vpop.f32.mrb[0].mxu0
        %v1631 = vadd.f32 %v1257, %v1630
        %v1632 = vpop.f32.mrb[0].mxu0
        %v1633 = vadd.f32 %v1253, %v1632
        %v1634 = vpop.f32.mrb[0].mxu0
        %v1635 = vadd.f32 %v1257, %v1634
        %1636 = vmatprep.mubr.bf16.mxu0 %v1389
        %1637 = vmatmul.mubr.bf16.gmra.mrb[0].mxu0 %v1219
        %v1638 = vpop.f32.mrb[0].mxu0
        %v1639 = vadd.f32 %v1253, %v1638
        %v1640 = vpop.f32.mrb[0].mxu0
        %v1641 = vadd.f32 %v1257, %v1640
        %v1642 = vpop.f32.mrb[0].mxu0
        %v1643 = vadd.f32 %v1253, %v1642
        %v1644 = vpop.f32.mrb[0].mxu0
        %v1645 = vadd.f32 %v1257, %v1644
        %1646 = vmatprep.mubr.bf16.mxu0 %v1391
        %1647 = vmatmul.mubr.bf16.gmra.mrb[0].mxu0 %v1222
        %v1648 = vpop.f32.mrb[0].mxu0
        %v1649 = vadd.f32 %v1253, %v1648
        %v1650 = vpop.f32.mrb[0].mxu0
        %v1651 = vadd.f32 %v1257, %v1650
        %v1652 = vpop.f32.mrb[0].mxu0
        %v1653 = vadd.f32 %v1253, %v1652
        %v1654 = vpop.f32.mrb[0].mxu0
        %v1655 = vadd.f32 %v1257, %v1654
        %1656 = vmatprep.mubr.bf16.mxu0 %v1393
        %1657 = vmatmul.mubr.bf16.gmra.mrb[0].mxu0 %v1225
        %v1658 = vpop.f32.mrb[0].mxu0
        %v1659 = vadd.f32 %v1253, %v1658
        %v1660 = vpop.f32.mrb[0].mxu0
        %v1661 = vadd.f32 %v1257, %v1660
        %v1662 = vpop.f32.mrb[0].mxu0
        %v1663 = vadd.f32 %v1253, %v1662
        %v1664 = vpop.f32.mrb[0].mxu0
        %v1665 = vadd.f32 %v1257, %v1664
        %1666 = vmatprep.mubr.bf16.mxu0 %v1395
        %1667 = vmatmul.mubr.bf16.gmra.mrb[0].mxu0 %v1228
        %v1668 = vpop.f32.mrb[0].mxu0
        %v1669 = vadd.f32 %v1253, %v1668
        %v1670 = vpop.f32.mrb[0].mxu0
        %v1671 = vadd.f32 %v1257, %v1670
        %v1672 = vpop.f32.mrb[0].mxu0
        %v1673 = vadd.f32 %v1253, %v1672
        %v1674 = vpop.f32.mrb[0].mxu0
        %v1675 = vadd.f32 %v1257, %v1674
        %1676 = vdwg.mxu0
        %v1677 = vmax.f32 %v1439, 0.0
        %v1678 = vmax.f32 %v1441, 0.0
        %v1679 = vmax.f32 %v1443, 0.0
        %v1680 = vmax.f32 %v1445, 0.0
        %v1681 = vmax.f32 %v1449, 0.0
        %v1682 = vmax.f32 %v1451, 0.0
        %v1683 = vmax.f32 %v1453, 0.0
        %v1684 = vmax.f32 %v1455, 0.0
        %v1685 = vmax.f32 %v1459, 0.0
        %v1686 = vmax.f32 %v1461, 0.0
        %v1687 = vmax.f32 %v1463, 0.0
        %v1688 = vmax.f32 %v1465, 0.0
        %v1689 = vmax.f32 %v1469, 0.0
        %v1690 = vmax.f32 %v1471, 0.0
        %v1691 = vmax.f32 %v1473, 0.0
        %v1692 = vmax.f32 %v1475, 0.0
        %v1693 = vmax.f32 %v1479, 0.0
        %v1694 = vmax.f32 %v1481, 0.0
        %v1695 = vmax.f32 %v1483, 0.0
        %v1696 = vmax.f32 %v1485, 0.0
        %v1697 = vmax.f32 %v1489, 0.0
        %v1698 = vmax.f32 %v1491, 0.0
        %v1699 = vmax.f32 %v1493, 0.0
        %v1700 = vmax.f32 %v1495, 0.0
        %v1701 = vmax.f32 %v1499, 0.0
        %v1702 = vmax.f32 %v1501, 0.0
        %v1703 = vmax.f32 %v1503, 0.0
        %v1704 = vmax.f32 %v1505, 0.0
        %v1705 = vmax.f32 %v1509, 0.0
        %v1706 = vmax.f32 %v1511, 0.0
        %v1707 = vmax.f32 %v1513, 0.0
        %v1708 = vmax.f32 %v1515, 0.0
        %v1709 = vmax.f32 %v1519, 0.0
        %v1710 = vmax.f32 %v1521, 0.0
        %v1711 = vmax.f32 %v1523, 0.0
        %v1712 = vmax.f32 %v1525, 0.0
        %v1713 = vmax.f32 %v1529, 0.0
        %v1714 = vmax.f32 %v1531, 0.0
        %v1715 = vmax.f32 %v1533, 0.0
        %v1716 = vmax.f32 %v1535, 0.0
        %v1717 = vmax.f32 %v1539, 0.0
        %v1718 = vmax.f32 %v1541, 0.0
        %v1719 = vmax.f32 %v1543, 0.0
        %v1720 = vmax.f32 %v1545, 0.0
        %v1721 = vmax.f32 %v1549, 0.0
        %v1722 = vmax.f32 %v1551, 0.0
        %v1723 = vmax.f32 %v1553, 0.0
        %v1724 = vmax.f32 %v1555, 0.0
        %v1725 = vmax.f32 %v1559, 0.0
        %v1726 = vmax.f32 %v1561, 0.0
        %v1727 = vmax.f32 %v1563, 0.0
        %v1728 = vmax.f32 %v1565, 0.0
        %v1729 = vmax.f32 %v1569, 0.0
        %v1730 = vmax.f32 %v1571, 0.0
        %v1731 = vmax.f32 %v1573, 0.0
        %v1732 = vmax.f32 %v1575, 0.0
        %v1733 = vmax.f32 %v1579, 0.0
        %v1734 = vmax.f32 %v1581, 0.0
        %v1735 = vmax.f32 %v1583, 0.0
        %v1736 = vmax.f32 %v1585, 0.0
        %v1737 = vmax.f32 %v1589, 0.0
        %v1738 = vmax.f32 %v1591, 0.0
        %v1739 = vmax.f32 %v1593, 0.0
        %v1740 = vmax.f32 %v1595, 0.0
        %v1741 = vmax.f32 %v1599, 0.0
        %v1742 = vmax.f32 %v1601, 0.0
        %v1743 = vmax.f32 %v1603, 0.0
        %v1744 = vmax.f32 %v1605, 0.0
        %v1745 = vmax.f32 %v1609, 0.0
        %v1746 = vmax.f32 %v1611, 0.0
        %v1747 = vmax.f32 %v1613, 0.0
        %v1748 = vmax.f32 %v1615, 0.0
        %v1749 = vmax.f32 %v1619, 0.0
        %v1750 = vmax.f32 %v1621, 0.0
        %v1751 = vmax.f32 %v1623, 0.0
        %v1752 = vmax.f32 %v1625, 0.0
        %v1753 = vmax.f32 %v1629, 0.0
        %v1754 = vmax.f32 %v1631, 0.0
        %v1755 = vmax.f32 %v1633, 0.0
        %v1756 = vmax.f32 %v1635, 0.0
        %v1757 = vmax.f32 %v1639, 0.0
        %v1758 = vmax.f32 %v1641, 0.0
        %v1759 = vmax.f32 %v1643, 0.0
        %v1760 = vmax.f32 %v1645, 0.0
        %v1761 = vmax.f32 %v1649, 0.0
        %v1762 = vmax.f32 %v1651, 0.0
        %v1763 = vmax.f32 %v1653, 0.0
        %v1764 = vmax.f32 %v1655, 0.0
        %v1765 = vmax.f32 %v1659, 0.0
        %v1766 = vmax.f32 %v1661, 0.0
        %v1767 = vmax.f32 %v1663, 0.0
        %v1768 = vmax.f32 %v1665, 0.0
        %v1769 = vmax.f32 %v1669, 0.0
        %v1770 = vmax.f32 %v1671, 0.0
        %v1771 = vmax.f32 %v1673, 0.0
        %v1772 = vmax.f32 %v1675, 0.0
        %s1773 = scalar_lea.vmem %s2, 1
        %v1774 = vld [vmem:[%s1773] ss:$4 sm:$0x3]
        %v1776 = vlaneseq
        %v1777 = vshrl.u32 %v1776, 7
        %v1778 = vsub.s32 0, %v1777
        %v1779 = vrot.slane %v1774, %v1778
        %v1780 = vlaneseq
        %v1781 = vshrl.u32 %v1780, 7
        %v1782 = vsub.s32 1, %v1781
        %v1783 = vrot.slane %v1774, %v1782
        %v1786 = vmul.f32 %v1677, %v1779
        %v1787 = vmul.f32 %v1678, %v1783
        %v1788 = vmul.f32 %v1679, %v1779
        %v1789 = vmul.f32 %v1680, %v1783
        %v1790 = vmul.f32 %v1681, %v1779
        %v1791 = vmul.f32 %v1682, %v1783
        %v1792 = vmul.f32 %v1683, %v1779
        %v1793 = vmul.f32 %v1684, %v1783
        %v1794 = vmul.f32 %v1685, %v1779
        %v1795 = vmul.f32 %v1686, %v1783
        %v1796 = vmul.f32 %v1687, %v1779
        %v1797 = vmul.f32 %v1688, %v1783
        %v1798 = vmul.f32 %v1689, %v1779
        %v1799 = vmul.f32 %v1690, %v1783
        %v1800 = vmul.f32 %v1691, %v1779
        %v1801 = vmul.f32 %v1692, %v1783
        %v1802 = vmul.f32 %v1693, %v1779
        %v1803 = vmul.f32 %v1694, %v1783
        %v1804 = vmul.f32 %v1695, %v1779
        %v1805 = vmul.f32 %v1696, %v1783
        %v1806 = vmul.f32 %v1697, %v1779
        %v1807 = vmul.f32 %v1698, %v1783
        %v1808 = vmul.f32 %v1699, %v1779
        %v1809 = vmul.f32 %v1700, %v1783
        %v1810 = vmul.f32 %v1701, %v1779
        %v1811 = vmul.f32 %v1702, %v1783
        %v1812 = vmul.f32 %v1703, %v1779
        %v1813 = vmul.f32 %v1704, %v1783
        %v1814 = vmul.f32 %v1705, %v1779
        %v1815 = vmul.f32 %v1706, %v1783
        %v1816 = vmul.f32 %v1707, %v1779
        %v1817 = vmul.f32 %v1708, %v1783
        %v1818 = vmul.f32 %v1709, %v1779
        %v1819 = vmul.f32 %v1710, %v1783
        %v1820 = vmul.f32 %v1711, %v1779
        %v1821 = vmul.f32 %v1712, %v1783
        %v1822 = vmul.f32 %v1713, %v1779
        %v1823 = vmul.f32 %v1714, %v1783
        %v1824 = vmul.f32 %v1715, %v1779
        %v1825 = vmul.f32 %v1716, %v1783
        %v1826 = vmul.f32 %v1717, %v1779
        %v1827 = vmul.f32 %v1718, %v1783
        %v1828 = vmul.f32 %v1719, %v1779
        %v1829 = vmul.f32 %v1720, %v1783
        %v1830 = vmul.f32 %v1721, %v1779
        %v1831 = vmul.f32 %v1722, %v1783
        %v1832 = vmul.f32 %v1723, %v1779
        %v1833 = vmul.f32 %v1724, %v1783
        %v1834 = vmul.f32 %v1725, %v1779
        %v1835 = vmul.f32 %v1726, %v1783
        %v1836 = vmul.f32 %v1727, %v1779
        %v1837 = vmul.f32 %v1728, %v1783
        %v1838 = vmul.f32 %v1729, %v1779
        %v1839 = vmul.f32 %v1730, %v1783
        %v1840 = vmul.f32 %v1731, %v1779
        %v1841 = vmul.f32 %v1732, %v1783
        %v1842 = vmul.f32 %v1733, %v1779
        %v1843 = vmul.f32 %v1734, %v1783
        %v1844 = vmul.f32 %v1735, %v1779
        %v1845 = vmul.f32 %v1736, %v1783
        %v1846 = vmul.f32 %v1737, %v1779
        %v1847 = vmul.f32 %v1738, %v1783
        %v1848 = vmul.f32 %v1739, %v1779
        %v1849 = vmul.f32 %v1740, %v1783
        %v1850 = vmul.f32 %v1741, %v1779
        %v1851 = vmul.f32 %v1742, %v1783
        %v1852 = vmul.f32 %v1743, %v1779
        %v1853 = vmul.f32 %v1744, %v1783
        %v1854 = vmul.f32 %v1745, %v1779
        %v1855 = vmul.f32 %v1746, %v1783
        %v1856 = vmul.f32 %v1747, %v1779
        %v1857 = vmul.f32 %v1748, %v1783
        %v1858 = vmul.f32 %v1749, %v1779
        %v1859 = vmul.f32 %v1750, %v1783
        %v1860 = vmul.f32 %v1751, %v1779
        %v1861 = vmul.f32 %v1752, %v1783
        %v1862 = vmul.f32 %v1753, %v1779
        %v1863 = vmul.f32 %v1754, %v1783
        %v1864 = vmul.f32 %v1755, %v1779
        %v1865 = vmul.f32 %v1756, %v1783
        %v1866 = vmul.f32 %v1757, %v1779
        %v1867 = vmul.f32 %v1758, %v1783
        %v1868 = vmul.f32 %v1759, %v1779
        %v1869 = vmul.f32 %v1760, %v1783
        %v1870 = vmul.f32 %v1761, %v1779
        %v1871 = vmul.f32 %v1762, %v1783
        %v1872 = vmul.f32 %v1763, %v1779
        %v1873 = vmul.f32 %v1764, %v1783
        %v1874 = vmul.f32 %v1765, %v1779
        %v1875 = vmul.f32 %v1766, %v1783
        %v1876 = vmul.f32 %v1767, %v1779
        %v1877 = vmul.f32 %v1768, %v1783
        %v1878 = vmul.f32 %v1769, %v1779
        %v1879 = vmul.f32 %v1770, %v1783
        %v1880 = vmul.f32 %v1771, %v1779
        %v1881 = vmul.f32 %v1772, %v1783
        %s1882 = scalar_lea.vmem %s2, 2
        %v1883 = vld [vmem:[%s1882] ss:$4 sm:$0x3]
        %v1885 = vlaneseq
        %v1886 = vshrl.u32 %v1885, 7
        %v1887 = vsub.s32 0, %v1886
        %v1888 = vrot.slane %v1883, %v1887
        %v1889 = vlaneseq
        %v1890 = vshrl.u32 %v1889, 7
        %v1891 = vsub.s32 1, %v1890
        %v1892 = vrot.slane %v1883, %v1891
        %v1895 = vadd.f32 %v1786, %v1888
        %v1896 = vadd.f32 %v1787, %v1892
        %v1897 = vadd.f32 %v1788, %v1888
        %v1898 = vadd.f32 %v1789, %v1892
        %v1899 = vadd.f32 %v1790, %v1888
        %v1900 = vadd.f32 %v1791, %v1892
        %v1901 = vadd.f32 %v1792, %v1888
        %v1902 = vadd.f32 %v1793, %v1892
        %v1903 = vadd.f32 %v1794, %v1888
        %v1904 = vadd.f32 %v1795, %v1892
        %v1905 = vadd.f32 %v1796, %v1888
        %v1906 = vadd.f32 %v1797, %v1892
        %v1907 = vadd.f32 %v1798, %v1888
        %v1908 = vadd.f32 %v1799, %v1892
        %v1909 = vadd.f32 %v1800, %v1888
        %v1910 = vadd.f32 %v1801, %v1892
        %v1911 = vadd.f32 %v1802, %v1888
        %v1912 = vadd.f32 %v1803, %v1892
        %v1913 = vadd.f32 %v1804, %v1888
        %v1914 = vadd.f32 %v1805, %v1892
        %v1915 = vadd.f32 %v1806, %v1888
        %v1916 = vadd.f32 %v1807, %v1892
        %v1917 = vadd.f32 %v1808, %v1888
        %v1918 = vadd.f32 %v1809, %v1892
        %v1919 = vadd.f32 %v1810, %v1888
        %v1920 = vadd.f32 %v1811, %v1892
        %v1921 = vadd.f32 %v1812, %v1888
        %v1922 = vadd.f32 %v1813, %v1892
        %v1923 = vadd.f32 %v1814, %v1888
        %v1924 = vadd.f32 %v1815, %v1892
        %v1925 = vadd.f32 %v1816, %v1888
        %v1926 = vadd.f32 %v1817, %v1892
        %v1927 = vadd.f32 %v1818, %v1888
        %v1928 = vadd.f32 %v1819, %v1892
        %v1929 = vadd.f32 %v1820, %v1888
        %v1930 = vadd.f32 %v1821, %v1892
        %v1931 = vadd.f32 %v1822, %v1888
        %v1932 = vadd.f32 %v1823, %v1892
        %v1933 = vadd.f32 %v1824, %v1888
        %v1934 = vadd.f32 %v1825, %v1892
        %v1935 = vadd.f32 %v1826, %v1888
        %v1936 = vadd.f32 %v1827, %v1892
        %v1937 = vadd.f32 %v1828, %v1888
        %v1938 = vadd.f32 %v1829, %v1892
        %v1939 = vadd.f32 %v1830, %v1888
        %v1940 = vadd.f32 %v1831, %v1892
        %v1941 = vadd.f32 %v1832, %v1888
        %v1942 = vadd.f32 %v1833, %v1892
        %v1943 = vadd.f32 %v1834, %v1888
        %v1944 = vadd.f32 %v1835, %v1892
        %v1945 = vadd.f32 %v1836, %v1888
        %v1946 = vadd.f32 %v1837, %v1892
        %v1947 = vadd.f32 %v1838, %v1888
        %v1948 = vadd.f32 %v1839, %v1892
        %v1949 = vadd.f32 %v1840, %v1888
        %v1950 = vadd.f32 %v1841, %v1892
        %v1951 = vadd.f32 %v1842, %v1888
        %v1952 = vadd.f32 %v1843, %v1892
        %v1953 = vadd.f32 %v1844, %v1888
        %v1954 = vadd.f32 %v1845, %v1892
        %v1955 = vadd.f32 %v1846, %v1888
        %v1956 = vadd.f32 %v1847, %v1892
        %v1957 = vadd.f32 %v1848, %v1888
        %v1958 = vadd.f32 %v1849, %v1892
        %v1959 = vadd.f32 %v1850, %v1888
        %v1960 = vadd.f32 %v1851, %v1892
        %v1961 = vadd.f32 %v1852, %v1888
        %v1962 = vadd.f32 %v1853, %v1892
        %v1963 = vadd.f32 %v1854, %v1888
        %v1964 = vadd.f32 %v1855, %v1892
        %v1965 = vadd.f32 %v1856, %v1888
        %v1966 = vadd.f32 %v1857, %v1892
        %v1967 = vadd.f32 %v1858, %v1888
        %v1968 = vadd.f32 %v1859, %v1892
        %v1969 = vadd.f32 %v1860, %v1888
        %v1970 = vadd.f32 %v1861, %v1892
        %v1971 = vadd.f32 %v1862, %v1888
        %v1972 = vadd.f32 %v1863, %v1892
        %v1973 = vadd.f32 %v1864, %v1888
        %v1974 = vadd.f32 %v1865, %v1892
        %v1975 = vadd.f32 %v1866, %v1888
        %v1976 = vadd.f32 %v1867, %v1892
        %v1977 = vadd.f32 %v1868, %v1888
        %v1978 = vadd.f32 %v1869, %v1892
        %v1979 = vadd.f32 %v1870, %v1888
        %v1980 = vadd.f32 %v1871, %v1892
        %v1981 = vadd.f32 %v1872, %v1888
        %v1982 = vadd.f32 %v1873, %v1892
        %v1983 = vadd.f32 %v1874, %v1888
        %v1984 = vadd.f32 %v1875, %v1892
        %v1985 = vadd.f32 %v1876, %v1888
        %v1986 = vadd.f32 %v1877, %v1892
        %v1987 = vadd.f32 %v1878, %v1888
        %v1988 = vadd.f32 %v1879, %v1892
        %v1989 = vadd.f32 %v1880, %v1888
        %v1990 = vadd.f32 %v1881, %v1892
        %2087 = vrot.lane.b32.xlu0 %v1895, 127
        %v2088 = vpop.permute.xlu0 %2087
        %2089 = vrot.lane.b32.xlu0 %v1896, 127
        %v2090 = vpop.permute.xlu0 %2089
        %2091 = vrot.lane.b32.xlu0 %v1897, 127
        %v2092 = vpop.permute.xlu0 %2091
        %2093 = vrot.lane.b32.xlu0 %v1898, 127
        %v2094 = vpop.permute.xlu0 %2093
        %2095 = vrot.lane.b32.xlu0 %v1899, 127
        %v2096 = vpop.permute.xlu0 %2095
        %2097 = vrot.lane.b32.xlu0 %v1900, 127
        %v2098 = vpop.permute.xlu0 %2097
        %2099 = vrot.lane.b32.xlu0 %v1901, 127
        %v2100 = vpop.permute.xlu0 %2099
        %2101 = vrot.lane.b32.xlu0 %v1902, 127
        %v2102 = vpop.permute.xlu0 %2101
        %2103 = vrot.lane.b32.xlu0 %v1903, 127
        %v2104 = vpop.permute.xlu0 %2103
        %2105 = vrot.lane.b32.xlu0 %v1904, 127
        %v2106 = vpop.permute.xlu0 %2105
        %2107 = vrot.lane.b32.xlu0 %v1905, 127
        %v2108 = vpop.permute.xlu0 %2107
        %2109 = vrot.lane.b32.xlu0 %v1906, 127
        %v2110 = vpop.permute.xlu0 %2109
        %2111 = vrot.lane.b32.xlu0 %v1907, 127
        %v2112 = vpop.permute.xlu0 %2111
        %2113 = vrot.lane.b32.xlu0 %v1908, 127
        %v2114 = vpop.permute.xlu0 %2113
        %2115 = vrot.lane.b32.xlu0 %v1909, 127
        %v2116 = vpop.permute.xlu0 %2115
        %2117 = vrot.lane.b32.xlu0 %v1910, 127
        %v2118 = vpop.permute.xlu0 %2117
        %2119 = vrot.lane.b32.xlu0 %v1911, 127
        %v2120 = vpop.permute.xlu0 %2119
        %2121 = vrot.lane.b32.xlu0 %v1912, 127
        %v2122 = vpop.permute.xlu0 %2121
        %2123 = vrot.lane.b32.xlu0 %v1913, 127
        %v2124 = vpop.permute.xlu0 %2123
        %2125 = vrot.lane.b32.xlu0 %v1914, 127
        %v2126 = vpop.permute.xlu0 %2125
        %2127 = vrot.lane.b32.xlu0 %v1915, 127
        %v2128 = vpop.permute.xlu0 %2127
        %2129 = vrot.lane.b32.xlu0 %v1916, 127
        %v2130 = vpop.permute.xlu0 %2129
        %2131 = vrot.lane.b32.xlu0 %v1917, 127
        %v2132 = vpop.permute.xlu0 %2131
        %2133 = vrot.lane.b32.xlu0 %v1918, 127
        %v2134 = vpop.permute.xlu0 %2133
        %2135 = vrot.lane.b32.xlu0 %v1919, 127
        %v2136 = vpop.permute.xlu0 %2135
        %2137 = vrot.lane.b32.xlu0 %v1920, 127
        %v2138 = vpop.permute.xlu0 %2137
        %2139 = vrot.lane.b32.xlu0 %v1921, 127
        %v2140 = vpop.permute.xlu0 %2139
        %2141 = vrot.lane.b32.xlu0 %v1922, 127
        %v2142 = vpop.permute.xlu0 %2141
        %2143 = vrot.lane.b32.xlu0 %v1923, 127
        %v2144 = vpop.permute.xlu0 %2143
        %2145 = vrot.lane.b32.xlu0 %v1924, 127
        %v2146 = vpop.permute.xlu0 %2145
        %2147 = vrot.lane.b32.xlu0 %v1925, 127
        %v2148 = vpop.permute.xlu0 %2147
        %2149 = vrot.lane.b32.xlu0 %v1926, 127
        %v2150 = vpop.permute.xlu0 %2149
        %2151 = vrot.lane.b32.xlu0 %v1927, 127
        %v2152 = vpop.permute.xlu0 %2151
        %2153 = vrot.lane.b32.xlu0 %v1928, 127
        %v2154 = vpop.permute.xlu0 %2153
        %2155 = vrot.lane.b32.xlu0 %v1929, 127
        %v2156 = vpop.permute.xlu0 %2155
        %2157 = vrot.lane.b32.xlu0 %v1930, 127
        %v2158 = vpop.permute.xlu0 %2157
        %2159 = vrot.lane.b32.xlu0 %v1931, 127
        %v2160 = vpop.permute.xlu0 %2159
        %2161 = vrot.lane.b32.xlu0 %v1932, 127
        %v2162 = vpop.permute.xlu0 %2161
        %2163 = vrot.lane.b32.xlu0 %v1933, 127
        %v2164 = vpop.permute.xlu0 %2163
        %2165 = vrot.lane.b32.xlu0 %v1934, 127
        %v2166 = vpop.permute.xlu0 %2165
        %2167 = vrot.lane.b32.xlu0 %v1935, 127
        %v2168 = vpop.permute.xlu0 %2167
        %2169 = vrot.lane.b32.xlu0 %v1936, 127
        %v2170 = vpop.permute.xlu0 %2169
        %2171 = vrot.lane.b32.xlu0 %v1937, 127
        %v2172 = vpop.permute.xlu0 %2171
        %2173 = vrot.lane.b32.xlu0 %v1938, 127
        %v2174 = vpop.permute.xlu0 %2173
        %2175 = vrot.lane.b32.xlu0 %v1939, 127
        %v2176 = vpop.permute.xlu0 %2175
        %2177 = vrot.lane.b32.xlu0 %v1940, 127
        %v2178 = vpop.permute.xlu0 %2177
        %2179 = vrot.lane.b32.xlu0 %v1941, 127
        %v2180 = vpop.permute.xlu0 %2179
        %2181 = vrot.lane.b32.xlu0 %v1942, 127
        %v2182 = vpop.permute.xlu0 %2181
        %2183 = vrot.lane.b32.xlu0 %v1943, 127
        %v2184 = vpop.permute.xlu0 %2183
        %2185 = vrot.lane.b32.xlu0 %v1944, 127
        %v2186 = vpop.permute.xlu0 %2185
        %2187 = vrot.lane.b32.xlu0 %v1945, 127
        %v2188 = vpop.permute.xlu0 %2187
        %2189 = vrot.lane.b32.xlu0 %v1946, 127
        %v2190 = vpop.permute.xlu0 %2189
        %2191 = vrot.lane.b32.xlu0 %v1947, 127
        %v2192 = vpop.permute.xlu0 %2191
        %2193 = vrot.lane.b32.xlu0 %v1948, 127
        %v2194 = vpop.permute.xlu0 %2193
        %2195 = vrot.lane.b32.xlu0 %v1949, 127
        %v2196 = vpop.permute.xlu0 %2195
        %2197 = vrot.lane.b32.xlu0 %v1950, 127
        %v2198 = vpop.permute.xlu0 %2197
        %2199 = vrot.lane.b32.xlu0 %v1951, 127
        %v2200 = vpop.permute.xlu0 %2199
        %2201 = vrot.lane.b32.xlu0 %v1952, 127
        %v2202 = vpop.permute.xlu0 %2201
        %2203 = vrot.lane.b32.xlu0 %v1953, 127
        %v2204 = vpop.permute.xlu0 %2203
        %2205 = vrot.lane.b32.xlu0 %v1954, 127
        %v2206 = vpop.permute.xlu0 %2205
        %2207 = vrot.lane.b32.xlu0 %v1955, 127
        %v2208 = vpop.permute.xlu0 %2207
        %2209 = vrot.lane.b32.xlu0 %v1956, 127
        %v2210 = vpop.permute.xlu0 %2209
        %2211 = vrot.lane.b32.xlu0 %v1957, 127
        %v2212 = vpop.permute.xlu0 %2211
        %2213 = vrot.lane.b32.xlu0 %v1958, 127
        %v2214 = vpop.permute.xlu0 %2213
        %2215 = vrot.lane.b32.xlu0 %v1959, 127
        %v2216 = vpop.permute.xlu0 %2215
        %2217 = vrot.lane.b32.xlu0 %v1960, 127
        %v2218 = vpop.permute.xlu0 %2217
        %2219 = vrot.lane.b32.xlu0 %v1961, 127
        %v2220 = vpop.permute.xlu0 %2219
        %2221 = vrot.lane.b32.xlu0 %v1962, 127
        %v2222 = vpop.permute.xlu0 %2221
        %2223 = vrot.lane.b32.xlu0 %v1963, 127
        %v2224 = vpop.permute.xlu0 %2223
        %2225 = vrot.lane.b32.xlu0 %v1964, 127
        %v2226 = vpop.permute.xlu0 %2225
        %2227 = vrot.lane.b32.xlu0 %v1965, 127
        %v2228 = vpop.permute.xlu0 %2227
        %2229 = vrot.lane.b32.xlu0 %v1966, 127
        %v2230 = vpop.permute.xlu0 %2229
        %2231 = vrot.lane.b32.xlu0 %v1967, 127
        %v2232 = vpop.permute.xlu0 %2231
        %2233 = vrot.lane.b32.xlu0 %v1968, 127
        %v2234 = vpop.permute.xlu0 %2233
        %2235 = vrot.lane.b32.xlu0 %v1969, 127
        %v2236 = vpop.permute.xlu0 %2235
        %2237 = vrot.lane.b32.xlu0 %v1970, 127
        %v2238 = vpop.permute.xlu0 %2237
        %2239 = vrot.lane.b32.xlu0 %v1971, 127
        %v2240 = vpop.permute.xlu0 %2239
        %2241 = vrot.lane.b32.xlu0 %v1972, 127
        %v2242 = vpop.permute.xlu0 %2241
        %2243 = vrot.lane.b32.xlu0 %v1973, 127
        %v2244 = vpop.permute.xlu0 %2243
        %2245 = vrot.lane.b32.xlu0 %v1974, 127
        %v2246 = vpop.permute.xlu0 %2245
        %2247 = vrot.lane.b32.xlu0 %v1975, 127
        %v2248 = vpop.permute.xlu0 %2247
        %2249 = vrot.lane.b32.xlu0 %v1976, 127
        %v2250 = vpop.permute.xlu0 %2249
        %2251 = vrot.lane.b32.xlu0 %v1977, 127
        %v2252 = vpop.permute.xlu0 %2251
        %2253 = vrot.lane.b32.xlu0 %v1978, 127
        %v2254 = vpop.permute.xlu0 %2253
        %2255 = vrot.lane.b32.xlu0 %v1979, 127
        %v2256 = vpop.permute.xlu0 %2255
        %2257 = vrot.lane.b32.xlu0 %v1980, 127
        %v2258 = vpop.permute.xlu0 %2257
        %2259 = vrot.lane.b32.xlu0 %v1981, 127
        %v2260 = vpop.permute.xlu0 %2259
        %2261 = vrot.lane.b32.xlu0 %v1982, 127
        %v2262 = vpop.permute.xlu0 %2261
        %2263 = vrot.lane.b32.xlu0 %v1983, 127
        %v2264 = vpop.permute.xlu0 %2263
        %2265 = vrot.lane.b32.xlu0 %v1984, 127
        %v2266 = vpop.permute.xlu0 %2265
        %2267 = vrot.lane.b32.xlu0 %v1985, 127
        %v2268 = vpop.permute.xlu0 %2267
        %2269 = vrot.lane.b32.xlu0 %v1986, 127
        %v2270 = vpop.permute.xlu0 %2269
        %2271 = vrot.lane.b32.xlu0 %v1987, 127
        %v2272 = vpop.permute.xlu0 %2271
        %2273 = vrot.lane.b32.xlu0 %v1988, 127
        %v2274 = vpop.permute.xlu0 %2273
        %2275 = vrot.lane.b32.xlu0 %v1989, 127
        %v2276 = vpop.permute.xlu0 %2275
        %2277 = vrot.lane.b32.xlu0 %v1990, 127
        %v2278 = vpop.permute.xlu0 %2277
        %vm2279 = vcmask 1039360
        %v2280 = vsel %vm2279, %v2088, %v2090
        %v2281 = vsel %vm2279, %v2092, %v2094
        %v2282 = vsel %vm2279, %v2096, %v2098
        %v2283 = vsel %vm2279, %v2100, %v2102
        %v2284 = vsel %vm2279, %v2104, %v2106
        %v2285 = vsel %vm2279, %v2108, %v2110
        %v2286 = vsel %vm2279, %v2112, %v2114
        %v2287 = vsel %vm2279, %v2116, %v2118
        %v2288 = vsel %vm2279, %v2120, %v2122
        %v2289 = vsel %vm2279, %v2124, %v2126
        %v2290 = vsel %vm2279, %v2128, %v2130
        %v2291 = vsel %vm2279, %v2132, %v2134
        %v2292 = vsel %vm2279, %v2136, %v2138
        %v2293 = vsel %vm2279, %v2140, %v2142
        %v2294 = vsel %vm2279, %v2144, %v2146
        %v2295 = vsel %vm2279, %v2148, %v2150
        %v2296 = vsel %vm2279, %v2152, %v2154
        %v2297 = vsel %vm2279, %v2156, %v2158
        %v2298 = vsel %vm2279, %v2160, %v2162
        %v2299 = vsel %vm2279, %v2164, %v2166
        %v2300 = vsel %vm2279, %v2168, %v2170
        %v2301 = vsel %vm2279, %v2172, %v2174
        %v2302 = vsel %vm2279, %v2176, %v2178
        %v2303 = vsel %vm2279, %v2180, %v2182
        %v2304 = vsel %vm2279, %v2184, %v2186
        %v2305 = vsel %vm2279, %v2188, %v2190
        %v2306 = vsel %vm2279, %v2192, %v2194
        %v2307 = vsel %vm2279, %v2196, %v2198
        %v2308 = vsel %vm2279, %v2200, %v2202
        %v2309 = vsel %vm2279, %v2204, %v2206
        %v2310 = vsel %vm2279, %v2208, %v2210
        %v2311 = vsel %vm2279, %v2212, %v2214
        %v2312 = vsel %vm2279, %v2216, %v2218
        %v2313 = vsel %vm2279, %v2220, %v2222
        %v2314 = vsel %vm2279, %v2224, %v2226
        %v2315 = vsel %vm2279, %v2228, %v2230
        %v2316 = vsel %vm2279, %v2232, %v2234
        %v2317 = vsel %vm2279, %v2236, %v2238
        %v2318 = vsel %vm2279, %v2240, %v2242
        %v2319 = vsel %vm2279, %v2244, %v2246
        %v2320 = vsel %vm2279, %v2248, %v2250
        %v2321 = vsel %vm2279, %v2252, %v2254
        %v2322 = vsel %vm2279, %v2256, %v2258
        %v2323 = vsel %vm2279, %v2260, %v2262
        %v2324 = vsel %vm2279, %v2264, %v2266
        %v2325 = vsel %vm2279, %v2268, %v2270
        %v2326 = vsel %vm2279, %v2272, %v2274
        %v2327 = vsel %vm2279, %v2276, %v2278
        %2424 = vrot.lane.b32.xlu0 %v1895, 111
        %v2425 = vpop.permute.xlu0 %2424
        %2426 = vrot.lane.b32.xlu0 %v1897, 111
        %v2427 = vpop.permute.xlu0 %2426
        %2428 = vrot.lane.b32.xlu0 %v1899, 111
        %v2429 = vpop.permute.xlu0 %2428
        %2430 = vrot.lane.b32.xlu0 %v1901, 111
        %v2431 = vpop.permute.xlu0 %2430
        %2432 = vrot.lane.b32.xlu0 %v1903, 111
        %v2433 = vpop.permute.xlu0 %2432
        %2434 = vrot.lane.b32.xlu0 %v1905, 111
        %v2435 = vpop.permute.xlu0 %2434
        %2436 = vrot.lane.b32.xlu0 %v1907, 111
        %v2437 = vpop.permute.xlu0 %2436
        %2438 = vrot.lane.b32.xlu0 %v1909, 111
        %v2439 = vpop.permute.xlu0 %2438
        %2440 = vrot.lane.b32.xlu0 %v1911, 111
        %v2441 = vpop.permute.xlu0 %2440
        %2442 = vrot.lane.b32.xlu0 %v1913, 111
        %v2443 = vpop.permute.xlu0 %2442
        %2444 = vrot.lane.b32.xlu0 %v1915, 111
        %v2445 = vpop.permute.xlu0 %2444
        %2446 = vrot.lane.b32.xlu0 %v1917, 111
        %v2447 = vpop.permute.xlu0 %2446
        %2448 = vrot.lane.b32.xlu0 %v1919, 111
        %v2449 = vpop.permute.xlu0 %2448
        %2450 = vrot.lane.b32.xlu0 %v1921, 111
        %v2451 = vpop.permute.xlu0 %2450
        %2452 = vrot.lane.b32.xlu0 %v1923, 111
        %v2453 = vpop.permute.xlu0 %2452
        %2454 = vrot.lane.b32.xlu0 %v1925, 111
        %v2455 = vpop.permute.xlu0 %2454
        %2456 = vrot.lane.b32.xlu0 %v1927, 111
        %v2457 = vpop.permute.xlu0 %2456
        %2458 = vrot.lane.b32.xlu0 %v1929, 111
        %v2459 = vpop.permute.xlu0 %2458
        %2460 = vrot.lane.b32.xlu0 %v1931, 111
        %v2461 = vpop.permute.xlu0 %2460
        %2462 = vrot.lane.b32.xlu0 %v1933, 111
        %v2463 = vpop.permute.xlu0 %2462
        %2464 = vrot.lane.b32.xlu0 %v1935, 111
        %v2465 = vpop.permute.xlu0 %2464
        %2466 = vrot.lane.b32.xlu0 %v1937, 111
        %v2467 = vpop.permute.xlu0 %2466
        %2468 = vrot.lane.b32.xlu0 %v1939, 111
        %v2469 = vpop.permute.xlu0 %2468
        %2470 = vrot.lane.b32.xlu0 %v1941, 111
        %v2471 = vpop.permute.xlu0 %2470
        %2472 = vrot.lane.b32.xlu0 %v1943, 111
        %v2473 = vpop.permute.xlu0 %2472
        %2474 = vrot.lane.b32.xlu0 %v1945, 111
        %v2475 = vpop.permute.xlu0 %2474
        %2476 = vrot.lane.b32.xlu0 %v1947, 111
        %v2477 = vpop.permute.xlu0 %2476
        %2478 = vrot.lane.b32.xlu0 %v1949, 111
        %v2479 = vpop.permute.xlu0 %2478
        %2480 = vrot.lane.b32.xlu0 %v1951, 111
        %v2481 = vpop.permute.xlu0 %2480
        %2482 = vrot.lane.b32.xlu0 %v1953, 111
        %v2483 = vpop.permute.xlu0 %2482
        %2484 = vrot.lane.b32.xlu0 %v1955, 111
        %v2485 = vpop.permute.xlu0 %2484
        %2486 = vrot.lane.b32.xlu0 %v1957, 111
        %v2487 = vpop.permute.xlu0 %2486
        %2488 = vrot.lane.b32.xlu0 %v1959, 111
        %v2489 = vpop.permute.xlu0 %2488
        %2490 = vrot.lane.b32.xlu0 %v1961, 111
        %v2491 = vpop.permute.xlu0 %2490
        %2492 = vrot.lane.b32.xlu0 %v1963, 111
        %v2493 = vpop.permute.xlu0 %2492
        %2494 = vrot.lane.b32.xlu0 %v1965, 111
        %v2495 = vpop.permute.xlu0 %2494
        %2496 = vrot.lane.b32.xlu0 %v1967, 111
        %v2497 = vpop.permute.xlu0 %2496
        %2498 = vrot.lane.b32.xlu0 %v1969, 111
        %v2499 = vpop.permute.xlu0 %2498
        %2500 = vrot.lane.b32.xlu0 %v1971, 111
        %v2501 = vpop.permute.xlu0 %2500
        %2502 = vrot.lane.b32.xlu0 %v1973, 111
        %v2503 = vpop.permute.xlu0 %2502
        %2504 = vrot.lane.b32.xlu0 %v1975, 111
        %v2505 = vpop.permute.xlu0 %2504
        %2506 = vrot.lane.b32.xlu0 %v1977, 111
        %v2507 = vpop.permute.xlu0 %2506
        %2508 = vrot.lane.b32.xlu0 %v1979, 111
        %v2509 = vpop.permute.xlu0 %2508
        %2510 = vrot.lane.b32.xlu0 %v1981, 111
        %v2511 = vpop.permute.xlu0 %2510
        %2512 = vrot.lane.b32.xlu0 %v1983, 111
        %v2513 = vpop.permute.xlu0 %2512
        %2514 = vrot.lane.b32.xlu0 %v1985, 111
        %v2515 = vpop.permute.xlu0 %2514
        %2516 = vrot.lane.b32.xlu0 %v1987, 111
        %v2517 = vpop.permute.xlu0 %2516
        %2518 = vrot.lane.b32.xlu0 %v1989, 111
        %v2519 = vpop.permute.xlu0 %2518
        %vm2568 = vcmask 908288
        %v2569 = vsel %vm2568, %v2090, %v2425
        %v2570 = vsel %vm2568, %v2094, %v2427
        %v2571 = vsel %vm2568, %v2098, %v2429
        %v2572 = vsel %vm2568, %v2102, %v2431
        %v2573 = vsel %vm2568, %v2106, %v2433
        %v2574 = vsel %vm2568, %v2110, %v2435
        %v2575 = vsel %vm2568, %v2114, %v2437
        %v2576 = vsel %vm2568, %v2118, %v2439
        %v2577 = vsel %vm2568, %v2122, %v2441
        %v2578 = vsel %vm2568, %v2126, %v2443
        %v2579 = vsel %vm2568, %v2130, %v2445
        %v2580 = vsel %vm2568, %v2134, %v2447
        %v2581 = vsel %vm2568, %v2138, %v2449
        %v2582 = vsel %vm2568, %v2142, %v2451
        %v2583 = vsel %vm2568, %v2146, %v2453
        %v2584 = vsel %vm2568, %v2150, %v2455
        %v2585 = vsel %vm2568, %v2154, %v2457
        %v2586 = vsel %vm2568, %v2158, %v2459
        %v2587 = vsel %vm2568, %v2162, %v2461
        %v2588 = vsel %vm2568, %v2166, %v2463
        %v2589 = vsel %vm2568, %v2170, %v2465
        %v2590 = vsel %vm2568, %v2174, %v2467
        %v2591 = vsel %vm2568, %v2178, %v2469
        %v2592 = vsel %vm2568, %v2182, %v2471
        %v2593 = vsel %vm2568, %v2186, %v2473
        %v2594 = vsel %vm2568, %v2190, %v2475
        %v2595 = vsel %vm2568, %v2194, %v2477
        %v2596 = vsel %vm2568, %v2198, %v2479
        %v2597 = vsel %vm2568, %v2202, %v2481
        %v2598 = vsel %vm2568, %v2206, %v2483
        %v2599 = vsel %vm2568, %v2210, %v2485
        %v2600 = vsel %vm2568, %v2214, %v2487
        %v2601 = vsel %vm2568, %v2218, %v2489
        %v2602 = vsel %vm2568, %v2222, %v2491
        %v2603 = vsel %vm2568, %v2226, %v2493
        %v2604 = vsel %vm2568, %v2230, %v2495
        %v2605 = vsel %vm2568, %v2234, %v2497
        %v2606 = vsel %vm2568, %v2238, %v2499
        %v2607 = vsel %vm2568, %v2242, %v2501
        %v2608 = vsel %vm2568, %v2246, %v2503
        %v2609 = vsel %vm2568, %v2250, %v2505
        %v2610 = vsel %vm2568, %v2254, %v2507
        %v2611 = vsel %vm2568, %v2258, %v2509
        %v2612 = vsel %vm2568, %v2262, %v2511
        %v2613 = vsel %vm2568, %v2266, %v2513
        %v2614 = vsel %vm2568, %v2270, %v2515
        %v2615 = vsel %vm2568, %v2274, %v2517
        %v2616 = vsel %vm2568, %v2278, %v2519
        %v2617 = vmax.f32 %v1895, %v2280
        %v2618 = vmax.f32 %v1896, %v2569
        %v2619 = vmax.f32 %v1897, %v2281
        %v2620 = vmax.f32 %v1898, %v2570
        %v2621 = vmax.f32 %v1899, %v2282
        %v2622 = vmax.f32 %v1900, %v2571
        %v2623 = vmax.f32 %v1901, %v2283
        %v2624 = vmax.f32 %v1902, %v2572
        %v2625 = vmax.f32 %v1903, %v2284
        %v2626 = vmax.f32 %v1904, %v2573
        %v2627 = vmax.f32 %v1905, %v2285
        %v2628 = vmax.f32 %v1906, %v2574
        %v2629 = vmax.f32 %v1907, %v2286
        %v2630 = vmax.f32 %v1908, %v2575
        %v2631 = vmax.f32 %v1909, %v2287
        %v2632 = vmax.f32 %v1910, %v2576
        %v2633 = vmax.f32 %v1911, %v2288
        %v2634 = vmax.f32 %v1912, %v2577
        %v2635 = vmax.f32 %v1913, %v2289
        %v2636 = vmax.f32 %v1914, %v2578
        %v2637 = vmax.f32 %v1915, %v2290
        %v2638 = vmax.f32 %v1916, %v2579
        %v2639 = vmax.f32 %v1917, %v2291
        %v2640 = vmax.f32 %v1918, %v2580
        %v2641 = vmax.f32 %v1919, %v2292
        %v2642 = vmax.f32 %v1920, %v2581
        %v2643 = vmax.f32 %v1921, %v2293
        %v2644 = vmax.f32 %v1922, %v2582
        %v2645 = vmax.f32 %v1923, %v2294
        %v2646 = vmax.f32 %v1924, %v2583
        %v2647 = vmax.f32 %v1925, %v2295
        %v2648 = vmax.f32 %v1926, %v2584
        %v2649 = vmax.f32 %v1927, %v2296
        %v2650 = vmax.f32 %v1928, %v2585
        %v2651 = vmax.f32 %v1929, %v2297
        %v2652 = vmax.f32 %v1930, %v2586
        %v2653 = vmax.f32 %v1931, %v2298
        %v2654 = vmax.f32 %v1932, %v2587
        %v2655 = vmax.f32 %v1933, %v2299
        %v2656 = vmax.f32 %v1934, %v2588
        %v2657 = vmax.f32 %v1935, %v2300
        %v2658 = vmax.f32 %v1936, %v2589
        %v2659 = vmax.f32 %v1937, %v2301
        %v2660 = vmax.f32 %v1938, %v2590
        %v2661 = vmax.f32 %v1939, %v2302
        %v2662 = vmax.f32 %v1940, %v2591
        %v2663 = vmax.f32 %v1941, %v2303
        %v2664 = vmax.f32 %v1942, %v2592
        %v2665 = vmax.f32 %v1943, %v2304
        %v2666 = vmax.f32 %v1944, %v2593
        %v2667 = vmax.f32 %v1945, %v2305
        %v2668 = vmax.f32 %v1946, %v2594
        %v2669 = vmax.f32 %v1947, %v2306
        %v2670 = vmax.f32 %v1948, %v2595
        %v2671 = vmax.f32 %v1949, %v2307
        %v2672 = vmax.f32 %v1950, %v2596
        %v2673 = vmax.f32 %v1951, %v2308
        %v2674 = vmax.f32 %v1952, %v2597
        %v2675 = vmax.f32 %v1953, %v2309
        %v2676 = vmax.f32 %v1954, %v2598
        %v2677 = vmax.f32 %v1955, %v2310
        %v2678 = vmax.f32 %v1956, %v2599
        %v2679 = vmax.f32 %v1957, %v2311
        %v2680 = vmax.f32 %v1958, %v2600
        %v2681 = vmax.f32 %v1959, %v2312
        %v2682 = vmax.f32 %v1960, %v2601
        %v2683 = vmax.f32 %v1961, %v2313
        %v2684 = vmax.f32 %v1962, %v2602
        %v2685 = vmax.f32 %v1963, %v2314
        %v2686 = vmax.f32 %v1964, %v2603
        %v2687 = vmax.f32 %v1965, %v2315
        %v2688 = vmax.f32 %v1966, %v2604
        %v2689 = vmax.f32 %v1967, %v2316
        %v2690 = vmax.f32 %v1968, %v2605
        %v2691 = vmax.f32 %v1969, %v2317
        %v2692 = vmax.f32 %v1970, %v2606
        %v2693 = vmax.f32 %v1971, %v2318
        %v2694 = vmax.f32 %v1972, %v2607
        %v2695 = vmax.f32 %v1973, %v2319
        %v2696 = vmax.f32 %v1974, %v2608
        %v2697 = vmax.f32 %v1975, %v2320
        %v2698 = vmax.f32 %v1976, %v2609
        %v2699 = vmax.f32 %v1977, %v2321
        %v2700 = vmax.f32 %v1978, %v2610
        %v2701 = vmax.f32 %v1979, %v2322
        %v2702 = vmax.f32 %v1980, %v2611
        %v2703 = vmax.f32 %v1981, %v2323
        %v2704 = vmax.f32 %v1982, %v2612
        %v2705 = vmax.f32 %v1983, %v2324
        %v2706 = vmax.f32 %v1984, %v2613
        %v2707 = vmax.f32 %v1985, %v2325
        %v2708 = vmax.f32 %v1986, %v2614
        %v2709 = vmax.f32 %v1987, %v2326
        %v2710 = vmax.f32 %v1988, %v2615
        %v2711 = vmax.f32 %v1989, %v2327
        %v2712 = vmax.f32 %v1990, %v2616
        %v2713 = vmax.f32 %v2617, %v2621
        %v2714 = vmax.f32 %v2618, %v2622
        %v2715 = vmax.f32 %v2619, %v2623
        %v2716 = vmax.f32 %v2620, %v2624
        %v2717 = vmax.f32 %v2625, %v2629
        %v2718 = vmax.f32 %v2626, %v2630
        %v2719 = vmax.f32 %v2627, %v2631
        %v2720 = vmax.f32 %v2628, %v2632
        %v2721 = vmax.f32 %v2633, %v2637
        %v2722 = vmax.f32 %v2634, %v2638
        %v2723 = vmax.f32 %v2635, %v2639
        %v2724 = vmax.f32 %v2636, %v2640
        %v2725 = vmax.f32 %v2641, %v2645
        %v2726 = vmax.f32 %v2642, %v2646
        %v2727 = vmax.f32 %v2643, %v2647
        %v2728 = vmax.f32 %v2644, %v2648
        %v2729 = vmax.f32 %v2649, %v2653
        %v2730 = vmax.f32 %v2650, %v2654
        %v2731 = vmax.f32 %v2651, %v2655
        %v2732 = vmax.f32 %v2652, %v2656
        %v2733 = vmax.f32 %v2657, %v2661
        %v2734 = vmax.f32 %v2658, %v2662
        %v2735 = vmax.f32 %v2659, %v2663
        %v2736 = vmax.f32 %v2660, %v2664
        %v2737 = vmax.f32 %v2665, %v2669
        %v2738 = vmax.f32 %v2666, %v2670
        %v2739 = vmax.f32 %v2667, %v2671
        %v2740 = vmax.f32 %v2668, %v2672
        %v2741 = vmax.f32 %v2673, %v2677
        %v2742 = vmax.f32 %v2674, %v2678
        %v2743 = vmax.f32 %v2675, %v2679
        %v2744 = vmax.f32 %v2676, %v2680
        %v2745 = vmax.f32 %v2681, %v2685
        %v2746 = vmax.f32 %v2682, %v2686
        %v2747 = vmax.f32 %v2683, %v2687
        %v2748 = vmax.f32 %v2684, %v2688
        %v2749 = vmax.f32 %v2689, %v2693
        %v2750 = vmax.f32 %v2690, %v2694
        %v2751 = vmax.f32 %v2691, %v2695
        %v2752 = vmax.f32 %v2692, %v2696
        %v2753 = vmax.f32 %v2697, %v2701
        %v2754 = vmax.f32 %v2698, %v2702
        %v2755 = vmax.f32 %v2699, %v2703
        %v2756 = vmax.f32 %v2700, %v2704
        %v2757 = vmax.f32 %v2705, %v2709
        %v2758 = vmax.f32 %v2706, %v2710
        %v2759 = vmax.f32 %v2707, %v2711
        %v2760 = vmax.f32 %v2708, %v2712
        %v2761 = vpack.c.bf16 %v2715, %v2713
        %v2762 = vpack.c.bf16 %v2716, %v2714
        %v2763 = vpack.c.bf16 %v2719, %v2717
        %v2764 = vpack.c.bf16 %v2720, %v2718
        %v2765 = vpack.c.bf16 %v2723, %v2721
        %v2766 = vpack.c.bf16 %v2724, %v2722
        %v2767 = vpack.c.bf16 %v2727, %v2725
        %v2768 = vpack.c.bf16 %v2728, %v2726
        %v2769 = vpack.c.bf16 %v2731, %v2729
        %v2770 = vpack.c.bf16 %v2732, %v2730
        %v2771 = vpack.c.bf16 %v2735, %v2733
        %v2772 = vpack.c.bf16 %v2736, %v2734
        %v2773 = vpack.c.bf16 %v2739, %v2737
        %v2774 = vpack.c.bf16 %v2740, %v2738
        %v2775 = vpack.c.bf16 %v2743, %v2741
        %v2776 = vpack.c.bf16 %v2744, %v2742
        %v2777 = vld [vmem:[%s3] sm:$0xff]
        %v2778 = vld [vmem:[%s3 + $0x8] sm:$0xff]
        %v2779 = vld [vmem:[%s3 + $0x10] sm:$0xff]
        %v2780 = vld [vmem:[%s3 + $0x18] sm:$0xff]
        %v2781 = vld [vmem:[%s3 + $0x20] sm:$0xff]
        %v2782 = vld [vmem:[%s3 + $0x28] sm:$0xff]
        %v2783 = vld [vmem:[%s3 + $0x30] sm:$0xff]
        %v2784 = vld [vmem:[%s3 + $0x38] sm:$0xff]
        %v2785 = vld [vmem:[%s3 + $0x40] sm:$0xff]
        %v2786 = vld [vmem:[%s3 + $0x48] sm:$0xff]
        %v2787 = vld [vmem:[%s3 + $0x50] sm:$0xff]
        %v2788 = vld [vmem:[%s3 + $0x58] sm:$0xff]
        %v2789 = vld [vmem:[%s3 + $0x60] sm:$0xff]
        %v2790 = vld [vmem:[%s3 + $0x68] sm:$0xff]
        %v2791 = vld [vmem:[%s3 + $0x70] sm:$0xff]
        %v2792 = vld [vmem:[%s3 + $0x78] sm:$0xff]
        %v2793 = vld [vmem:[%s3 + $0x80] sm:$0xff]
        %v2794 = vld [vmem:[%s3 + $0x88] sm:$0xff]
        %v2795 = vld [vmem:[%s3 + $0x90] sm:$0xff]
        %v2796 = vld [vmem:[%s3 + $0x98] sm:$0xff]
        %v2797 = vld [vmem:[%s3 + $0xa0] sm:$0xff]
        %v2798 = vld [vmem:[%s3 + $0xa8] sm:$0xff]
        %v2799 = vld [vmem:[%s3 + $0xb0] sm:$0xff]
        %v2800 = vld [vmem:[%s3 + $0xb8] sm:$0xff]
        %v2801 = vld [vmem:[%s3 + $0xc0] sm:$0xff]
        %v2802 = vld [vmem:[%s3 + $0xc8] sm:$0xff]
        %v2803 = vld [vmem:[%s3 + $0xd0] sm:$0xff]
        %v2804 = vld [vmem:[%s3 + $0xd8] sm:$0xff]
        %v2805 = vld [vmem:[%s3 + $0xe0] sm:$0xff]
        %v2806 = vld [vmem:[%s3 + $0xe8] sm:$0xff]
        %v2807 = vpack.c.bf16 %v2747, %v2745
        %v2808 = vpack.c.bf16 %v2748, %v2746
        %s2809 = scalar_lea.vmem %s3, 240
        %v2810 = vld [vmem:[%s2809] sm:$0xff]
        %v2811 = vld [vmem:[%s2809 + $0x8] sm:$0xff]
        %v2812 = vld [vmem:[%s2809 + $0x10] sm:$0xff]
        %v2813 = vld [vmem:[%s2809 + $0x18] sm:$0xff]
        %v2814 = vld [vmem:[%s2809 + $0x20] sm:$0xff]
        %v2815 = vld [vmem:[%s2809 + $0x28] sm:$0xff]
        %v2816 = vld [vmem:[%s2809 + $0x30] sm:$0xff]
        %v2817 = vld [vmem:[%s2809 + $0x38] sm:$0xff]
        %v2818 = vld [vmem:[%s2809 + $0x40] sm:$0xff]
        %v2819 = vld [vmem:[%s2809 + $0x48] sm:$0xff]
        %v2820 = vld [vmem:[%s2809 + $0x50] sm:$0xff]
        %v2821 = vld [vmem:[%s2809 + $0x58] sm:$0xff]
        %v2822 = vld [vmem:[%s2809 + $0x60] sm:$0xff]
        %v2823 = vld [vmem:[%s2809 + $0x68] sm:$0xff]
        %v2824 = vld [vmem:[%s2809 + $0x70] sm:$0xff]
        %v2825 = vld [vmem:[%s2809 + $0x78] sm:$0xff]
        %v2826 = vld [vmem:[%s2809 + $0x80] sm:$0xff]
        %v2827 = vld [vmem:[%s2809 + $0x88] sm:$0xff]
        %v2828 = vld [vmem:[%s2809 + $0x90] sm:$0xff]
        %v2829 = vld [vmem:[%s2809 + $0x98] sm:$0xff]
        %v2830 = vld [vmem:[%s2809 + $0xa0] sm:$0xff]
        %v2831 = vld [vmem:[%s2809 + $0xa8] sm:$0xff]
        %v2832 = vld [vmem:[%s2809 + $0xb0] sm:$0xff]
        %v2833 = vld [vmem:[%s2809 + $0xb8] sm:$0xff]
        %v2834 = vld [vmem:[%s2809 + $0xc0] sm:$0xff]
        %v2835 = vld [vmem:[%s2809 + $0xc8] sm:$0xff]
        %v2836 = vld [vmem:[%s2809 + $0xd0] sm:$0xff]
        %v2837 = vld [vmem:[%s2809 + $0xd8] sm:$0xff]
        %v2838 = vld [vmem:[%s2809 + $0xe0] sm:$0xff]
        %v2839 = vld [vmem:[%s2809 + $0xe8] sm:$0xff]
        %v2870 = vunpack.c.l.b16 %v2810
        %v2871 = vunpack.c.h.b16 %v2810
        %v2872 = vunpack.c.l.b16 %v2811
        %v2873 = vunpack.c.h.b16 %v2811
        %v2874 = vunpack.c.l.b16 %v2812
        %v2875 = vunpack.c.h.b16 %v2812
        %v2876 = vunpack.c.l.b16 %v2813
        %v2877 = vunpack.c.h.b16 %v2813
        %v2878 = vunpack.c.l.b16 %v2814
        %v2879 = vunpack.c.h.b16 %v2814
        %v2880 = vunpack.c.l.b16 %v2815
        %v2881 = vunpack.c.h.b16 %v2815
        %v2882 = vunpack.c.l.b16 %v2816
        %v2883 = vunpack.c.h.b16 %v2816
        %v2884 = vunpack.c.l.b16 %v2817
        %v2885 = vunpack.c.h.b16 %v2817
        %v2886 = vunpack.c.l.b16 %v2818
        %v2887 = vunpack.c.h.b16 %v2818
        %v2888 = vunpack.c.l.b16 %v2819
        %v2889 = vunpack.c.h.b16 %v2819
        %v2890 = vunpack.c.l.b16 %v2820
        %v2891 = vunpack.c.h.b16 %v2820
        %v2892 = vunpack.c.l.b16 %v2821
        %v2893 = vunpack.c.h.b16 %v2821
        %v2894 = vunpack.c.l.b16 %v2822
        %v2895 = vunpack.c.h.b16 %v2822
        %v2896 = vunpack.c.l.b16 %v2823
        %v2897 = vunpack.c.h.b16 %v2823
        %v2898 = vunpack.c.l.b16 %v2824
        %v2899 = vunpack.c.h.b16 %v2824
        %v2900 = vunpack.c.l.b16 %v2825
        %v2901 = vunpack.c.h.b16 %v2825
        %v2902 = vunpack.c.l.b16 %v2826
        %v2903 = vunpack.c.h.b16 %v2826
        %v2904 = vunpack.c.l.b16 %v2827
        %v2905 = vunpack.c.h.b16 %v2827
        %v2906 = vunpack.c.l.b16 %v2828
        %v2907 = vunpack.c.h.b16 %v2828
        %v2908 = vunpack.c.l.b16 %v2829
        %v2909 = vunpack.c.h.b16 %v2829
        %v2910 = vunpack.c.l.b16 %v2830
        %v2911 = vunpack.c.h.b16 %v2830
        %v2912 = vunpack.c.l.b16 %v2831
        %v2913 = vunpack.c.h.b16 %v2831
        %v2914 = vunpack.c.l.b16 %v2832
        %v2915 = vunpack.c.h.b16 %v2832
        %v2916 = vunpack.c.l.b16 %v2833
        %v2917 = vunpack.c.h.b16 %v2833
        %v2918 = vunpack.c.l.b16 %v2834
        %v2919 = vunpack.c.h.b16 %v2834
        %v2920 = vunpack.c.l.b16 %v2835
        %v2921 = vunpack.c.h.b16 %v2835
        %v2922 = vunpack.c.l.b16 %v2836
        %v2923 = vunpack.c.h.b16 %v2836
        %v2924 = vunpack.c.l.b16 %v2837
        %v2925 = vunpack.c.h.b16 %v2837
        %v2926 = vunpack.c.l.b16 %v2838
        %v2927 = vunpack.c.h.b16 %v2838
        %v2928 = vunpack.c.l.b16 %v2839
        %v2929 = vunpack.c.h.b16 %v2839
        %v2930 = vpack.c.b16 %v2872, %v2870
        %v2931 = vpack.c.b16 %v2873, %v2871
        %v2932 = vpack.c.b16 %v2876, %v2874
        %v2933 = vpack.c.b16 %v2877, %v2875
        %v2934 = vpack.c.b16 %v2880, %v2878
        %v2935 = vpack.c.b16 %v2881, %v2879
        %v2936 = vpack.c.b16 %v2884, %v2882
        %v2937 = vpack.c.b16 %v2885, %v2883
        %v2938 = vpack.c.b16 %v2888, %v2886
        %v2939 = vpack.c.b16 %v2889, %v2887
        %v2940 = vpack.c.b16 %v2892, %v2890
        %v2941 = vpack.c.b16 %v2893, %v2891
        %v2942 = vpack.c.b16 %v2896, %v2894
        %v2943 = vpack.c.b16 %v2897, %v2895
        %v2944 = vpack.c.b16 %v2900, %v2898
        %v2945 = vpack.c.b16 %v2901, %v2899
        %v2946 = vpack.c.b16 %v2904, %v2902
        %v2947 = vpack.c.b16 %v2905, %v2903
        %v2948 = vpack.c.b16 %v2908, %v2906
        %v2949 = vpack.c.b16 %v2909, %v2907
        %v2950 = vpack.c.b16 %v2912, %v2910
        %v2951 = vpack.c.b16 %v2913, %v2911
        %v2952 = vpack.c.b16 %v2916, %v2914
        %v2953 = vpack.c.b16 %v2917, %v2915
        %v2954 = vpack.c.b16 %v2920, %v2918
        %v2955 = vpack.c.b16 %v2921, %v2919
        %v2956 = vpack.c.b16 %v2924, %v2922
        %v2957 = vpack.c.b16 %v2925, %v2923
        %v2958 = vpack.c.b16 %v2928, %v2926
        %v2959 = vpack.c.b16 %v2929, %v2927
        %v2991 = vsel %vm1157, %v2764, 0
        %v2994 = vsel %vm1157, %v2766, 0
        %v2997 = vsel %vm1157, %v2768, 0
        %v3000 = vsel %vm1157, %v2770, 0
        %v3003 = vsel %vm1157, %v2772, 0
        %v3006 = vsel %vm1157, %v2774, 0
        %v3009 = vsel %vm1157, %v2776, 0
        %v3012 = vsel %vm1157, %v2808, 0
        %3014 = vmatprep.subr.bf16.mxu0 %v2931
        %3015 = vmatpush1.bf16.msra.mxu0 %v2930
        %3016 = vmatprep.subr.bf16.mxu0 %v2933
        %3017 = vmatpush1.bf16.msra.mxu0 %v2932
        %3018 = vmatprep.subr.bf16.mxu0 %v2935
        %3019 = vmatpush1.bf16.msra.mxu0 %v2934
        %3020 = vmatprep.subr.bf16.mxu0 %v2937
        %3021 = vmatpush1.bf16.msra.mxu0 %v2936
        %3022 = vmatprep.subr.bf16.mxu0 %v2939
        %3023 = vmatpush1.bf16.msra.mxu0 %v2938
        %3024 = vmatprep.subr.bf16.mxu0 %v2941
        %3025 = vmatpush1.bf16.msra.mxu0 %v2940
        %3026 = vmatprep.subr.bf16.mxu0 %v2943
        %3027 = vmatpush1.bf16.msra.mxu0 %v2942
        %3028 = vmatprep.subr.bf16.mxu0 %v2945
        %3029 = vmatpush1.bf16.msra.mxu0 %v2944
        %3030 = vmatprep.subr.bf16.mxu0 %v2947
        %3031 = vmatpush1.bf16.msra.mxu0 %v2946
        %3032 = vmatprep.subr.bf16.mxu0 %v2949
        %3033 = vmatpush1.bf16.msra.mxu0 %v2948
        %3034 = vmatprep.subr.bf16.mxu0 %v2951
        %3035 = vmatpush1.bf16.msra.mxu0 %v2950
        %3036 = vmatprep.subr.bf16.mxu0 %v2953
        %3037 = vmatpush1.bf16.msra.mxu0 %v2952
        %3038 = vmatprep.subr.bf16.mxu0 %v2955
        %3039 = vmatpush1.bf16.msra.mxu0 %v2954
        %3040 = vmatprep.subr.bf16.mxu0 %v2957
        %3041 = vmatpush1.bf16.msra.mxu0 %v2956
        %3042 = vmatprep.subr.bf16.mxu0 %v2959
        %3043 = vmatpush1.bf16.msra.mxu0 %v2958
        %3044 = vmatprep.subr.bf16.mxu0 0
        %3045 = vmatpush1.bf16.msra.mxu0 0
        %3046 = vmatprep.mubr.bf16.mxu0 %v2991
        %3047 = vmatmul.mubr.bf16.gmra.mrb[0].mxu0 %v2763
        %v3048 = vpop.f32.mrb[0].mxu0
        %v3049 = vadd.f32 0.0, %v3048
        %v3050 = vpop.f32.mrb[0].mxu0
        %v3051 = vadd.f32 0.0, %v3050
        %v3052 = vpop.f32.mrb[0].mxu0
        %v3053 = vadd.f32 0.0, %v3052
        %v3054 = vpop.f32.mrb[0].mxu0
        %v3055 = vadd.f32 0.0, %v3054
        %3056 = vmatprep.mubr.bf16.mxu0 %v2994
        %3057 = vmatmul.mubr.bf16.gmra.mrb[0].mxu0 %v2765
        %v3058 = vpop.f32.mrb[0].mxu0
        %v3059 = vadd.f32 0.0, %v3058
        %v3060 = vpop.f32.mrb[0].mxu0
        %v3061 = vadd.f32 0.0, %v3060
        %v3062 = vpop.f32.mrb[0].mxu0
        %v3063 = vadd.f32 0.0, %v3062
        %v3064 = vpop.f32.mrb[0].mxu0
        %v3065 = vadd.f32 0.0, %v3064
        %3066 = vmatprep.mubr.bf16.mxu0 %v2997
        %3067 = vmatmul.mubr.bf16.gmra.mrb[0].mxu0 %v2767
        %v3068 = vpop.f32.mrb[0].mxu0
        %v3069 = vadd.f32 0.0, %v3068
        %v3070 = vpop.f32.mrb[0].mxu0
        %v3071 = vadd.f32 0.0, %v3070
        %v3072 = vpop.f32.mrb[0].mxu0
        %v3073 = vadd.f32 0.0, %v3072
        %v3074 = vpop.f32.mrb[0].mxu0
        %v3075 = vadd.f32 0.0, %v3074
        %3076 = vmatprep.mubr.bf16.mxu0 %v3000
        %3077 = vmatmul.mubr.bf16.gmra.mrb[0].mxu0 %v2769
        %v3078 = vpop.f32.mrb[0].mxu0
        %v3079 = vadd.f32 0.0, %v3078
        %v3080 = vpop.f32.mrb[0].mxu0
        %v3081 = vadd.f32 0.0, %v3080
        %v3082 = vpop.f32.mrb[0].mxu0
        %v3083 = vadd.f32 0.0, %v3082
        %v3084 = vpop.f32.mrb[0].mxu0
        %v3085 = vadd.f32 0.0, %v3084
        %3086 = vmatprep.mubr.bf16.mxu0 %v3003
        %3087 = vmatmul.mubr.bf16.gmra.mrb[0].mxu0 %v2771
        %v3088 = vpop.f32.mrb[0].mxu0
        %v3089 = vadd.f32 0.0, %v3088
        %v3090 = vpop.f32.mrb[0].mxu0
        %v3091 = vadd.f32 0.0, %v3090
        %v3092 = vpop.f32.mrb[0].mxu0
        %v3093 = vadd.f32 0.0, %v3092
        %v3094 = vpop.f32.mrb[0].mxu0
        %v3095 = vadd.f32 0.0, %v3094
        %3096 = vmatprep.mubr.bf16.mxu0 %v3006
        %3097 = vmatmul.mubr.bf16.gmra.mrb[0].mxu0 %v2773
        %v3098 = vpop.f32.mrb[0].mxu0
        %v3099 = vadd.f32 0.0, %v3098
        %v3100 = vpop.f32.mrb[0].mxu0
        %v3101 = vadd.f32 0.0, %v3100
        %v3102 = vpop.f32.mrb[0].mxu0
        %v3103 = vadd.f32 0.0, %v3102
        %v3104 = vpop.f32.mrb[0].mxu0
        %v3105 = vadd.f32 0.0, %v3104
        %3106 = vmatprep.mubr.bf16.mxu0 %v3009
        %3107 = vmatmul.mubr.bf16.gmra.mrb[0].mxu0 %v2775
        %v3108 = vpop.f32.mrb[0].mxu0
        %v3109 = vadd.f32 0.0, %v3108
        %v3110 = vpop.f32.mrb[0].mxu0
        %v3111 = vadd.f32 0.0, %v3110
        %v3112 = vpop.f32.mrb[0].mxu0
        %v3113 = vadd.f32 0.0, %v3112
        %v3114 = vpop.f32.mrb[0].mxu0
        %v3115 = vadd.f32 0.0, %v3114
        %3116 = vmatprep.mubr.bf16.mxu0 %v3012
        %3117 = vmatmul.mubr.bf16.gmra.mrb[0].mxu0 %v2807
        %v3118 = vpop.f32.mrb[0].mxu0
        %v3119 = vadd.f32 0.0, %v3118
        %v3120 = vpop.f32.mrb[0].mxu0
        %v3121 = vadd.f32 0.0, %v3120
        %v3122 = vpop.f32.mrb[0].mxu0
        %v3123 = vadd.f32 0.0, %v3122
        %v3124 = vpop.f32.mrb[0].mxu0
        %v3125 = vadd.f32 0.0, %v3124
        %3126 = vdwg.mxu0
        %v3157 = vunpack.c.l.b16 %v2777
        %v3158 = vunpack.c.h.b16 %v2777
        %v3159 = vunpack.c.l.b16 %v2778
        %v3160 = vunpack.c.h.b16 %v2778
        %v3161 = vunpack.c.l.b16 %v2779
        %v3162 = vunpack.c.h.b16 %v2779
        %v3163 = vunpack.c.l.b16 %v2780
        %v3164 = vunpack.c.h.b16 %v2780
        %v3165 = vunpack.c.l.b16 %v2781
        %v3166 = vunpack.c.h.b16 %v2781
        %v3167 = vunpack.c.l.b16 %v2782
        %v3168 = vunpack.c.h.b16 %v2782
        %v3169 = vunpack.c.l.b16 %v2783
        %v3170 = vunpack.c.h.b16 %v2783
        %v3171 = vunpack.c.l.b16 %v2784
        %v3172 = vunpack.c.h.b16 %v2784
        %v3173 = vunpack.c.l.b16 %v2785
        %v3174 = vunpack.c.h.b16 %v2785
        %v3175 = vunpack.c.l.b16 %v2786
        %v3176 = vunpack.c.h.b16 %v2786
        %v3177 = vunpack.c.l.b16 %v2787
        %v3178 = vunpack.c.h.b16 %v2787
        %v3179 = vunpack.c.l.b16 %v2788
        %v3180 = vunpack.c.h.b16 %v2788
        %v3181 = vunpack.c.l.b16 %v2789
        %v3182 = vunpack.c.h.b16 %v2789
        %v3183 = vunpack.c.l.b16 %v2790
        %v3184 = vunpack.c.h.b16 %v2790
        %v3185 = vunpack.c.l.b16 %v2791
        %v3186 = vunpack.c.h.b16 %v2791
        %v3187 = vunpack.c.l.b16 %v2792
        %v3188 = vunpack.c.h.b16 %v2792
        %v3189 = vunpack.c.l.b16 %v2793
        %v3190 = vunpack.c.h.b16 %v2793
        %v3191 = vunpack.c.l.b16 %v2794
        %v3192 = vunpack.c.h.b16 %v2794
        %v3193 = vunpack.c.l.b16 %v2795
        %v3194 = vunpack.c.h.b16 %v2795
        %v3195 = vunpack.c.l.b16 %v2796
        %v3196 = vunpack.c.h.b16 %v2796
        %v3197 = vunpack.c.l.b16 %v2797
        %v3198 = vunpack.c.h.b16 %v2797
        %v3199 = vunpack.c.l.b16 %v2798
        %v3200 = vunpack.c.h.b16 %v2798
        %v3201 = vunpack.c.l.b16 %v2799
        %v3202 = vunpack.c.h.b16 %v2799
        %v3203 = vunpack.c.l.b16 %v2800
        %v3204 = vunpack.c.h.b16 %v2800
        %v3205 = vunpack.c.l.b16 %v2801
        %v3206 = vunpack.c.h.b16 %v2801
        %v3207 = vunpack.c.l.b16 %v2802
        %v3208 = vunpack.c.h.b16 %v2802
        %v3209 = vunpack.c.l.b16 %v2803
        %v3210 = vunpack.c.h.b16 %v2803
        %v3211 = vunpack.c.l.b16 %v2804
        %v3212 = vunpack.c.h.b16 %v2804
        %v3213 = vunpack.c.l.b16 %v2805
        %v3214 = vunpack.c.h.b16 %v2805
        %v3215 = vunpack.c.l.b16 %v2806
        %v3216 = vunpack.c.h.b16 %v2806
        %v3217 = vpack.c.b16 %v3159, %v3157
        %v3218 = vpack.c.b16 %v3160, %v3158
        %v3219 = vpack.c.b16 %v3163, %v3161
        %v3220 = vpack.c.b16 %v3164, %v3162
        %v3221 = vpack.c.b16 %v3167, %v3165
        %v3222 = vpack.c.b16 %v3168, %v3166
        %v3223 = vpack.c.b16 %v3171, %v3169
        %v3224 = vpack.c.b16 %v3172, %v3170
        %v3225 = vpack.c.b16 %v3175, %v3173
        %v3226 = vpack.c.b16 %v3176, %v3174
        %v3227 = vpack.c.b16 %v3179, %v3177
        %v3228 = vpack.c.b16 %v3180, %v3178
        %v3229 = vpack.c.b16 %v3183, %v3181
        %v3230 = vpack.c.b16 %v3184, %v3182
        %v3231 = vpack.c.b16 %v3187, %v3185
        %v3232 = vpack.c.b16 %v3188, %v3186
        %v3233 = vpack.c.b16 %v3191, %v3189
        %v3234 = vpack.c.b16 %v3192, %v3190
        %v3235 = vpack.c.b16 %v3195, %v3193
        %v3236 = vpack.c.b16 %v3196, %v3194
        %v3237 = vpack.c.b16 %v3199, %v3197
        %v3238 = vpack.c.b16 %v3200, %v3198
        %v3239 = vpack.c.b16 %v3203, %v3201
        %v3240 = vpack.c.b16 %v3204, %v3202
        %v3241 = vpack.c.b16 %v3207, %v3205
        %v3242 = vpack.c.b16 %v3208, %v3206
        %v3243 = vpack.c.b16 %v3211, %v3209
        %v3244 = vpack.c.b16 %v3212, %v3210
        %v3245 = vpack.c.b16 %v3215, %v3213
        %v3246 = vpack.c.b16 %v3216, %v3214
        %v3278 = vsel %vm1157, %v2762, 0
        %3280 = vmatprep.subr.bf16.mxu0 %v3218
        %3281 = vmatpush1.bf16.msra.mxu0 %v3217
        %3282 = vmatprep.subr.bf16.mxu0 %v3220
        %3283 = vmatpush1.bf16.msra.mxu0 %v3219
        %3284 = vmatprep.subr.bf16.mxu0 %v3222
        %3285 = vmatpush1.bf16.msra.mxu0 %v3221
        %3286 = vmatprep.subr.bf16.mxu0 %v3224
        %3287 = vmatpush1.bf16.msra.mxu0 %v3223
        %3288 = vmatprep.subr.bf16.mxu0 %v3226
        %3289 = vmatpush1.bf16.msra.mxu0 %v3225
        %3290 = vmatprep.subr.bf16.mxu0 %v3228
        %3291 = vmatpush1.bf16.msra.mxu0 %v3227
        %3292 = vmatprep.subr.bf16.mxu0 %v3230
        %3293 = vmatpush1.bf16.msra.mxu0 %v3229
        %3294 = vmatprep.subr.bf16.mxu0 %v3232
        %3295 = vmatpush1.bf16.msra.mxu0 %v3231
        %3296 = vmatprep.subr.bf16.mxu0 %v3234
        %3297 = vmatpush1.bf16.msra.mxu0 %v3233
        %3298 = vmatprep.subr.bf16.mxu0 %v3236
        %3299 = vmatpush1.bf16.msra.mxu0 %v3235
        %3300 = vmatprep.subr.bf16.mxu0 %v3238
        %3301 = vmatpush1.bf16.msra.mxu0 %v3237
        %3302 = vmatprep.subr.bf16.mxu0 %v3240
        %3303 = vmatpush1.bf16.msra.mxu0 %v3239
        %3304 = vmatprep.subr.bf16.mxu0 %v3242
        %3305 = vmatpush1.bf16.msra.mxu0 %v3241
        %3306 = vmatprep.subr.bf16.mxu0 %v3244
        %3307 = vmatpush1.bf16.msra.mxu0 %v3243
        %3308 = vmatprep.subr.bf16.mxu0 %v3246
        %3309 = vmatpush1.bf16.msra.mxu0 %v3245
        %3310 = vmatprep.subr.bf16.mxu0 0
        %3311 = vmatpush1.bf16.msra.mxu0 0
        %3312 = vmatprep.mubr.bf16.mxu0 %v3278
        %3313 = vmatmul.mubr.bf16.gmra.mrb[0].mxu0 %v2761
        %v3314 = vpop.f32.mrb[0].mxu0
        %v3315 = vadd.f32 %v3049, %v3314
        %v3316 = vpop.f32.mrb[0].mxu0
        %v3317 = vadd.f32 %v3051, %v3316
        %v3318 = vpop.f32.mrb[0].mxu0
        %v3319 = vadd.f32 %v3053, %v3318
        %v3320 = vpop.f32.mrb[0].mxu0
        %v3321 = vadd.f32 %v3055, %v3320
        %3322 = vmatprep.mubr.bf16.mxu0 %v2991
        %3323 = vmatmul.mubr.bf16.gmra.mrb[0].mxu0 %v2763
        %v3324 = vpop.f32.mrb[0].mxu0
        %v3325 = vadd.f32 %v3059, %v3324
        %v3326 = vpop.f32.mrb[0].mxu0
        %v3327 = vadd.f32 %v3061, %v3326
        %v3328 = vpop.f32.mrb[0].mxu0
        %v3329 = vadd.f32 %v3063, %v3328
        %v3330 = vpop.f32.mrb[0].mxu0
        %v3331 = vadd.f32 %v3065, %v3330
        %3332 = vmatprep.mubr.bf16.mxu0 %v2994
        %3333 = vmatmul.mubr.bf16.gmra.mrb[0].mxu0 %v2765
        %v3334 = vpop.f32.mrb[0].mxu0
        %v3335 = vadd.f32 %v3069, %v3334
        %v3336 = vpop.f32.mrb[0].mxu0
        %v3337 = vadd.f32 %v3071, %v3336
        %v3338 = vpop.f32.mrb[0].mxu0
        %v3339 = vadd.f32 %v3073, %v3338
        %v3340 = vpop.f32.mrb[0].mxu0
        %v3341 = vadd.f32 %v3075, %v3340
        %3342 = vmatprep.mubr.bf16.mxu0 %v2997
        %3343 = vmatmul.mubr.bf16.gmra.mrb[0].mxu0 %v2767
        %v3344 = vpop.f32.mrb[0].mxu0
        %v3345 = vadd.f32 %v3079, %v3344
        %v3346 = vpop.f32.mrb[0].mxu0
        %v3347 = vadd.f32 %v3081, %v3346
        %v3348 = vpop.f32.mrb[0].mxu0
        %v3349 = vadd.f32 %v3083, %v3348
        %v3350 = vpop.f32.mrb[0].mxu0
        %v3351 = vadd.f32 %v3085, %v3350
        %3352 = vmatprep.mubr.bf16.mxu0 %v3000
        %3353 = vmatmul.mubr.bf16.gmra.mrb[0].mxu0 %v2769
        %v3354 = vpop.f32.mrb[0].mxu0
        %v3355 = vadd.f32 %v3089, %v3354
        %v3356 = vpop.f32.mrb[0].mxu0
        %v3357 = vadd.f32 %v3091, %v3356
        %v3358 = vpop.f32.mrb[0].mxu0
        %v3359 = vadd.f32 %v3093, %v3358
        %v3360 = vpop.f32.mrb[0].mxu0
        %v3361 = vadd.f32 %v3095, %v3360
        %3362 = vmatprep.mubr.bf16.mxu0 %v3003
        %3363 = vmatmul.mubr.bf16.gmra.mrb[0].mxu0 %v2771
        %v3364 = vpop.f32.mrb[0].mxu0
        %v3365 = vadd.f32 %v3099, %v3364
        %v3366 = vpop.f32.mrb[0].mxu0
        %v3367 = vadd.f32 %v3101, %v3366
        %v3368 = vpop.f32.mrb[0].mxu0
        %v3369 = vadd.f32 %v3103, %v3368
        %v3370 = vpop.f32.mrb[0].mxu0
        %v3371 = vadd.f32 %v3105, %v3370
        %3372 = vmatprep.mubr.bf16.mxu0 %v3006
        %3373 = vmatmul.mubr.bf16.gmra.mrb[0].mxu0 %v2773
        %v3374 = vpop.f32.mrb[0].mxu0
        %v3375 = vadd.f32 %v3109, %v3374
        %v3376 = vpop.f32.mrb[0].mxu0
        %v3377 = vadd.f32 %v3111, %v3376
        %v3378 = vpop.f32.mrb[0].mxu0
        %v3379 = vadd.f32 %v3113, %v3378
        %v3380 = vpop.f32.mrb[0].mxu0
        %v3381 = vadd.f32 %v3115, %v3380
        %3382 = vmatprep.mubr.bf16.mxu0 %v3009
        %3383 = vmatmul.mubr.bf16.gmra.mrb[0].mxu0 %v2775
        %v3384 = vpop.f32.mrb[0].mxu0
        %v3385 = vadd.f32 %v3119, %v3384
        %v3386 = vpop.f32.mrb[0].mxu0
        %v3387 = vadd.f32 %v3121, %v3386
        %v3388 = vpop.f32.mrb[0].mxu0
        %v3389 = vadd.f32 %v3123, %v3388
        %v3390 = vpop.f32.mrb[0].mxu0
        %v3391 = vadd.f32 %v3125, %v3390
        %3392 = vdwg.mxu0
        %v3393 = vpack.c.bf16 %v2751, %v2749
        %v3394 = vpack.c.bf16 %v2752, %v2750
        %s3395 = scalar_lea.vmem %s3, 480
        %v3396 = vld [vmem:[%s3395] sm:$0xff]
        %v3397 = vld [vmem:[%s3395 + $0x8] sm:$0xff]
        %v3398 = vld [vmem:[%s3395 + $0x10] sm:$0xff]
        %v3399 = vld [vmem:[%s3395 + $0x18] sm:$0xff]
        %v3400 = vld [vmem:[%s3395 + $0x20] sm:$0xff]
        %v3401 = vld [vmem:[%s3395 + $0x28] sm:$0xff]
        %v3402 = vld [vmem:[%s3395 + $0x30] sm:$0xff]
        %v3403 = vld [vmem:[%s3395 + $0x38] sm:$0xff]
        %v3404 = vld [vmem:[%s3395 + $0x40] sm:$0xff]
        %v3405 = vld [vmem:[%s3395 + $0x48] sm:$0xff]
        %v3406 = vld [vmem:[%s3395 + $0x50] sm:$0xff]
        %v3407 = vld [vmem:[%s3395 + $0x58] sm:$0xff]
        %v3408 = vld [vmem:[%s3395 + $0x60] sm:$0xff]
        %v3409 = vld [vmem:[%s3395 + $0x68] sm:$0xff]
        %v3410 = vld [vmem:[%s3395 + $0x70] sm:$0xff]
        %v3411 = vld [vmem:[%s3395 + $0x78] sm:$0xff]
        %v3412 = vld [vmem:[%s3395 + $0x80] sm:$0xff]
        %v3413 = vld [vmem:[%s3395 + $0x88] sm:$0xff]
        %v3414 = vld [vmem:[%s3395 + $0x90] sm:$0xff]
        %v3415 = vld [vmem:[%s3395 + $0x98] sm:$0xff]
        %v3416 = vld [vmem:[%s3395 + $0xa0] sm:$0xff]
        %v3417 = vld [vmem:[%s3395 + $0xa8] sm:$0xff]
        %v3418 = vld [vmem:[%s3395 + $0xb0] sm:$0xff]
        %v3419 = vld [vmem:[%s3395 + $0xb8] sm:$0xff]
        %v3420 = vld [vmem:[%s3395 + $0xc0] sm:$0xff]
        %v3421 = vld [vmem:[%s3395 + $0xc8] sm:$0xff]
        %v3422 = vld [vmem:[%s3395 + $0xd0] sm:$0xff]
        %v3423 = vld [vmem:[%s3395 + $0xd8] sm:$0xff]
        %v3424 = vld [vmem:[%s3395 + $0xe0] sm:$0xff]
        %v3425 = vld [vmem:[%s3395 + $0xe8] sm:$0xff]
        %v3456 = vunpack.c.l.b16 %v3396
        %v3457 = vunpack.c.h.b16 %v3396
        %v3458 = vunpack.c.l.b16 %v3397
        %v3459 = vunpack.c.h.b16 %v3397
        %v3460 = vunpack.c.l.b16 %v3398
        %v3461 = vunpack.c.h.b16 %v3398
        %v3462 = vunpack.c.l.b16 %v3399
        %v3463 = vunpack.c.h.b16 %v3399
        %v3464 = vunpack.c.l.b16 %v3400
        %v3465 = vunpack.c.h.b16 %v3400
        %v3466 = vunpack.c.l.b16 %v3401
        %v3467 = vunpack.c.h.b16 %v3401
        %v3468 = vunpack.c.l.b16 %v3402
        %v3469 = vunpack.c.h.b16 %v3402
        %v3470 = vunpack.c.l.b16 %v3403
        %v3471 = vunpack.c.h.b16 %v3403
        %v3472 = vunpack.c.l.b16 %v3404
        %v3473 = vunpack.c.h.b16 %v3404
        %v3474 = vunpack.c.l.b16 %v3405
        %v3475 = vunpack.c.h.b16 %v3405
        %v3476 = vunpack.c.l.b16 %v3406
        %v3477 = vunpack.c.h.b16 %v3406
        %v3478 = vunpack.c.l.b16 %v3407
        %v3479 = vunpack.c.h.b16 %v3407
        %v3480 = vunpack.c.l.b16 %v3408
        %v3481 = vunpack.c.h.b16 %v3408
        %v3482 = vunpack.c.l.b16 %v3409
        %v3483 = vunpack.c.h.b16 %v3409
        %v3484 = vunpack.c.l.b16 %v3410
        %v3485 = vunpack.c.h.b16 %v3410
        %v3486 = vunpack.c.l.b16 %v3411
        %v3487 = vunpack.c.h.b16 %v3411
        %v3488 = vunpack.c.l.b16 %v3412
        %v3489 = vunpack.c.h.b16 %v3412
        %v3490 = vunpack.c.l.b16 %v3413
        %v3491 = vunpack.c.h.b16 %v3413
        %v3492 = vunpack.c.l.b16 %v3414
        %v3493 = vunpack.c.h.b16 %v3414
        %v3494 = vunpack.c.l.b16 %v3415
        %v3495 = vunpack.c.h.b16 %v3415
        %v3496 = vunpack.c.l.b16 %v3416
        %v3497 = vunpack.c.h.b16 %v3416
        %v3498 = vunpack.c.l.b16 %v3417
        %v3499 = vunpack.c.h.b16 %v3417
        %v3500 = vunpack.c.l.b16 %v3418
        %v3501 = vunpack.c.h.b16 %v3418
        %v3502 = vunpack.c.l.b16 %v3419
        %v3503 = vunpack.c.h.b16 %v3419
        %v3504 = vunpack.c.l.b16 %v3420
        %v3505 = vunpack.c.h.b16 %v3420
        %v3506 = vunpack.c.l.b16 %v3421
        %v3507 = vunpack.c.h.b16 %v3421
        %v3508 = vunpack.c.l.b16 %v3422
        %v3509 = vunpack.c.h.b16 %v3422
        %v3510 = vunpack.c.l.b16 %v3423
        %v3511 = vunpack.c.h.b16 %v3423
        %v3512 = vunpack.c.l.b16 %v3424
        %v3513 = vunpack.c.h.b16 %v3424
        %v3514 = vunpack.c.l.b16 %v3425
        %v3515 = vunpack.c.h.b16 %v3425
        %v3516 = vpack.c.b16 %v3458, %v3456
        %v3517 = vpack.c.b16 %v3459, %v3457
        %v3518 = vpack.c.b16 %v3462, %v3460
        %v3519 = vpack.c.b16 %v3463, %v3461
        %v3520 = vpack.c.b16 %v3466, %v3464
        %v3521 = vpack.c.b16 %v3467, %v3465
        %v3522 = vpack.c.b16 %v3470, %v3468
        %v3523 = vpack.c.b16 %v3471, %v3469
        %v3524 = vpack.c.b16 %v3474, %v3472
        %v3525 = vpack.c.b16 %v3475, %v3473
        %v3526 = vpack.c.b16 %v3478, %v3476
        %v3527 = vpack.c.b16 %v3479, %v3477
        %v3528 = vpack.c.b16 %v3482, %v3480
        %v3529 = vpack.c.b16 %v3483, %v3481
        %v3530 = vpack.c.b16 %v3486, %v3484
        %v3531 = vpack.c.b16 %v3487, %v3485
        %v3532 = vpack.c.b16 %v3490, %v3488
        %v3533 = vpack.c.b16 %v3491, %v3489
        %v3534 = vpack.c.b16 %v3494, %v3492
        %v3535 = vpack.c.b16 %v3495, %v3493
        %v3536 = vpack.c.b16 %v3498, %v3496
        %v3537 = vpack.c.b16 %v3499, %v3497
        %v3538 = vpack.c.b16 %v3502, %v3500
        %v3539 = vpack.c.b16 %v3503, %v3501
        %v3540 = vpack.c.b16 %v3506, %v3504
        %v3541 = vpack.c.b16 %v3507, %v3505
        %v3542 = vpack.c.b16 %v3510, %v3508
        %v3543 = vpack.c.b16 %v3511, %v3509
        %v3544 = vpack.c.b16 %v3514, %v3512
        %v3545 = vpack.c.b16 %v3515, %v3513
        %v3577 = vsel %vm1157, %v3394, 0
        %3579 = vmatprep.subr.bf16.mxu0 %v3517
        %3580 = vmatpush1.bf16.msra.mxu0 %v3516
        %3581 = vmatprep.subr.bf16.mxu0 %v3519
        %3582 = vmatpush1.bf16.msra.mxu0 %v3518
        %3583 = vmatprep.subr.bf16.mxu0 %v3521
        %3584 = vmatpush1.bf16.msra.mxu0 %v3520
        %3585 = vmatprep.subr.bf16.mxu0 %v3523
        %3586 = vmatpush1.bf16.msra.mxu0 %v3522
        %3587 = vmatprep.subr.bf16.mxu0 %v3525
        %3588 = vmatpush1.bf16.msra.mxu0 %v3524
        %3589 = vmatprep.subr.bf16.mxu0 %v3527
        %3590 = vmatpush1.bf16.msra.mxu0 %v3526
        %3591 = vmatprep.subr.bf16.mxu0 %v3529
        %3592 = vmatpush1.bf16.msra.mxu0 %v3528
        %3593 = vmatprep.subr.bf16.mxu0 %v3531
        %3594 = vmatpush1.bf16.msra.mxu0 %v3530
        %3595 = vmatprep.subr.bf16.mxu0 %v3533
        %3596 = vmatpush1.bf16.msra.mxu0 %v3532
        %3597 = vmatprep.subr.bf16.mxu0 %v3535
        %3598 = vmatpush1.bf16.msra.mxu0 %v3534
        %3599 = vmatprep.subr.bf16.mxu0 %v3537
        %3600 = vmatpush1.bf16.msra.mxu0 %v3536
        %3601 = vmatprep.subr.bf16.mxu0 %v3539
        %3602 = vmatpush1.bf16.msra.mxu0 %v3538
        %3603 = vmatprep.subr.bf16.mxu0 %v3541
        %3604 = vmatpush1.bf16.msra.mxu0 %v3540
        %3605 = vmatprep.subr.bf16.mxu0 %v3543
        %3606 = vmatpush1.bf16.msra.mxu0 %v3542
        %3607 = vmatprep.subr.bf16.mxu0 %v3545
        %3608 = vmatpush1.bf16.msra.mxu0 %v3544
        %3609 = vmatprep.subr.bf16.mxu0 0
        %3610 = vmatpush1.bf16.msra.mxu0 0
        %3611 = vmatprep.mubr.bf16.mxu0 %v2994
        %3612 = vmatmul.mubr.bf16.gmra.mrb[0].mxu0 %v2765
        %v3613 = vpop.f32.mrb[0].mxu0
        %v3614 = vadd.f32 0.0, %v3613
        %v3615 = vpop.f32.mrb[0].mxu0
        %v3616 = vadd.f32 0.0, %v3615
        %v3617 = vpop.f32.mrb[0].mxu0
        %v3618 = vadd.f32 0.0, %v3617
        %v3619 = vpop.f32.mrb[0].mxu0
        %v3620 = vadd.f32 0.0, %v3619
        %3621 = vmatprep.mubr.bf16.mxu0 %v2997
        %3622 = vmatmul.mubr.bf16.gmra.mrb[0].mxu0 %v2767
        %v3623 = vpop.f32.mrb[0].mxu0
        %v3624 = vadd.f32 0.0, %v3623
        %v3625 = vpop.f32.mrb[0].mxu0
        %v3626 = vadd.f32 0.0, %v3625
        %v3627 = vpop.f32.mrb[0].mxu0
        %v3628 = vadd.f32 0.0, %v3627
        %v3629 = vpop.f32.mrb[0].mxu0
        %v3630 = vadd.f32 0.0, %v3629
        %3631 = vmatprep.mubr.bf16.mxu0 %v3000
        %3632 = vmatmul.mubr.bf16.gmra.mrb[0].mxu0 %v2769
        %v3633 = vpop.f32.mrb[0].mxu0
        %v3634 = vadd.f32 0.0, %v3633
        %v3635 = vpop.f32.mrb[0].mxu0
        %v3636 = vadd.f32 0.0, %v3635
        %v3637 = vpop.f32.mrb[0].mxu0
        %v3638 = vadd.f32 0.0, %v3637
        %v3639 = vpop.f32.mrb[0].mxu0
        %v3640 = vadd.f32 0.0, %v3639
        %3641 = vmatprep.mubr.bf16.mxu0 %v3003
        %3642 = vmatmul.mubr.bf16.gmra.mrb[0].mxu0 %v2771
        %v3643 = vpop.f32.mrb[0].mxu0
        %v3644 = vadd.f32 0.0, %v3643
        %v3645 = vpop.f32.mrb[0].mxu0
        %v3646 = vadd.f32 0.0, %v3645
        %v3647 = vpop.f32.mrb[0].mxu0
        %v3648 = vadd.f32 0.0, %v3647
        %v3649 = vpop.f32.mrb[0].mxu0
        %v3650 = vadd.f32 0.0, %v3649
        %3651 = vmatprep.mubr.bf16.mxu0 %v3006
        %3652 = vmatmul.mubr.bf16.gmra.mrb[0].mxu0 %v2773
        %v3653 = vpop.f32.mrb[0].mxu0
        %v3654 = vadd.f32 0.0, %v3653
        %v3655 = vpop.f32.mrb[0].mxu0
        %v3656 = vadd.f32 0.0, %v3655
        %v3657 = vpop.f32.mrb[0].mxu0
        %v3658 = vadd.f32 0.0, %v3657
        %v3659 = vpop.f32.mrb[0].mxu0
        %v3660 = vadd.f32 0.0, %v3659
        %3661 = vmatprep.mubr.bf16.mxu0 %v3009
        %3662 = vmatmul.mubr.bf16.gmra.mrb[0].mxu0 %v2775
        %v3663 = vpop.f32.mrb[0].mxu0
        %v3664 = vadd.f32 0.0, %v3663
        %v3665 = vpop.f32.mrb[0].mxu0
        %v3666 = vadd.f32 0.0, %v3665
        %v3667 = vpop.f32.mrb[0].mxu0
        %v3668 = vadd.f32 0.0, %v3667
        %v3669 = vpop.f32.mrb[0].mxu0
        %v3670 = vadd.f32 0.0, %v3669
        %3671 = vmatprep.mubr.bf16.mxu0 %v3012
        %3672 = vmatmul.mubr.bf16.gmra.mrb[0].mxu0 %v2807
        %v3673 = vpop.f32.mrb[0].mxu0
        %v3674 = vadd.f32 0.0, %v3673
        %v3675 = vpop.f32.mrb[0].mxu0
        %v3676 = vadd.f32 0.0, %v3675
        %v3677 = vpop.f32.mrb[0].mxu0
        %v3678 = vadd.f32 0.0, %v3677
        %v3679 = vpop.f32.mrb[0].mxu0
        %v3680 = vadd.f32 0.0, %v3679
        %3681 = vmatprep.mubr.bf16.mxu0 %v3577
        %3682 = vmatmul.mubr.bf16.gmra.mrb[0].mxu0 %v3393
        %v3683 = vpop.f32.mrb[0].mxu0
        %v3684 = vadd.f32 0.0, %v3683
        %v3685 = vpop.f32.mrb[0].mxu0
        %v3686 = vadd.f32 0.0, %v3685
        %v3687 = vpop.f32.mrb[0].mxu0
        %v3688 = vadd.f32 0.0, %v3687
        %v3689 = vpop.f32.mrb[0].mxu0
        %v3690 = vadd.f32 0.0, %v3689
        %3691 = vdwg.mxu0
        %v3692 = vadd.f32 %v3315, %v3614
        %v3693 = vadd.f32 %v3317, %v3616
        %v3694 = vadd.f32 %v3319, %v3618
        %v3695 = vadd.f32 %v3321, %v3620
        %v3696 = vadd.f32 %v3325, %v3624
        %v3697 = vadd.f32 %v3327, %v3626
        %v3698 = vadd.f32 %v3329, %v3628
        %v3699 = vadd.f32 %v3331, %v3630
        %v3700 = vadd.f32 %v3335, %v3634
        %v3701 = vadd.f32 %v3337, %v3636
        %v3702 = vadd.f32 %v3339, %v3638
        %v3703 = vadd.f32 %v3341, %v3640
        %v3704 = vadd.f32 %v3345, %v3644
        %v3705 = vadd.f32 %v3347, %v3646
        %v3706 = vadd.f32 %v3349, %v3648
        %v3707 = vadd.f32 %v3351, %v3650
        %v3708 = vadd.f32 %v3355, %v3654
        %v3709 = vadd.f32 %v3357, %v3656
        %v3710 = vadd.f32 %v3359, %v3658
        %v3711 = vadd.f32 %v3361, %v3660
        %v3712 = vadd.f32 %v3365, %v3664
        %v3713 = vadd.f32 %v3367, %v3666
        %v3714 = vadd.f32 %v3369, %v3668
        %v3715 = vadd.f32 %v3371, %v3670
        %v3716 = vadd.f32 %v3375, %v3674
        %v3717 = vadd.f32 %v3377, %v3676
        %v3718 = vadd.f32 %v3379, %v3678
        %v3719 = vadd.f32 %v3381, %v3680
        %v3720 = vadd.f32 %v3385, %v3684
        %v3721 = vadd.f32 %v3387, %v3686
        %v3722 = vadd.f32 %v3389, %v3688
        %v3723 = vadd.f32 %v3391, %v3690
        %v3724 = vpack.c.bf16 %v2755, %v2753
        %v3725 = vpack.c.bf16 %v2756, %v2754
        %s3726 = scalar_lea.vmem %s3, 720
        %v3727 = vld [vmem:[%s3726] sm:$0xff]
        %v3728 = vld [vmem:[%s3726 + $0x8] sm:$0xff]
        %v3729 = vld [vmem:[%s3726 + $0x10] sm:$0xff]
        %v3730 = vld [vmem:[%s3726 + $0x18] sm:$0xff]
        %v3731 = vld [vmem:[%s3726 + $0x20] sm:$0xff]
        %v3732 = vld [vmem:[%s3726 + $0x28] sm:$0xff]
        %v3733 = vld [vmem:[%s3726 + $0x30] sm:$0xff]
        %v3734 = vld [vmem:[%s3726 + $0x38] sm:$0xff]
        %v3735 = vld [vmem:[%s3726 + $0x40] sm:$0xff]
        %v3736 = vld [vmem:[%s3726 + $0x48] sm:$0xff]
        %v3737 = vld [vmem:[%s3726 + $0x50] sm:$0xff]
        %v3738 = vld [vmem:[%s3726 + $0x58] sm:$0xff]
        %v3739 = vld [vmem:[%s3726 + $0x60] sm:$0xff]
        %v3740 = vld [vmem:[%s3726 + $0x68] sm:$0xff]
        %v3741 = vld [vmem:[%s3726 + $0x70] sm:$0xff]
        %v3742 = vld [vmem:[%s3726 + $0x78] sm:$0xff]
        %v3743 = vld [vmem:[%s3726 + $0x80] sm:$0xff]
        %v3744 = vld [vmem:[%s3726 + $0x88] sm:$0xff]
        %v3745 = vld [vmem:[%s3726 + $0x90] sm:$0xff]
        %v3746 = vld [vmem:[%s3726 + $0x98] sm:$0xff]
        %v3747 = vld [vmem:[%s3726 + $0xa0] sm:$0xff]
        %v3748 = vld [vmem:[%s3726 + $0xa8] sm:$0xff]
        %v3749 = vld [vmem:[%s3726 + $0xb0] sm:$0xff]
        %v3750 = vld [vmem:[%s3726 + $0xb8] sm:$0xff]
        %v3751 = vld [vmem:[%s3726 + $0xc0] sm:$0xff]
        %v3752 = vld [vmem:[%s3726 + $0xc8] sm:$0xff]
        %v3753 = vld [vmem:[%s3726 + $0xd0] sm:$0xff]
        %v3754 = vld [vmem:[%s3726 + $0xd8] sm:$0xff]
        %v3755 = vld [vmem:[%s3726 + $0xe0] sm:$0xff]
        %v3756 = vld [vmem:[%s3726 + $0xe8] sm:$0xff]
        %v3787 = vunpack.c.l.b16 %v3727
        %v3788 = vunpack.c.h.b16 %v3727
        %v3789 = vunpack.c.l.b16 %v3728
        %v3790 = vunpack.c.h.b16 %v3728
        %v3791 = vunpack.c.l.b16 %v3729
        %v3792 = vunpack.c.h.b16 %v3729
        %v3793 = vunpack.c.l.b16 %v3730
        %v3794 = vunpack.c.h.b16 %v3730
        %v3795 = vunpack.c.l.b16 %v3731
        %v3796 = vunpack.c.h.b16 %v3731
        %v3797 = vunpack.c.l.b16 %v3732
        %v3798 = vunpack.c.h.b16 %v3732
        %v3799 = vunpack.c.l.b16 %v3733
        %v3800 = vunpack.c.h.b16 %v3733
        %v3801 = vunpack.c.l.b16 %v3734
        %v3802 = vunpack.c.h.b16 %v3734
        %v3803 = vunpack.c.l.b16 %v3735
        %v3804 = vunpack.c.h.b16 %v3735
        %v3805 = vunpack.c.l.b16 %v3736
        %v3806 = vunpack.c.h.b16 %v3736
        %v3807 = vunpack.c.l.b16 %v3737
        %v3808 = vunpack.c.h.b16 %v3737
        %v3809 = vunpack.c.l.b16 %v3738
        %v3810 = vunpack.c.h.b16 %v3738
        %v3811 = vunpack.c.l.b16 %v3739
        %v3812 = vunpack.c.h.b16 %v3739
        %v3813 = vunpack.c.l.b16 %v3740
        %v3814 = vunpack.c.h.b16 %v3740
        %v3815 = vunpack.c.l.b16 %v3741
        %v3816 = vunpack.c.h.b16 %v3741
        %v3817 = vunpack.c.l.b16 %v3742
        %v3818 = vunpack.c.h.b16 %v3742
        %v3819 = vunpack.c.l.b16 %v3743
        %v3820 = vunpack.c.h.b16 %v3743
        %v3821 = vunpack.c.l.b16 %v3744
        %v3822 = vunpack.c.h.b16 %v3744
        %v3823 = vunpack.c.l.b16 %v3745
        %v3824 = vunpack.c.h.b16 %v3745
        %v3825 = vunpack.c.l.b16 %v3746
        %v3826 = vunpack.c.h.b16 %v3746
        %v3827 = vunpack.c.l.b16 %v3747
        %v3828 = vunpack.c.h.b16 %v3747
        %v3829 = vunpack.c.l.b16 %v3748
        %v3830 = vunpack.c.h.b16 %v3748
        %v3831 = vunpack.c.l.b16 %v3749
        %v3832 = vunpack.c.h.b16 %v3749
        %v3833 = vunpack.c.l.b16 %v3750
        %v3834 = vunpack.c.h.b16 %v3750
        %v3835 = vunpack.c.l.b16 %v3751
        %v3836 = vunpack.c.h.b16 %v3751
        %v3837 = vunpack.c.l.b16 %v3752
        %v3838 = vunpack.c.h.b16 %v3752
        %v3839 = vunpack.c.l.b16 %v3753
        %v3840 = vunpack.c.h.b16 %v3753
        %v3841 = vunpack.c.l.b16 %v3754
        %v3842 = vunpack.c.h.b16 %v3754
        %v3843 = vunpack.c.l.b16 %v3755
        %v3844 = vunpack.c.h.b16 %v3755
        %v3845 = vunpack.c.l.b16 %v3756
        %v3846 = vunpack.c.h.b16 %v3756
        %v3847 = vpack.c.b16 %v3789, %v3787
        %v3848 = vpack.c.b16 %v3790, %v3788
        %v3849 = vpack.c.b16 %v3793, %v3791
        %v3850 = vpack.c.b16 %v3794, %v3792
        %v3851 = vpack.c.b16 %v3797, %v3795
        %v3852 = vpack.c.b16 %v3798, %v3796
        %v3853 = vpack.c.b16 %v3801, %v3799
        %v3854 = vpack.c.b16 %v3802, %v3800
        %v3855 = vpack.c.b16 %v3805, %v3803
        %v3856 = vpack.c.b16 %v3806, %v3804
        %v3857 = vpack.c.b16 %v3809, %v3807
        %v3858 = vpack.c.b16 %v3810, %v3808
        %v3859 = vpack.c.b16 %v3813, %v3811
        %v3860 = vpack.c.b16 %v3814, %v3812
        %v3861 = vpack.c.b16 %v3817, %v3815
        %v3862 = vpack.c.b16 %v3818, %v3816
        %v3863 = vpack.c.b16 %v3821, %v3819
        %v3864 = vpack.c.b16 %v3822, %v3820
        %v3865 = vpack.c.b16 %v3825, %v3823
        %v3866 = vpack.c.b16 %v3826, %v3824
        %v3867 = vpack.c.b16 %v3829, %v3827
        %v3868 = vpack.c.b16 %v3830, %v3828
        %v3869 = vpack.c.b16 %v3833, %v3831
        %v3870 = vpack.c.b16 %v3834, %v3832
        %v3871 = vpack.c.b16 %v3837, %v3835
        %v3872 = vpack.c.b16 %v3838, %v3836
        %v3873 = vpack.c.b16 %v3841, %v3839
        %v3874 = vpack.c.b16 %v3842, %v3840
        %v3875 = vpack.c.b16 %v3845, %v3843
        %v3876 = vpack.c.b16 %v3846, %v3844
        %v3908 = vsel %vm1157, %v3725, 0
        %3910 = vmatprep.subr.bf16.mxu0 %v3848
        %3911 = vmatpush1.bf16.msra.mxu0 %v3847
        %3912 = vmatprep.subr.bf16.mxu0 %v3850
        %3913 = vmatpush1.bf16.msra.mxu0 %v3849
        %3914 = vmatprep.subr.bf16.mxu0 %v3852
        %3915 = vmatpush1.bf16.msra.mxu0 %v3851
        %3916 = vmatprep.subr.bf16.mxu0 %v3854
        %3917 = vmatpush1.bf16.msra.mxu0 %v3853
        %3918 = vmatprep.subr.bf16.mxu0 %v3856
        %3919 = vmatpush1.bf16.msra.mxu0 %v3855
        %3920 = vmatprep.subr.bf16.mxu0 %v3858
        %3921 = vmatpush1.bf16.msra.mxu0 %v3857
        %3922 = vmatprep.subr.bf16.mxu0 %v3860
        %3923 = vmatpush1.bf16.msra.mxu0 %v3859
        %3924 = vmatprep.subr.bf16.mxu0 %v3862
        %3925 = vmatpush1.bf16.msra.mxu0 %v3861
        %3926 = vmatprep.subr.bf16.mxu0 %v3864
        %3927 = vmatpush1.bf16.msra.mxu0 %v3863
        %3928 = vmatprep.subr.bf16.mxu0 %v3866
        %3929 = vmatpush1.bf16.msra.mxu0 %v3865
        %3930 = vmatprep.subr.bf16.mxu0 %v3868
        %3931 = vmatpush1.bf16.msra.mxu0 %v3867
        %3932 = vmatprep.subr.bf16.mxu0 %v3870
        %3933 = vmatpush1.bf16.msra.mxu0 %v3869
        %3934 = vmatprep.subr.bf16.mxu0 %v3872
        %3935 = vmatpush1.bf16.msra.mxu0 %v3871
        %3936 = vmatprep.subr.bf16.mxu0 %v3874
        %3937 = vmatpush1.bf16.msra.mxu0 %v3873
        %3938 = vmatprep.subr.bf16.mxu0 %v3876
        %3939 = vmatpush1.bf16.msra.mxu0 %v3875
        %3940 = vmatprep.subr.bf16.mxu0 0
        %3941 = vmatpush1.bf16.msra.mxu0 0
        %3942 = vmatprep.mubr.bf16.mxu0 %v2997
        %3943 = vmatmul.mubr.bf16.gmra.mrb[0].mxu0 %v2767
        %v3944 = vpop.f32.mrb[0].mxu0
        %v3945 = vadd.f32 0.0, %v3944
        %v3946 = vpop.f32.mrb[0].mxu0
        %v3947 = vadd.f32 0.0, %v3946
        %v3948 = vpop.f32.mrb[0].mxu0
        %v3949 = vadd.f32 0.0, %v3948
        %v3950 = vpop.f32.mrb[0].mxu0
        %v3951 = vadd.f32 0.0, %v3950
        %3952 = vmatprep.mubr.bf16.mxu0 %v3000
        %3953 = vmatmul.mubr.bf16.gmra.mrb[0].mxu0 %v2769
        %v3954 = vpop.f32.mrb[0].mxu0
        %v3955 = vadd.f32 0.0, %v3954
        %v3956 = vpop.f32.mrb[0].mxu0
        %v3957 = vadd.f32 0.0, %v3956
        %v3958 = vpop.f32.mrb[0].mxu0
        %v3959 = vadd.f32 0.0, %v3958
        %v3960 = vpop.f32.mrb[0].mxu0
        %v3961 = vadd.f32 0.0, %v3960
        %3962 = vmatprep.mubr.bf16.mxu0 %v3003
        %3963 = vmatmul.mubr.bf16.gmra.mrb[0].mxu0 %v2771
        %v3964 = vpop.f32.mrb[0].mxu0
        %v3965 = vadd.f32 0.0, %v3964
        %v3966 = vpop.f32.mrb[0].mxu0
        %v3967 = vadd.f32 0.0, %v3966
        %v3968 = vpop.f32.mrb[0].mxu0
        %v3969 = vadd.f32 0.0, %v3968
        %v3970 = vpop.f32.mrb[0].mxu0
        %v3971 = vadd.f32 0.0, %v3970
        %3972 = vmatprep.mubr.bf16.mxu0 %v3006
        %3973 = vmatmul.mubr.bf16.gmra.mrb[0].mxu0 %v2773
        %v3974 = vpop.f32.mrb[0].mxu0
        %v3975 = vadd.f32 0.0, %v3974
        %v3976 = vpop.f32.mrb[0].mxu0
        %v3977 = vadd.f32 0.0, %v3976
        %v3978 = vpop.f32.mrb[0].mxu0
        %v3979 = vadd.f32 0.0, %v3978
        %v3980 = vpop.f32.mrb[0].mxu0
        %v3981 = vadd.f32 0.0, %v3980
        %3982 = vmatprep.mubr.bf16.mxu0 %v3009
        %3983 = vmatmul.mubr.bf16.gmra.mrb[0].mxu0 %v2775
        %v3984 = vpop.f32.mrb[0].mxu0
        %v3985 = vadd.f32 0.0, %v3984
        %v3986 = vpop.f32.mrb[0].mxu0
        %v3987 = vadd.f32 0.0, %v3986
        %v3988 = vpop.f32.mrb[0].mxu0
        %v3989 = vadd.f32 0.0, %v3988
        %v3990 = vpop.f32.mrb[0].mxu0
        %v3991 = vadd.f32 0.0, %v3990
        %3992 = vmatprep.mubr.bf16.mxu0 %v3012
        %3993 = vmatmul.mubr.bf16.gmra.mrb[0].mxu0 %v2807
        %v3994 = vpop.f32.mrb[0].mxu0
        %v3995 = vadd.f32 0.0, %v3994
        %v3996 = vpop.f32.mrb[0].mxu0
        %v3997 = vadd.f32 0.0, %v3996
        %v3998 = vpop.f32.mrb[0].mxu0
        %v3999 = vadd.f32 0.0, %v3998
        %v4000 = vpop.f32.mrb[0].mxu0
        %v4001 = vadd.f32 0.0, %v4000
        %4002 = vmatprep.mubr.bf16.mxu0 %v3577
        %4003 = vmatmul.mubr.bf16.gmra.mrb[0].mxu0 %v3393
        %v4004 = vpop.f32.mrb[0].mxu0
        %v4005 = vadd.f32 0.0, %v4004
        %v4006 = vpop.f32.mrb[0].mxu0
        %v4007 = vadd.f32 0.0, %v4006
        %v4008 = vpop.f32.mrb[0].mxu0
        %v4009 = vadd.f32 0.0, %v4008
        %v4010 = vpop.f32.mrb[0].mxu0
        %v4011 = vadd.f32 0.0, %v4010
        %4012 = vmatprep.mubr.bf16.mxu0 %v3908
        %4013 = vmatmul.mubr.bf16.gmra.mrb[0].mxu0 %v3724
        %v4014 = vpop.f32.mrb[0].mxu0
        %v4015 = vadd.f32 0.0, %v4014
        %v4016 = vpop.f32.mrb[0].mxu0
        %v4017 = vadd.f32 0.0, %v4016
        %v4018 = vpop.f32.mrb[0].mxu0
        %v4019 = vadd.f32 0.0, %v4018
        %v4020 = vpop.f32.mrb[0].mxu0
        %v4021 = vadd.f32 0.0, %v4020
        %4022 = vdwg.mxu0
        %v4023 = vadd.f32 %v3692, %v3945
        %v4024 = vadd.f32 %v3693, %v3947
        %v4025 = vadd.f32 %v3694, %v3949
        %v4026 = vadd.f32 %v3695, %v3951
        %v4027 = vadd.f32 %v3696, %v3955
        %v4028 = vadd.f32 %v3697, %v3957
        %v4029 = vadd.f32 %v3698, %v3959
        %v4030 = vadd.f32 %v3699, %v3961
        %v4031 = vadd.f32 %v3700, %v3965
        %v4032 = vadd.f32 %v3701, %v3967
        %v4033 = vadd.f32 %v3702, %v3969
        %v4034 = vadd.f32 %v3703, %v3971
        %v4035 = vadd.f32 %v3704, %v3975
        %v4036 = vadd.f32 %v3705, %v3977
        %v4037 = vadd.f32 %v3706, %v3979
        %v4038 = vadd.f32 %v3707, %v3981
        %v4039 = vadd.f32 %v3708, %v3985
        %v4040 = vadd.f32 %v3709, %v3987
        %v4041 = vadd.f32 %v3710, %v3989
        %v4042 = vadd.f32 %v3711, %v3991
        %v4043 = vadd.f32 %v3712, %v3995
        %v4044 = vadd.f32 %v3713, %v3997
        %v4045 = vadd.f32 %v3714, %v3999
        %v4046 = vadd.f32 %v3715, %v4001
        %v4047 = vadd.f32 %v3716, %v4005
        %v4048 = vadd.f32 %v3717, %v4007
        %v4049 = vadd.f32 %v3718, %v4009
        %v4050 = vadd.f32 %v3719, %v4011
        %v4051 = vadd.f32 %v3720, %v4015
        %v4052 = vadd.f32 %v3721, %v4017
        %v4053 = vadd.f32 %v3722, %v4019
        %v4054 = vadd.f32 %v3723, %v4021
        %v4055 = vpack.c.bf16 %v2759, %v2757
        %v4056 = vpack.c.bf16 %v2760, %v2758
        %s4057 = scalar_lea.vmem %s3, 960
        %v4058 = vld [vmem:[%s4057] sm:$0xff]
        %v4059 = vld [vmem:[%s4057 + $0x8] sm:$0xff]
        %v4060 = vld [vmem:[%s4057 + $0x10] sm:$0xff]
        %v4061 = vld [vmem:[%s4057 + $0x18] sm:$0xff]
        %v4062 = vld [vmem:[%s4057 + $0x20] sm:$0xff]
        %v4063 = vld [vmem:[%s4057 + $0x28] sm:$0xff]
        %v4064 = vld [vmem:[%s4057 + $0x30] sm:$0xff]
        %v4065 = vld [vmem:[%s4057 + $0x38] sm:$0xff]
        %v4066 = vld [vmem:[%s4057 + $0x40] sm:$0xff]
        %v4067 = vld [vmem:[%s4057 + $0x48] sm:$0xff]
        %v4068 = vld [vmem:[%s4057 + $0x50] sm:$0xff]
        %v4069 = vld [vmem:[%s4057 + $0x58] sm:$0xff]
        %v4070 = vld [vmem:[%s4057 + $0x60] sm:$0xff]
        %v4071 = vld [vmem:[%s4057 + $0x68] sm:$0xff]
        %v4072 = vld [vmem:[%s4057 + $0x70] sm:$0xff]
        %v4073 = vld [vmem:[%s4057 + $0x78] sm:$0xff]
        %v4074 = vld [vmem:[%s4057 + $0x80] sm:$0xff]
        %v4075 = vld [vmem:[%s4057 + $0x88] sm:$0xff]
        %v4076 = vld [vmem:[%s4057 + $0x90] sm:$0xff]
        %v4077 = vld [vmem:[%s4057 + $0x98] sm:$0xff]
        %v4078 = vld [vmem:[%s4057 + $0xa0] sm:$0xff]
        %v4079 = vld [vmem:[%s4057 + $0xa8] sm:$0xff]
        %v4080 = vld [vmem:[%s4057 + $0xb0] sm:$0xff]
        %v4081 = vld [vmem:[%s4057 + $0xb8] sm:$0xff]
        %v4082 = vld [vmem:[%s4057 + $0xc0] sm:$0xff]
        %v4083 = vld [vmem:[%s4057 + $0xc8] sm:$0xff]
        %v4084 = vld [vmem:[%s4057 + $0xd0] sm:$0xff]
        %v4085 = vld [vmem:[%s4057 + $0xd8] sm:$0xff]
        %v4086 = vld [vmem:[%s4057 + $0xe0] sm:$0xff]
        %v4087 = vld [vmem:[%s4057 + $0xe8] sm:$0xff]
        %v4118 = vunpack.c.l.b16 %v4058
        %v4119 = vunpack.c.h.b16 %v4058
        %v4120 = vunpack.c.l.b16 %v4059
        %v4121 = vunpack.c.h.b16 %v4059
        %v4122 = vunpack.c.l.b16 %v4060
        %v4123 = vunpack.c.h.b16 %v4060
        %v4124 = vunpack.c.l.b16 %v4061
        %v4125 = vunpack.c.h.b16 %v4061
        %v4126 = vunpack.c.l.b16 %v4062
        %v4127 = vunpack.c.h.b16 %v4062
        %v4128 = vunpack.c.l.b16 %v4063
        %v4129 = vunpack.c.h.b16 %v4063
        %v4130 = vunpack.c.l.b16 %v4064
        %v4131 = vunpack.c.h.b16 %v4064
        %v4132 = vunpack.c.l.b16 %v4065
        %v4133 = vunpack.c.h.b16 %v4065
        %v4134 = vunpack.c.l.b16 %v4066
        %v4135 = vunpack.c.h.b16 %v4066
        %v4136 = vunpack.c.l.b16 %v4067
        %v4137 = vunpack.c.h.b16 %v4067
        %v4138 = vunpack.c.l.b16 %v4068
        %v4139 = vunpack.c.h.b16 %v4068
        %v4140 = vunpack.c.l.b16 %v4069
        %v4141 = vunpack.c.h.b16 %v4069
        %v4142 = vunpack.c.l.b16 %v4070
        %v4143 = vunpack.c.h.b16 %v4070
        %v4144 = vunpack.c.l.b16 %v4071
        %v4145 = vunpack.c.h.b16 %v4071
        %v4146 = vunpack.c.l.b16 %v4072
        %v4147 = vunpack.c.h.b16 %v4072
        %v4148 = vunpack.c.l.b16 %v4073
        %v4149 = vunpack.c.h.b16 %v4073
        %v4150 = vunpack.c.l.b16 %v4074
        %v4151 = vunpack.c.h.b16 %v4074
        %v4152 = vunpack.c.l.b16 %v4075
        %v4153 = vunpack.c.h.b16 %v4075
        %v4154 = vunpack.c.l.b16 %v4076
        %v4155 = vunpack.c.h.b16 %v4076
        %v4156 = vunpack.c.l.b16 %v4077
        %v4157 = vunpack.c.h.b16 %v4077
        %v4158 = vunpack.c.l.b16 %v4078
        %v4159 = vunpack.c.h.b16 %v4078
        %v4160 = vunpack.c.l.b16 %v4079
        %v4161 = vunpack.c.h.b16 %v4079
        %v4162 = vunpack.c.l.b16 %v4080
        %v4163 = vunpack.c.h.b16 %v4080
        %v4164 = vunpack.c.l.b16 %v4081
        %v4165 = vunpack.c.h.b16 %v4081
        %v4166 = vunpack.c.l.b16 %v4082
        %v4167 = vunpack.c.h.b16 %v4082
        %v4168 = vunpack.c.l.b16 %v4083
        %v4169 = vunpack.c.h.b16 %v4083
        %v4170 = vunpack.c.l.b16 %v4084
        %v4171 = vunpack.c.h.b16 %v4084
        %v4172 = vunpack.c.l.b16 %v4085
        %v4173 = vunpack.c.h.b16 %v4085
        %v4174 = vunpack.c.l.b16 %v4086
        %v4175 = vunpack.c.h.b16 %v4086
        %v4176 = vunpack.c.l.b16 %v4087
        %v4177 = vunpack.c.h.b16 %v4087
        %v4178 = vpack.c.b16 %v4120, %v4118
        %v4179 = vpack.c.b16 %v4121, %v4119
        %v4180 = vpack.c.b16 %v4124, %v4122
        %v4181 = vpack.c.b16 %v4125, %v4123
        %v4182 = vpack.c.b16 %v4128, %v4126
        %v4183 = vpack.c.b16 %v4129, %v4127
        %v4184 = vpack.c.b16 %v4132, %v4130
        %v4185 = vpack.c.b16 %v4133, %v4131
        %v4186 = vpack.c.b16 %v4136, %v4134
        %v4187 = vpack.c.b16 %v4137, %v4135
        %v4188 = vpack.c.b16 %v4140, %v4138
        %v4189 = vpack.c.b16 %v4141, %v4139
        %v4190 = vpack.c.b16 %v4144, %v4142
        %v4191 = vpack.c.b16 %v4145, %v4143
        %v4192 = vpack.c.b16 %v4148, %v4146
        %v4193 = vpack.c.b16 %v4149, %v4147
        %v4194 = vpack.c.b16 %v4152, %v4150
        %v4195 = vpack.c.b16 %v4153, %v4151
        %v4196 = vpack.c.b16 %v4156, %v4154
        %v4197 = vpack.c.b16 %v4157, %v4155
        %v4198 = vpack.c.b16 %v4160, %v4158
        %v4199 = vpack.c.b16 %v4161, %v4159
        %v4200 = vpack.c.b16 %v4164, %v4162
        %v4201 = vpack.c.b16 %v4165, %v4163
        %v4202 = vpack.c.b16 %v4168, %v4166
        %v4203 = vpack.c.b16 %v4169, %v4167
        %v4204 = vpack.c.b16 %v4172, %v4170
        %v4205 = vpack.c.b16 %v4173, %v4171
        %v4206 = vpack.c.b16 %v4176, %v4174
        %v4207 = vpack.c.b16 %v4177, %v4175
        %v4239 = vsel %vm1157, %v4056, 0
        %4241 = vmatprep.subr.bf16.mxu0 %v4179
        %4242 = vmatpush1.bf16.msra.mxu0 %v4178
        %4243 = vmatprep.subr.bf16.mxu0 %v4181
        %4244 = vmatpush1.bf16.msra.mxu0 %v4180
        %4245 = vmatprep.subr.bf16.mxu0 %v4183
        %4246 = vmatpush1.bf16.msra.mxu0 %v4182
        %4247 = vmatprep.subr.bf16.mxu0 %v4185
        %4248 = vmatpush1.bf16.msra.mxu0 %v4184
        %4249 = vmatprep.subr.bf16.mxu0 %v4187
        %4250 = vmatpush1.bf16.msra.mxu0 %v4186
        %4251 = vmatprep.subr.bf16.mxu0 %v4189
        %4252 = vmatpush1.bf16.msra.mxu0 %v4188
        %4253 = vmatprep.subr.bf16.mxu0 %v4191
        %4254 = vmatpush1.bf16.msra.mxu0 %v4190
        %4255 = vmatprep.subr.bf16.mxu0 %v4193
        %4256 = vmatpush1.bf16.msra.mxu0 %v4192
        %4257 = vmatprep.subr.bf16.mxu0 %v4195
        %4258 = vmatpush1.bf16.msra.mxu0 %v4194
        %4259 = vmatprep.subr.bf16.mxu0 %v4197
        %4260 = vmatpush1.bf16.msra.mxu0 %v4196
        %4261 = vmatprep.subr.bf16.mxu0 %v4199
        %4262 = vmatpush1.bf16.msra.mxu0 %v4198
        %4263 = vmatprep.subr.bf16.mxu0 %v4201
        %4264 = vmatpush1.bf16.msra.mxu0 %v4200
        %4265 = vmatprep.subr.bf16.mxu0 %v4203
        %4266 = vmatpush1.bf16.msra.mxu0 %v4202
        %4267 = vmatprep.subr.bf16.mxu0 %v4205
        %4268 = vmatpush1.bf16.msra.mxu0 %v4204
        %4269 = vmatprep.subr.bf16.mxu0 %v4207
        %4270 = vmatpush1.bf16.msra.mxu0 %v4206
        %4271 = vmatprep.subr.bf16.mxu0 0
        %4272 = vmatpush1.bf16.msra.mxu0 0
        %4273 = vmatprep.mubr.bf16.mxu0 %v3000
        %4274 = vmatmul.mubr.bf16.gmra.mrb[0].mxu0 %v2769
        %v4275 = vpop.f32.mrb[0].mxu0
        %v4276 = vadd.f32 0.0, %v4275
        %v4277 = vpop.f32.mrb[0].mxu0
        %v4278 = vadd.f32 0.0, %v4277
        %v4279 = vpop.f32.mrb[0].mxu0
        %v4280 = vadd.f32 0.0, %v4279
        %v4281 = vpop.f32.mrb[0].mxu0
        %v4282 = vadd.f32 0.0, %v4281
        %4283 = vmatprep.mubr.bf16.mxu0 %v3003
        %4284 = vmatmul.mubr.bf16.gmra.mrb[0].mxu0 %v2771
        %v4285 = vpop.f32.mrb[0].mxu0
        %v4286 = vadd.f32 0.0, %v4285
        %v4287 = vpop.f32.mrb[0].mxu0
        %v4288 = vadd.f32 0.0, %v4287
        %v4289 = vpop.f32.mrb[0].mxu0
        %v4290 = vadd.f32 0.0, %v4289
        %v4291 = vpop.f32.mrb[0].mxu0
        %v4292 = vadd.f32 0.0, %v4291
        %4293 = vmatprep.mubr.bf16.mxu0 %v3006
        %4294 = vmatmul.mubr.bf16.gmra.mrb[0].mxu0 %v2773
        %v4295 = vpop.f32.mrb[0].mxu0
        %v4296 = vadd.f32 0.0, %v4295
        %v4297 = vpop.f32.mrb[0].mxu0
        %v4298 = vadd.f32 0.0, %v4297
        %v4299 = vpop.f32.mrb[0].mxu0
        %v4300 = vadd.f32 0.0, %v4299
        %v4301 = vpop.f32.mrb[0].mxu0
        %v4302 = vadd.f32 0.0, %v4301
        %4303 = vmatprep.mubr.bf16.mxu0 %v3009
        %4304 = vmatmul.mubr.bf16.gmra.mrb[0].mxu0 %v2775
        %v4305 = vpop.f32.mrb[0].mxu0
        %v4306 = vadd.f32 0.0, %v4305
        %v4307 = vpop.f32.mrb[0].mxu0
        %v4308 = vadd.f32 0.0, %v4307
        %v4309 = vpop.f32.mrb[0].mxu0
        %v4310 = vadd.f32 0.0, %v4309
        %v4311 = vpop.f32.mrb[0].mxu0
        %v4312 = vadd.f32 0.0, %v4311
        %4313 = vmatprep.mubr.bf16.mxu0 %v3012
        %4314 = vmatmul.mubr.bf16.gmra.mrb[0].mxu0 %v2807
        %v4315 = vpop.f32.mrb[0].mxu0
        %v4316 = vadd.f32 0.0, %v4315
        %v4317 = vpop.f32.mrb[0].mxu0
        %v4318 = vadd.f32 0.0, %v4317
        %v4319 = vpop.f32.mrb[0].mxu0
        %v4320 = vadd.f32 0.0, %v4319
        %v4321 = vpop.f32.mrb[0].mxu0
        %v4322 = vadd.f32 0.0, %v4321
        %4323 = vmatprep.mubr.bf16.mxu0 %v3577
        %4324 = vmatmul.mubr.bf16.gmra.mrb[0].mxu0 %v3393
        %v4325 = vpop.f32.mrb[0].mxu0
        %v4326 = vadd.f32 0.0, %v4325
        %v4327 = vpop.f32.mrb[0].mxu0
        %v4328 = vadd.f32 0.0, %v4327
        %v4329 = vpop.f32.mrb[0].mxu0
        %v4330 = vadd.f32 0.0, %v4329
        %v4331 = vpop.f32.mrb[0].mxu0
        %v4332 = vadd.f32 0.0, %v4331
        %4333 = vmatprep.mubr.bf16.mxu0 %v3908
        %4334 = vmatmul.mubr.bf16.gmra.mrb[0].mxu0 %v3724
        %v4335 = vpop.f32.mrb[0].mxu0
        %v4336 = vadd.f32 0.0, %v4335
        %v4337 = vpop.f32.mrb[0].mxu0
        %v4338 = vadd.f32 0.0, %v4337
        %v4339 = vpop.f32.mrb[0].mxu0
        %v4340 = vadd.f32 0.0, %v4339
        %v4341 = vpop.f32.mrb[0].mxu0
        %v4342 = vadd.f32 0.0, %v4341
        %4343 = vmatprep.mubr.bf16.mxu0 %v4239
        %4344 = vmatmul.mubr.bf16.gmra.mrb[0].mxu0 %v4055
        %v4345 = vpop.f32.mrb[0].mxu0
        %v4346 = vadd.f32 0.0, %v4345
        %v4347 = vpop.f32.mrb[0].mxu0
        %v4348 = vadd.f32 0.0, %v4347
        %v4349 = vpop.f32.mrb[0].mxu0
        %v4350 = vadd.f32 0.0, %v4349
        %v4351 = vpop.f32.mrb[0].mxu0
        %v4352 = vadd.f32 0.0, %v4351
        %4353 = vdwg.mxu0
        %v4354 = vadd.f32 %v4023, %v4276
        %v4355 = vadd.f32 %v4024, %v4278
        %v4356 = vadd.f32 %v4025, %v4280
        %v4357 = vadd.f32 %v4026, %v4282
        %v4358 = vadd.f32 %v4027, %v4286
        %v4359 = vadd.f32 %v4028, %v4288
        %v4360 = vadd.f32 %v4029, %v4290
        %v4361 = vadd.f32 %v4030, %v4292
        %v4362 = vadd.f32 %v4031, %v4296
        %v4363 = vadd.f32 %v4032, %v4298
        %v4364 = vadd.f32 %v4033, %v4300
        %v4365 = vadd.f32 %v4034, %v4302
        %v4366 = vadd.f32 %v4035, %v4306
        %v4367 = vadd.f32 %v4036, %v4308
        %v4368 = vadd.f32 %v4037, %v4310
        %v4369 = vadd.f32 %v4038, %v4312
        %v4370 = vadd.f32 %v4039, %v4316
        %v4371 = vadd.f32 %v4040, %v4318
        %v4372 = vadd.f32 %v4041, %v4320
        %v4373 = vadd.f32 %v4042, %v4322
        %v4374 = vadd.f32 %v4043, %v4326
        %v4375 = vadd.f32 %v4044, %v4328
        %v4376 = vadd.f32 %v4045, %v4330
        %v4377 = vadd.f32 %v4046, %v4332
        %v4378 = vadd.f32 %v4047, %v4336
        %v4379 = vadd.f32 %v4048, %v4338
        %v4380 = vadd.f32 %v4049, %v4340
        %v4381 = vadd.f32 %v4050, %v4342
        %v4382 = vadd.f32 %v4051, %v4346
        %v4383 = vadd.f32 %v4052, %v4348
        %v4384 = vadd.f32 %v4053, %v4350
        %v4385 = vadd.f32 %v4054, %v4352
        %v4386 = vld [vmem:[%s4] ss:$4 sm:$0x3]
        %v4388 = vlaneseq
        %v4389 = vshrl.u32 %v4388, 7
        %v4390 = vsub.s32 0, %v4389
        %v4391 = vrot.slane %v4386, %v4390
        %v4392 = vlaneseq
        %v4393 = vshrl.u32 %v4392, 7
        %v4394 = vsub.s32 1, %v4393
        %v4395 = vrot.slane %v4386, %v4394
        %v4398 = vadd.f32 %v4354, %v4391
        %v4399 = vadd.f32 %v4355, %v4395
        %v4400 = vadd.f32 %v4356, %v4391
        %v4401 = vadd.f32 %v4357, %v4395
        %v4402 = vadd.f32 %v4358, %v4391
        %v4403 = vadd.f32 %v4359, %v4395
        %v4404 = vadd.f32 %v4360, %v4391
        %v4405 = vadd.f32 %v4361, %v4395
        %v4406 = vadd.f32 %v4362, %v4391
        %v4407 = vadd.f32 %v4363, %v4395
        %v4408 = vadd.f32 %v4364, %v4391
        %v4409 = vadd.f32 %v4365, %v4395
        %v4410 = vadd.f32 %v4366, %v4391
        %v4411 = vadd.f32 %v4367, %v4395
        %v4412 = vadd.f32 %v4368, %v4391
        %v4413 = vadd.f32 %v4369, %v4395
        %v4414 = vadd.f32 %v4370, %v4391
        %v4415 = vadd.f32 %v4371, %v4395
        %v4416 = vadd.f32 %v4372, %v4391
        %v4417 = vadd.f32 %v4373, %v4395
        %v4418 = vadd.f32 %v4374, %v4391
        %v4419 = vadd.f32 %v4375, %v4395
        %v4420 = vadd.f32 %v4376, %v4391
        %v4421 = vadd.f32 %v4377, %v4395
        %v4422 = vadd.f32 %v4378, %v4391
        %v4423 = vadd.f32 %v4379, %v4395
        %v4424 = vadd.f32 %v4380, %v4391
        %v4425 = vadd.f32 %v4381, %v4395
        %v4426 = vadd.f32 %v4382, %v4391
        %v4427 = vadd.f32 %v4383, %v4395
        %v4428 = vadd.f32 %v4384, %v4391
        %v4429 = vadd.f32 %v4385, %v4395
        %v4430 = vmax.f32 %v4398, 0.0
        %v4431 = vmax.f32 %v4399, 0.0
        %v4432 = vmax.f32 %v4400, 0.0
        %v4433 = vmax.f32 %v4401, 0.0
        %v4434 = vmax.f32 %v4402, 0.0
        %v4435 = vmax.f32 %v4403, 0.0
        %v4436 = vmax.f32 %v4404, 0.0
        %v4437 = vmax.f32 %v4405, 0.0
        %v4438 = vmax.f32 %v4406, 0.0
        %v4439 = vmax.f32 %v4407, 0.0
        %v4440 = vmax.f32 %v4408, 0.0
        %v4441 = vmax.f32 %v4409, 0.0
        %v4442 = vmax.f32 %v4410, 0.0
        %v4443 = vmax.f32 %v4411, 0.0
        %v4444 = vmax.f32 %v4412, 0.0
        %v4445 = vmax.f32 %v4413, 0.0
        %v4446 = vmax.f32 %v4414, 0.0
        %v4447 = vmax.f32 %v4415, 0.0
        %v4448 = vmax.f32 %v4416, 0.0
        %v4449 = vmax.f32 %v4417, 0.0
        %v4450 = vmax.f32 %v4418, 0.0
        %v4451 = vmax.f32 %v4419, 0.0
        %v4452 = vmax.f32 %v4420, 0.0
        %v4453 = vmax.f32 %v4421, 0.0
        %v4454 = vmax.f32 %v4422, 0.0
        %v4455 = vmax.f32 %v4423, 0.0
        %v4456 = vmax.f32 %v4424, 0.0
        %v4457 = vmax.f32 %v4425, 0.0
        %v4458 = vmax.f32 %v4426, 0.0
        %v4459 = vmax.f32 %v4427, 0.0
        %v4460 = vmax.f32 %v4428, 0.0
        %v4461 = vmax.f32 %v4429, 0.0
        %s4462 = scalar_lea.vmem %s4, 1
        %v4463 = vld [vmem:[%s4462] ss:$4 sm:$0x3]
        %v4465 = vlaneseq
        %v4466 = vshrl.u32 %v4465, 7
        %v4467 = vsub.s32 0, %v4466
        %v4468 = vrot.slane %v4463, %v4467
        %v4469 = vlaneseq
        %v4470 = vshrl.u32 %v4469, 7
        %v4471 = vsub.s32 1, %v4470
        %v4472 = vrot.slane %v4463, %v4471
        %v4475 = vmul.f32 %v4430, %v4468
        %v4476 = vmul.f32 %v4431, %v4472
        %v4477 = vmul.f32 %v4432, %v4468
        %v4478 = vmul.f32 %v4433, %v4472
        %v4479 = vmul.f32 %v4434, %v4468
        %v4480 = vmul.f32 %v4435, %v4472
        %v4481 = vmul.f32 %v4436, %v4468
        %v4482 = vmul.f32 %v4437, %v4472
        %v4483 = vmul.f32 %v4438, %v4468
        %v4484 = vmul.f32 %v4439, %v4472
        %v4485 = vmul.f32 %v4440, %v4468
        %v4486 = vmul.f32 %v4441, %v4472
        %v4487 = vmul.f32 %v4442, %v4468
        %v4488 = vmul.f32 %v4443, %v4472
        %v4489 = vmul.f32 %v4444, %v4468
        %v4490 = vmul.f32 %v4445, %v4472
        %v4491 = vmul.f32 %v4446, %v4468
        %v4492 = vmul.f32 %v4447, %v4472
        %v4493 = vmul.f32 %v4448, %v4468
        %v4494 = vmul.f32 %v4449, %v4472
        %v4495 = vmul.f32 %v4450, %v4468
        %v4496 = vmul.f32 %v4451, %v4472
        %v4497 = vmul.f32 %v4452, %v4468
        %v4498 = vmul.f32 %v4453, %v4472
        %v4499 = vmul.f32 %v4454, %v4468
        %v4500 = vmul.f32 %v4455, %v4472
        %v4501 = vmul.f32 %v4456, %v4468
        %v4502 = vmul.f32 %v4457, %v4472
        %v4503 = vmul.f32 %v4458, %v4468
        %v4504 = vmul.f32 %v4459, %v4472
        %v4505 = vmul.f32 %v4460, %v4468
        %v4506 = vmul.f32 %v4461, %v4472
        %s4507 = scalar_lea.vmem %s4, 2
        %v4508 = vld [vmem:[%s4507] ss:$4 sm:$0x3]
        %v4510 = vlaneseq
        %v4511 = vshrl.u32 %v4510, 7
        %v4512 = vsub.s32 0, %v4511
        %v4513 = vrot.slane %v4508, %v4512
        %v4514 = vlaneseq
        %v4515 = vshrl.u32 %v4514, 7
        %v4516 = vsub.s32 1, %v4515
        %v4517 = vrot.slane %v4508, %v4516
        %v4520 = vadd.f32 %v4475, %v4513
        %v4521 = vadd.f32 %v4476, %v4517
        %v4522 = vadd.f32 %v4477, %v4513
        %v4523 = vadd.f32 %v4478, %v4517
        %v4524 = vadd.f32 %v4479, %v4513
        %v4525 = vadd.f32 %v4480, %v4517
        %v4526 = vadd.f32 %v4481, %v4513
        %v4527 = vadd.f32 %v4482, %v4517
        %v4528 = vadd.f32 %v4483, %v4513
        %v4529 = vadd.f32 %v4484, %v4517
        %v4530 = vadd.f32 %v4485, %v4513
        %v4531 = vadd.f32 %v4486, %v4517
        %v4532 = vadd.f32 %v4487, %v4513
        %v4533 = vadd.f32 %v4488, %v4517
        %v4534 = vadd.f32 %v4489, %v4513
        %v4535 = vadd.f32 %v4490, %v4517
        %v4536 = vadd.f32 %v4491, %v4513
        %v4537 = vadd.f32 %v4492, %v4517
        %v4538 = vadd.f32 %v4493, %v4513
        %v4539 = vadd.f32 %v4494, %v4517
        %v4540 = vadd.f32 %v4495, %v4513
        %v4541 = vadd.f32 %v4496, %v4517
        %v4542 = vadd.f32 %v4497, %v4513
        %v4543 = vadd.f32 %v4498, %v4517
        %v4544 = vadd.f32 %v4499, %v4513
        %v4545 = vadd.f32 %v4500, %v4517
        %v4546 = vadd.f32 %v4501, %v4513
        %v4547 = vadd.f32 %v4502, %v4517
        %v4548 = vadd.f32 %v4503, %v4513
        %v4549 = vadd.f32 %v4504, %v4517
        %v4550 = vadd.f32 %v4505, %v4513
        %v4551 = vadd.f32 %v4506, %v4517
        %4584 = vrot.lane.b32.xlu0 %v4520, 127
        %v4585 = vpop.permute.xlu0 %4584
        %4586 = vrot.lane.b32.xlu0 %v4521, 127
        %v4587 = vpop.permute.xlu0 %4586
        %4588 = vrot.lane.b32.xlu0 %v4522, 127
        %v4589 = vpop.permute.xlu0 %4588
        %4590 = vrot.lane.b32.xlu0 %v4523, 127
        %v4591 = vpop.permute.xlu0 %4590
        %4592 = vrot.lane.b32.xlu0 %v4524, 127
        %v4593 = vpop.permute.xlu0 %4592
        %4594 = vrot.lane.b32.xlu0 %v4525, 127
        %v4595 = vpop.permute.xlu0 %4594
        %4596 = vrot.lane.b32.xlu0 %v4526, 127
        %v4597 = vpop.permute.xlu0 %4596
        %4598 = vrot.lane.b32.xlu0 %v4527, 127
        %v4599 = vpop.permute.xlu0 %4598
        %4600 = vrot.lane.b32.xlu0 %v4528, 127
        %v4601 = vpop.permute.xlu0 %4600
        %4602 = vrot.lane.b32.xlu0 %v4529, 127
        %v4603 = vpop.permute.xlu0 %4602
        %4604 = vrot.lane.b32.xlu0 %v4530, 127
        %v4605 = vpop.permute.xlu0 %4604
        %4606 = vrot.lane.b32.xlu0 %v4531, 127
        %v4607 = vpop.permute.xlu0 %4606
        %4608 = vrot.lane.b32.xlu0 %v4532, 127
        %v4609 = vpop.permute.xlu0 %4608
        %4610 = vrot.lane.b32.xlu0 %v4533, 127
        %v4611 = vpop.permute.xlu0 %4610
        %4612 = vrot.lane.b32.xlu0 %v4534, 127
        %v4613 = vpop.permute.xlu0 %4612
        %4614 = vrot.lane.b32.xlu0 %v4535, 127
        %v4615 = vpop.permute.xlu0 %4614
        %4616 = vrot.lane.b32.xlu0 %v4536, 127
        %v4617 = vpop.permute.xlu0 %4616
        %4618 = vrot.lane.b32.xlu0 %v4537, 127
        %v4619 = vpop.permute.xlu0 %4618
        %4620 = vrot.lane.b32.xlu0 %v4538, 127
        %v4621 = vpop.permute.xlu0 %4620
        %4622 = vrot.lane.b32.xlu0 %v4539, 127
        %v4623 = vpop.permute.xlu0 %4622
        %4624 = vrot.lane.b32.xlu0 %v4540, 127
        %v4625 = vpop.permute.xlu0 %4624
        %4626 = vrot.lane.b32.xlu0 %v4541, 127
        %v4627 = vpop.permute.xlu0 %4626
        %4628 = vrot.lane.b32.xlu0 %v4542, 127
        %v4629 = vpop.permute.xlu0 %4628
        %4630 = vrot.lane.b32.xlu0 %v4543, 127
        %v4631 = vpop.permute.xlu0 %4630
        %4632 = vrot.lane.b32.xlu0 %v4544, 127
        %v4633 = vpop.permute.xlu0 %4632
        %4634 = vrot.lane.b32.xlu0 %v4545, 127
        %v4635 = vpop.permute.xlu0 %4634
        %4636 = vrot.lane.b32.xlu0 %v4546, 127
        %v4637 = vpop.permute.xlu0 %4636
        %4638 = vrot.lane.b32.xlu0 %v4547, 127
        %v4639 = vpop.permute.xlu0 %4638
        %4640 = vrot.lane.b32.xlu0 %v4548, 127
        %v4641 = vpop.permute.xlu0 %4640
        %4642 = vrot.lane.b32.xlu0 %v4549, 127
        %v4643 = vpop.permute.xlu0 %4642
        %4644 = vrot.lane.b32.xlu0 %v4550, 127
        %v4645 = vpop.permute.xlu0 %4644
        %4646 = vrot.lane.b32.xlu0 %v4551, 127
        %v4647 = vpop.permute.xlu0 %4646
        %v4648 = vsel %vm2279, %v4585, %v4587
        %v4649 = vsel %vm2279, %v4589, %v4591
        %v4650 = vsel %vm2279, %v4593, %v4595
        %v4651 = vsel %vm2279, %v4597, %v4599
        %v4652 = vsel %vm2279, %v4601, %v4603
        %v4653 = vsel %vm2279, %v4605, %v4607
        %v4654 = vsel %vm2279, %v4609, %v4611
        %v4655 = vsel %vm2279, %v4613, %v4615
        %v4656 = vsel %vm2279, %v4617, %v4619
        %v4657 = vsel %vm2279, %v4621, %v4623
        %v4658 = vsel %vm2279, %v4625, %v4627
        %v4659 = vsel %vm2279, %v4629, %v4631
        %v4660 = vsel %vm2279, %v4633, %v4635
        %v4661 = vsel %vm2279, %v4637, %v4639
        %v4662 = vsel %vm2279, %v4641, %v4643
        %v4663 = vsel %vm2279, %v4645, %v4647
        %4696 = vrot.lane.b32.xlu0 %v4520, 31
        %v4697 = vpop.permute.xlu0 %4696
        %4698 = vrot.lane.b32.xlu0 %v4522, 31
        %v4699 = vpop.permute.xlu0 %4698
        %4700 = vrot.lane.b32.xlu0 %v4524, 31
        %v4701 = vpop.permute.xlu0 %4700
        %4702 = vrot.lane.b32.xlu0 %v4526, 31
        %v4703 = vpop.permute.xlu0 %4702
        %4704 = vrot.lane.b32.xlu0 %v4528, 31
        %v4705 = vpop.permute.xlu0 %4704
        %4706 = vrot.lane.b32.xlu0 %v4530, 31
        %v4707 = vpop.permute.xlu0 %4706
        %4708 = vrot.lane.b32.xlu0 %v4532, 31
        %v4709 = vpop.permute.xlu0 %4708
        %4710 = vrot.lane.b32.xlu0 %v4534, 31
        %v4711 = vpop.permute.xlu0 %4710
        %4712 = vrot.lane.b32.xlu0 %v4536, 31
        %v4713 = vpop.permute.xlu0 %4712
        %4714 = vrot.lane.b32.xlu0 %v4538, 31
        %v4715 = vpop.permute.xlu0 %4714
        %4716 = vrot.lane.b32.xlu0 %v4540, 31
        %v4717 = vpop.permute.xlu0 %4716
        %4718 = vrot.lane.b32.xlu0 %v4542, 31
        %v4719 = vpop.permute.xlu0 %4718
        %4720 = vrot.lane.b32.xlu0 %v4544, 31
        %v4721 = vpop.permute.xlu0 %4720
        %4722 = vrot.lane.b32.xlu0 %v4546, 31
        %v4723 = vpop.permute.xlu0 %4722
        %4724 = vrot.lane.b32.xlu0 %v4548, 31
        %v4725 = vpop.permute.xlu0 %4724
        %4726 = vrot.lane.b32.xlu0 %v4550, 31
        %v4727 = vpop.permute.xlu0 %4726
        %vm4744 = vcmask 252928
        %v4745 = vsel %vm4744, %v4587, %v4697
        %v4746 = vsel %vm4744, %v4591, %v4699
        %v4747 = vsel %vm4744, %v4595, %v4701
        %v4748 = vsel %vm4744, %v4599, %v4703
        %v4749 = vsel %vm4744, %v4603, %v4705
        %v4750 = vsel %vm4744, %v4607, %v4707
        %v4751 = vsel %vm4744, %v4611, %v4709
        %v4752 = vsel %vm4744, %v4615, %v4711
        %v4753 = vsel %vm4744, %v4619, %v4713
        %v4754 = vsel %vm4744, %v4623, %v4715
        %v4755 = vsel %vm4744, %v4627, %v4717
        %v4756 = vsel %vm4744, %v4631, %v4719
        %v4757 = vsel %vm4744, %v4635, %v4721
        %v4758 = vsel %vm4744, %v4639, %v4723
        %v4759 = vsel %vm4744, %v4643, %v4725
        %v4760 = vsel %vm4744, %v4647, %v4727
        %v4761 = vmax.f32 %v4520, %v4648
        %v4762 = vmax.f32 %v4521, %v4745
        %v4763 = vmax.f32 %v4522, %v4649
        %v4764 = vmax.f32 %v4523, %v4746
        %v4765 = vmax.f32 %v4524, %v4650
        %v4766 = vmax.f32 %v4525, %v4747
        %v4767 = vmax.f32 %v4526, %v4651
        %v4768 = vmax.f32 %v4527, %v4748
        %v4769 = vmax.f32 %v4528, %v4652
        %v4770 = vmax.f32 %v4529, %v4749
        %v4771 = vmax.f32 %v4530, %v4653
        %v4772 = vmax.f32 %v4531, %v4750
        %v4773 = vmax.f32 %v4532, %v4654
        %v4774 = vmax.f32 %v4533, %v4751
        %v4775 = vmax.f32 %v4534, %v4655
        %v4776 = vmax.f32 %v4535, %v4752
        %v4777 = vmax.f32 %v4536, %v4656
        %v4778 = vmax.f32 %v4537, %v4753
        %v4779 = vmax.f32 %v4538, %v4657
        %v4780 = vmax.f32 %v4539, %v4754
        %v4781 = vmax.f32 %v4540, %v4658
        %v4782 = vmax.f32 %v4541, %v4755
        %v4783 = vmax.f32 %v4542, %v4659
        %v4784 = vmax.f32 %v4543, %v4756
        %v4785 = vmax.f32 %v4544, %v4660
        %v4786 = vmax.f32 %v4545, %v4757
        %v4787 = vmax.f32 %v4546, %v4661
        %v4788 = vmax.f32 %v4547, %v4758
        %v4789 = vmax.f32 %v4548, %v4662
        %v4790 = vmax.f32 %v4549, %v4759
        %v4791 = vmax.f32 %v4550, %v4663
        %v4792 = vmax.f32 %v4551, %v4760
        %v4793 = vmax.f32 %v4761, %v4765
        %v4794 = vmax.f32 %v4762, %v4766
        %v4795 = vmax.f32 %v4763, %v4767
        %v4796 = vmax.f32 %v4764, %v4768
        %v4797 = vmax.f32 %v4769, %v4773
        %v4798 = vmax.f32 %v4770, %v4774
        %v4799 = vmax.f32 %v4771, %v4775
        %v4800 = vmax.f32 %v4772, %v4776
        %v4801 = vmax.f32 %v4777, %v4781
        %v4802 = vmax.f32 %v4778, %v4782
        %v4803 = vmax.f32 %v4779, %v4783
        %v4804 = vmax.f32 %v4780, %v4784
        %v4805 = vmax.f32 %v4785, %v4789
        %v4806 = vmax.f32 %v4786, %v4790
        %v4807 = vmax.f32 %v4787, %v4791
        %v4808 = vmax.f32 %v4788, %v4792
        %v4809 = vpack.c.bf16 %v4795, %v4793
        %v4810 = vpack.c.bf16 %v4796, %v4794
        %v4811 = vld [vmem:[%s5] sm:$0xf]
        %v4812 = vld [vmem:[%s5 + $0x4] sm:$0xf]
        %v4813 = vld [vmem:[%s5 + $0x8] sm:$0xf]
        %v4814 = vld [vmem:[%s5 + $0xc] sm:$0xf]
        %v4815 = vld [vmem:[%s5 + $0x10] sm:$0xf]
        %v4816 = vld [vmem:[%s5 + $0x14] sm:$0xf]
        %v4817 = vld [vmem:[%s5 + $0x18] sm:$0xf]
        %v4818 = vld [vmem:[%s5 + $0x1c] sm:$0xf]
        %v4819 = vld [vmem:[%s5 + $0x20] sm:$0xf]
        %v4820 = vld [vmem:[%s5 + $0x24] sm:$0xf]
        %v4821 = vld [vmem:[%s5 + $0x28] sm:$0xf]
        %v4822 = vld [vmem:[%s5 + $0x2c] sm:$0xf]
        %v4823 = vld [vmem:[%s5 + $0x30] sm:$0xf]
        %v4824 = vld [vmem:[%s5 + $0x34] sm:$0xf]
        %v4825 = vld [vmem:[%s5 + $0x38] sm:$0xf]
        %v4826 = vld [vmem:[%s5 + $0x3c] sm:$0xf]
        %v4827 = vld [vmem:[%s5 + $0x40] sm:$0xf]
        %v4828 = vld [vmem:[%s5 + $0x44] sm:$0xf]
        %v4829 = vld [vmem:[%s5 + $0x48] sm:$0xf]
        %v4830 = vld [vmem:[%s5 + $0x4c] sm:$0xf]
        %v4831 = vpack.c.bf16 %v4799, %v4797
        %v4832 = vpack.c.bf16 %v4800, %v4798
        %s4833 = scalar_lea.vmem %s5, 80
        %v4834 = vld [vmem:[%s4833] sm:$0xf]
        %v4835 = vld [vmem:[%s4833 + $0x4] sm:$0xf]
        %v4836 = vld [vmem:[%s4833 + $0x8] sm:$0xf]
        %v4837 = vld [vmem:[%s4833 + $0xc] sm:$0xf]
        %v4838 = vld [vmem:[%s4833 + $0x10] sm:$0xf]
        %v4839 = vld [vmem:[%s4833 + $0x14] sm:$0xf]
        %v4840 = vld [vmem:[%s4833 + $0x18] sm:$0xf]
        %v4841 = vld [vmem:[%s4833 + $0x1c] sm:$0xf]
        %v4842 = vld [vmem:[%s4833 + $0x20] sm:$0xf]
        %v4843 = vld [vmem:[%s4833 + $0x24] sm:$0xf]
        %v4844 = vld [vmem:[%s4833 + $0x28] sm:$0xf]
        %v4845 = vld [vmem:[%s4833 + $0x2c] sm:$0xf]
        %v4846 = vld [vmem:[%s4833 + $0x30] sm:$0xf]
        %v4847 = vld [vmem:[%s4833 + $0x34] sm:$0xf]
        %v4848 = vld [vmem:[%s4833 + $0x38] sm:$0xf]
        %v4849 = vld [vmem:[%s4833 + $0x3c] sm:$0xf]
        %v4850 = vld [vmem:[%s4833 + $0x40] sm:$0xf]
        %v4851 = vld [vmem:[%s4833 + $0x44] sm:$0xf]
        %v4852 = vld [vmem:[%s4833 + $0x48] sm:$0xf]
        %v4853 = vld [vmem:[%s4833 + $0x4c] sm:$0xf]
        %v4874 = vunpack.c.l.b16 %v4834
        %v4875 = vunpack.c.l.b16 %v4835
        %v4876 = vunpack.c.l.b16 %v4836
        %v4877 = vunpack.c.l.b16 %v4837
        %v4878 = vunpack.c.l.b16 %v4838
        %v4879 = vunpack.c.l.b16 %v4839
        %v4880 = vunpack.c.l.b16 %v4840
        %v4881 = vunpack.c.l.b16 %v4841
        %v4882 = vunpack.c.l.b16 %v4842
        %v4883 = vunpack.c.l.b16 %v4843
        %v4884 = vunpack.c.l.b16 %v4844
        %v4885 = vunpack.c.l.b16 %v4845
        %v4886 = vunpack.c.l.b16 %v4846
        %v4887 = vunpack.c.l.b16 %v4847
        %v4888 = vunpack.c.l.b16 %v4848
        %v4889 = vunpack.c.l.b16 %v4849
        %v4890 = vunpack.c.l.b16 %v4850
        %v4891 = vunpack.c.l.b16 %v4851
        %v4892 = vunpack.c.l.b16 %v4852
        %v4893 = vunpack.c.l.b16 %v4853
        %v4894 = vpack.c.b16 %v4875, %v4874
        %v4895 = vpack.c.b16 %v4877, %v4876
        %v4896 = vpack.c.b16 %v4879, %v4878
        %v4897 = vpack.c.b16 %v4881, %v4880
        %v4898 = vpack.c.b16 %v4883, %v4882
        %v4899 = vpack.c.b16 %v4885, %v4884
        %v4900 = vpack.c.b16 %v4887, %v4886
        %v4901 = vpack.c.b16 %v4889, %v4888
        %v4902 = vpack.c.b16 %v4891, %v4890
        %v4903 = vpack.c.b16 %v4893, %v4892
        %vm4914 = vcmask 261120
        %v4916 = vsel %vm4914, %v4832, 0
        %4918 = vmatprep.subr.bf16.mxu0 0
        %4919 = vmatpush1.bf16.msra.mxu0 %v4894
        %4920 = vmatprep.subr.bf16.mxu0 0
        %4921 = vmatpush1.bf16.msra.mxu0 %v4895
        %4922 = vmatprep.subr.bf16.mxu0 0
        %4923 = vmatpush1.bf16.msra.mxu0 %v4896
        %4924 = vmatprep.subr.bf16.mxu0 0
        %4925 = vmatpush1.bf16.msra.mxu0 %v4897
        %4926 = vmatprep.subr.bf16.mxu0 0
        %4927 = vmatpush1.bf16.msra.mxu0 %v4898
        %4928 = vmatprep.subr.bf16.mxu0 0
        %4929 = vmatpush1.bf16.msra.mxu0 %v4899
        %4930 = vmatprep.subr.bf16.mxu0 0
        %4931 = vmatpush1.bf16.msra.mxu0 %v4900
        %4932 = vmatprep.subr.bf16.mxu0 0
        %4933 = vmatpush1.bf16.msra.mxu0 %v4901
        %4934 = vmatprep.subr.bf16.mxu0 0
        %4935 = vmatpush1.bf16.msra.mxu0 %v4902
        %4936 = vmatprep.subr.bf16.mxu0 0
        %4937 = vmatpush1.bf16.msra.mxu0 %v4903
        %4938 = vmatprep.subr.bf16.mxu0 0
        %4939 = vmatpush1.bf16.msra.mxu0 0
        %4940 = vmatprep.subr.bf16.mxu0 0
        %4941 = vmatpush1.bf16.msra.mxu0 0
        %4942 = vmatprep.subr.bf16.mxu0 0
        %4943 = vmatpush1.bf16.msra.mxu0 0
        %4944 = vmatprep.subr.bf16.mxu0 0
        %4945 = vmatpush1.bf16.msra.mxu0 0
        %4946 = vmatprep.subr.bf16.mxu0 0
        %4947 = vmatpush1.bf16.msra.mxu0 0
        %4948 = vmatprep.subr.bf16.mxu0 0
        %4949 = vmatpush1.bf16.msra.mxu0 0
        %4950 = vmatprep.mubr.bf16.mxu0 %v4916
        %4951 = vmatmul.mubr.bf16.gmra.mrb[0].mxu0 %v4831
        %v4952 = vpop.f32.mrb[0].mxu0
        %v4953 = vadd.f32 0.0, %v4952
        %v4954 = vpop.f32.mrb[0].mxu0
        %v4955 = vpop.f32.mrb[0].mxu0
        %v4956 = vadd.f32 0.0, %v4955
        %v4957 = vpop.f32.mrb[0].mxu0
        %4958 = vdwg.mxu0
        %v4979 = vunpack.c.l.b16 %v4811
        %v4980 = vunpack.c.l.b16 %v4812
        %v4981 = vunpack.c.l.b16 %v4813
        %v4982 = vunpack.c.l.b16 %v4814
        %v4983 = vunpack.c.l.b16 %v4815
        %v4984 = vunpack.c.l.b16 %v4816
        %v4985 = vunpack.c.l.b16 %v4817
        %v4986 = vunpack.c.l.b16 %v4818
        %v4987 = vunpack.c.l.b16 %v4819
        %v4988 = vunpack.c.l.b16 %v4820
        %v4989 = vunpack.c.l.b16 %v4821
        %v4990 = vunpack.c.l.b16 %v4822
        %v4991 = vunpack.c.l.b16 %v4823
        %v4992 = vunpack.c.l.b16 %v4824
        %v4993 = vunpack.c.l.b16 %v4825
        %v4994 = vunpack.c.l.b16 %v4826
        %v4995 = vunpack.c.l.b16 %v4827
        %v4996 = vunpack.c.l.b16 %v4828
        %v4997 = vunpack.c.l.b16 %v4829
        %v4998 = vunpack.c.l.b16 %v4830
        %v4999 = vpack.c.b16 %v4980, %v4979
        %v5000 = vpack.c.b16 %v4982, %v4981
        %v5001 = vpack.c.b16 %v4984, %v4983
        %v5002 = vpack.c.b16 %v4986, %v4985
        %v5003 = vpack.c.b16 %v4988, %v4987
        %v5004 = vpack.c.b16 %v4990, %v4989
        %v5005 = vpack.c.b16 %v4992, %v4991
        %v5006 = vpack.c.b16 %v4994, %v4993
        %v5007 = vpack.c.b16 %v4996, %v4995
        %v5008 = vpack.c.b16 %v4998, %v4997
        %v5020 = vsel %vm4914, %v4810, 0
        %5022 = vmatprep.subr.bf16.mxu0 0
        %5023 = vmatpush1.bf16.msra.mxu0 %v4999
        %5024 = vmatprep.subr.bf16.mxu0 0
        %5025 = vmatpush1.bf16.msra.mxu0 %v5000
        %5026 = vmatprep.subr.bf16.mxu0 0
        %5027 = vmatpush1.bf16.msra.mxu0 %v5001
        %5028 = vmatprep.subr.bf16.mxu0 0
        %5029 = vmatpush1.bf16.msra.mxu0 %v5002
        %5030 = vmatprep.subr.bf16.mxu0 0
        %5031 = vmatpush1.bf16.msra.mxu0 %v5003
        %5032 = vmatprep.subr.bf16.mxu0 0
        %5033 = vmatpush1.bf16.msra.mxu0 %v5004
        %5034 = vmatprep.subr.bf16.mxu0 0
        %5035 = vmatpush1.bf16.msra.mxu0 %v5005
        %5036 = vmatprep.subr.bf16.mxu0 0
        %5037 = vmatpush1.bf16.msra.mxu0 %v5006
        %5038 = vmatprep.subr.bf16.mxu0 0
        %5039 = vmatpush1.bf16.msra.mxu0 %v5007
        %5040 = vmatprep.subr.bf16.mxu0 0
        %5041 = vmatpush1.bf16.msra.mxu0 %v5008
        %5042 = vmatprep.subr.bf16.mxu0 0
        %5043 = vmatpush1.bf16.msra.mxu0 0
        %5044 = vmatprep.subr.bf16.mxu0 0
        %5045 = vmatpush1.bf16.msra.mxu0 0
        %5046 = vmatprep.subr.bf16.mxu0 0
        %5047 = vmatpush1.bf16.msra.mxu0 0
        %5048 = vmatprep.subr.bf16.mxu0 0
        %5049 = vmatpush1.bf16.msra.mxu0 0
        %5050 = vmatprep.subr.bf16.mxu0 0
        %5051 = vmatpush1.bf16.msra.mxu0 0
        %5052 = vmatprep.subr.bf16.mxu0 0
        %5053 = vmatpush1.bf16.msra.mxu0 0
        %5054 = vmatprep.mubr.bf16.mxu0 %v5020
        %5055 = vmatmul.mubr.bf16.gmra.mrb[0].mxu0 %v4809
        %v5056 = vpop.f32.mrb[0].mxu0
        %v5057 = vadd.f32 %v4953, %v5056
        %v5058 = vpop.f32.mrb[0].mxu0
        %v5059 = vpop.f32.mrb[0].mxu0
        %v5060 = vadd.f32 %v4956, %v5059
        %v5061 = vpop.f32.mrb[0].mxu0
        %5062 = vdwg.mxu0
        %v5063 = vpack.c.bf16 %v4803, %v4801
        %v5064 = vpack.c.bf16 %v4804, %v4802
        %s5065 = scalar_lea.vmem %s5, 160
        %v5066 = vld [vmem:[%s5065] sm:$0xf]
        %v5067 = vld [vmem:[%s5065 + $0x4] sm:$0xf]
        %v5068 = vld [vmem:[%s5065 + $0x8] sm:$0xf]
        %v5069 = vld [vmem:[%s5065 + $0xc] sm:$0xf]
        %v5070 = vld [vmem:[%s5065 + $0x10] sm:$0xf]
        %v5071 = vld [vmem:[%s5065 + $0x14] sm:$0xf]
        %v5072 = vld [vmem:[%s5065 + $0x18] sm:$0xf]
        %v5073 = vld [vmem:[%s5065 + $0x1c] sm:$0xf]
        %v5074 = vld [vmem:[%s5065 + $0x20] sm:$0xf]
        %v5075 = vld [vmem:[%s5065 + $0x24] sm:$0xf]
        %v5076 = vld [vmem:[%s5065 + $0x28] sm:$0xf]
        %v5077 = vld [vmem:[%s5065 + $0x2c] sm:$0xf]
        %v5078 = vld [vmem:[%s5065 + $0x30] sm:$0xf]
        %v5079 = vld [vmem:[%s5065 + $0x34] sm:$0xf]
        %v5080 = vld [vmem:[%s5065 + $0x38] sm:$0xf]
        %v5081 = vld [vmem:[%s5065 + $0x3c] sm:$0xf]
        %v5082 = vld [vmem:[%s5065 + $0x40] sm:$0xf]
        %v5083 = vld [vmem:[%s5065 + $0x44] sm:$0xf]
        %v5084 = vld [vmem:[%s5065 + $0x48] sm:$0xf]
        %v5085 = vld [vmem:[%s5065 + $0x4c] sm:$0xf]
        %v5106 = vunpack.c.l.b16 %v5066
        %v5107 = vunpack.c.l.b16 %v5067
        %v5108 = vunpack.c.l.b16 %v5068
        %v5109 = vunpack.c.l.b16 %v5069
        %v5110 = vunpack.c.l.b16 %v5070
        %v5111 = vunpack.c.l.b16 %v5071
        %v5112 = vunpack.c.l.b16 %v5072
        %v5113 = vunpack.c.l.b16 %v5073
        %v5114 = vunpack.c.l.b16 %v5074
        %v5115 = vunpack.c.l.b16 %v5075
        %v5116 = vunpack.c.l.b16 %v5076
        %v5117 = vunpack.c.l.b16 %v5077
        %v5118 = vunpack.c.l.b16 %v5078
        %v5119 = vunpack.c.l.b16 %v5079
        %v5120 = vunpack.c.l.b16 %v5080
        %v5121 = vunpack.c.l.b16 %v5081
        %v5122 = vunpack.c.l.b16 %v5082
        %v5123 = vunpack.c.l.b16 %v5083
        %v5124 = vunpack.c.l.b16 %v5084
        %v5125 = vunpack.c.l.b16 %v5085
        %v5126 = vpack.c.b16 %v5107, %v5106
        %v5127 = vpack.c.b16 %v5109, %v5108
        %v5128 = vpack.c.b16 %v5111, %v5110
        %v5129 = vpack.c.b16 %v5113, %v5112
        %v5130 = vpack.c.b16 %v5115, %v5114
        %v5131 = vpack.c.b16 %v5117, %v5116
        %v5132 = vpack.c.b16 %v5119, %v5118
        %v5133 = vpack.c.b16 %v5121, %v5120
        %v5134 = vpack.c.b16 %v5123, %v5122
        %v5135 = vpack.c.b16 %v5125, %v5124
        %v5147 = vsel %vm4914, %v5064, 0
        %5149 = vmatprep.subr.bf16.mxu0 0
        %5150 = vmatpush1.bf16.msra.mxu0 %v5126
        %5151 = vmatprep.subr.bf16.mxu0 0
        %5152 = vmatpush1.bf16.msra.mxu0 %v5127
        %5153 = vmatprep.subr.bf16.mxu0 0
        %5154 = vmatpush1.bf16.msra.mxu0 %v5128
        %5155 = vmatprep.subr.bf16.mxu0 0
        %5156 = vmatpush1.bf16.msra.mxu0 %v5129
        %5157 = vmatprep.subr.bf16.mxu0 0
        %5158 = vmatpush1.bf16.msra.mxu0 %v5130
        %5159 = vmatprep.subr.bf16.mxu0 0
        %5160 = vmatpush1.bf16.msra.mxu0 %v5131
        %5161 = vmatprep.subr.bf16.mxu0 0
        %5162 = vmatpush1.bf16.msra.mxu0 %v5132
        %5163 = vmatprep.subr.bf16.mxu0 0
        %5164 = vmatpush1.bf16.msra.mxu0 %v5133
        %5165 = vmatprep.subr.bf16.mxu0 0
        %5166 = vmatpush1.bf16.msra.mxu0 %v5134
        %5167 = vmatprep.subr.bf16.mxu0 0
        %5168 = vmatpush1.bf16.msra.mxu0 %v5135
        %5169 = vmatprep.subr.bf16.mxu0 0
        %5170 = vmatpush1.bf16.msra.mxu0 0
        %5171 = vmatprep.subr.bf16.mxu0 0
        %5172 = vmatpush1.bf16.msra.mxu0 0
        %5173 = vmatprep.subr.bf16.mxu0 0
        %5174 = vmatpush1.bf16.msra.mxu0 0
        %5175 = vmatprep.subr.bf16.mxu0 0
        %5176 = vmatpush1.bf16.msra.mxu0 0
        %5177 = vmatprep.subr.bf16.mxu0 0
        %5178 = vmatpush1.bf16.msra.mxu0 0
        %5179 = vmatprep.subr.bf16.mxu0 0
        %5180 = vmatpush1.bf16.msra.mxu0 0
        %5181 = vmatprep.mubr.bf16.mxu0 %v5147
        %5182 = vmatmul.mubr.bf16.gmra.mrb[0].mxu0 %v5063
        %v5183 = vpop.f32.mrb[0].mxu0
        %v5184 = vadd.f32 0.0, %v5183
        %v5185 = vpop.f32.mrb[0].mxu0
        %v5186 = vpop.f32.mrb[0].mxu0
        %v5187 = vadd.f32 0.0, %v5186
        %v5188 = vpop.f32.mrb[0].mxu0
        %5189 = vdwg.mxu0
        %v5190 = vadd.f32 %v5057, %v5184
        %v5191 = vadd.f32 %v5060, %v5187
        %v5192 = vpack.c.bf16 %v4807, %v4805
        %v5193 = vpack.c.bf16 %v4808, %v4806
        %s5194 = scalar_lea.vmem %s5, 240
        %v5195 = vld [vmem:[%s5194] sm:$0xf]
        %v5196 = vld [vmem:[%s5194 + $0x4] sm:$0xf]
        %v5197 = vld [vmem:[%s5194 + $0x8] sm:$0xf]
        %v5198 = vld [vmem:[%s5194 + $0xc] sm:$0xf]
        %v5199 = vld [vmem:[%s5194 + $0x10] sm:$0xf]
        %v5200 = vld [vmem:[%s5194 + $0x14] sm:$0xf]
        %v5201 = vld [vmem:[%s5194 + $0x18] sm:$0xf]
        %v5202 = vld [vmem:[%s5194 + $0x1c] sm:$0xf]
        %v5203 = vld [vmem:[%s5194 + $0x20] sm:$0xf]
        %v5204 = vld [vmem:[%s5194 + $0x24] sm:$0xf]
        %v5205 = vld [vmem:[%s5194 + $0x28] sm:$0xf]
        %v5206 = vld [vmem:[%s5194 + $0x2c] sm:$0xf]
        %v5207 = vld [vmem:[%s5194 + $0x30] sm:$0xf]
        %v5208 = vld [vmem:[%s5194 + $0x34] sm:$0xf]
        %v5209 = vld [vmem:[%s5194 + $0x38] sm:$0xf]
        %v5210 = vld [vmem:[%s5194 + $0x3c] sm:$0xf]
        %v5211 = vld [vmem:[%s5194 + $0x40] sm:$0xf]
        %v5212 = vld [vmem:[%s5194 + $0x44] sm:$0xf]
        %v5213 = vld [vmem:[%s5194 + $0x48] sm:$0xf]
        %v5214 = vld [vmem:[%s5194 + $0x4c] sm:$0xf]
        %v5235 = vunpack.c.l.b16 %v5195
        %v5236 = vunpack.c.l.b16 %v5196
        %v5237 = vunpack.c.l.b16 %v5197
        %v5238 = vunpack.c.l.b16 %v5198
        %v5239 = vunpack.c.l.b16 %v5199
        %v5240 = vunpack.c.l.b16 %v5200
        %v5241 = vunpack.c.l.b16 %v5201
        %v5242 = vunpack.c.l.b16 %v5202
        %v5243 = vunpack.c.l.b16 %v5203
        %v5244 = vunpack.c.l.b16 %v5204
        %v5245 = vunpack.c.l.b16 %v5205
        %v5246 = vunpack.c.l.b16 %v5206
        %v5247 = vunpack.c.l.b16 %v5207
        %v5248 = vunpack.c.l.b16 %v5208
        %v5249 = vunpack.c.l.b16 %v5209
        %v5250 = vunpack.c.l.b16 %v5210
        %v5251 = vunpack.c.l.b16 %v5211
        %v5252 = vunpack.c.l.b16 %v5212
        %v5253 = vunpack.c.l.b16 %v5213
        %v5254 = vunpack.c.l.b16 %v5214
        %v5255 = vpack.c.b16 %v5236, %v5235
        %v5256 = vpack.c.b16 %v5238, %v5237
        %v5257 = vpack.c.b16 %v5240, %v5239
        %v5258 = vpack.c.b16 %v5242, %v5241
        %v5259 = vpack.c.b16 %v5244, %v5243
        %v5260 = vpack.c.b16 %v5246, %v5245
        %v5261 = vpack.c.b16 %v5248, %v5247
        %v5262 = vpack.c.b16 %v5250, %v5249
        %v5263 = vpack.c.b16 %v5252, %v5251
        %v5264 = vpack.c.b16 %v5254, %v5253
        %v5276 = vsel %vm4914, %v5193, 0
        %5278 = vmatprep.subr.bf16.mxu0 0
        %5279 = vmatpush1.bf16.msra.mxu0 %v5255
        %5280 = vmatprep.subr.bf16.mxu0 0
        %5281 = vmatpush1.bf16.msra.mxu0 %v5256
        %5282 = vmatprep.subr.bf16.mxu0 0
        %5283 = vmatpush1.bf16.msra.mxu0 %v5257
        %5284 = vmatprep.subr.bf16.mxu0 0
        %5285 = vmatpush1.bf16.msra.mxu0 %v5258
        %5286 = vmatprep.subr.bf16.mxu0 0
        %5287 = vmatpush1.bf16.msra.mxu0 %v5259
        %5288 = vmatprep.subr.bf16.mxu0 0
        %5289 = vmatpush1.bf16.msra.mxu0 %v5260
        %5290 = vmatprep.subr.bf16.mxu0 0
        %5291 = vmatpush1.bf16.msra.mxu0 %v5261
        %5292 = vmatprep.subr.bf16.mxu0 0
        %5293 = vmatpush1.bf16.msra.mxu0 %v5262
        %5294 = vmatprep.subr.bf16.mxu0 0
        %5295 = vmatpush1.bf16.msra.mxu0 %v5263
        %5296 = vmatprep.subr.bf16.mxu0 0
        %5297 = vmatpush1.bf16.msra.mxu0 %v5264
        %5298 = vmatprep.subr.bf16.mxu0 0
        %5299 = vmatpush1.bf16.msra.mxu0 0
        %5300 = vmatprep.subr.bf16.mxu0 0
        %5301 = vmatpush1.bf16.msra.mxu0 0
        %5302 = vmatprep.subr.bf16.mxu0 0
        %5303 = vmatpush1.bf16.msra.mxu0 0
        %5304 = vmatprep.subr.bf16.mxu0 0
        %5305 = vmatpush1.bf16.msra.mxu0 0
        %5306 = vmatprep.subr.bf16.mxu0 0
        %5307 = vmatpush1.bf16.msra.mxu0 0
        %5308 = vmatprep.subr.bf16.mxu0 0
        %5309 = vmatpush1.bf16.msra.mxu0 0
        %5310 = vmatprep.mubr.bf16.mxu0 %v5276
        %5311 = vmatmul.mubr.bf16.gmra.mrb[0].mxu0 %v5192
        %v5312 = vpop.f32.mrb[0].mxu0
        %v5313 = vadd.f32 0.0, %v5312
        %v5314 = vpop.f32.mrb[0].mxu0
        %v5315 = vpop.f32.mrb[0].mxu0
        %v5316 = vadd.f32 0.0, %v5315
        %v5317 = vpop.f32.mrb[0].mxu0
        %5318 = vdwg.mxu0
        %v5319 = vadd.f32 %v5190, %v5313
        %v5320 = vadd.f32 %v5191, %v5316
        %v5321 = vld [vmem:[%s6] sm:$0x1]
        %v5323 = vlaneseq
        %v5324 = vshrl.u32 %v5323, 7
        %v5325 = vsub.s32 0, %v5324
        %v5326 = vrot.slane %v5321, %v5325
        %v5328 = vadd.f32 %v5319, %v5326
        %v5329 = vadd.f32 %v5320, %v5326
        %v5330 = vmax.f32 %v5328, 0.0
        %v5331 = vmax.f32 %v5329, 0.0
        %v5332 = vpack.c.bf16 %v5331, %v5330
        %v5333 = vld [vmem:[%s7] sm:$0xf]
        %v5334 = vld [vmem:[%s7 + $0x4] sm:$0xf]
        %v5335 = vld [vmem:[%s7 + $0x8] sm:$0xf]
        %v5336 = vld [vmem:[%s7 + $0xc] sm:$0xf]
        %v5337 = vld [vmem:[%s7 + $0x10] sm:$0xf]
        %v5338 = vld [vmem:[%s7 + $0x14] sm:$0xf]
        %v5339 = vld [vmem:[%s7 + $0x18] sm:$0xf]
        %v5340 = vld [vmem:[%s7 + $0x1c] sm:$0xf]
        %v5341 = vld [vmem:[%s7 + $0x20] sm:$0xf]
        %v5342 = vld [vmem:[%s7 + $0x24] sm:$0xf]
        %v5343 = vld [vmem:[%s7 + $0x28] sm:$0x3]
        %v5344 = vld [vmem:[%s8] sm:$0x1]
        %v5346 = vlaneseq
        %v5347 = vshrl.u32 %v5346, 7
        %v5348 = vsub.s32 0, %v5347
        %v5349 = vrot.slane %v5344, %v5348
        %v5362 = vunpack.c.l.b16 %v5333
        %v5363 = vunpack.c.l.b16 %v5334
        %v5364 = vunpack.c.l.b16 %v5335
        %v5365 = vunpack.c.l.b16 %v5336
        %v5366 = vunpack.c.l.b16 %v5337
        %v5367 = vunpack.c.l.b16 %v5338
        %v5368 = vunpack.c.l.b16 %v5339
        %v5369 = vunpack.c.l.b16 %v5340
        %v5370 = vunpack.c.l.b16 %v5341
        %v5371 = vunpack.c.l.b16 %v5342
        %v5372 = vunpack.c.l.b16 %v5343
        %v5373 = vpack.c.b16 %v5363, %v5362
        %v5374 = vpack.c.b16 %v5365, %v5364
        %v5375 = vpack.c.b16 %v5367, %v5366
        %v5376 = vpack.c.b16 %v5369, %v5368
        %v5377 = vpack.c.b16 %v5371, %v5370
        %v5378 = vpack.c.b16 %v5372, %v5372
        %v5385 = vsel %vm1108, %v5332, 0
        %vm5387 = vcmask 1041408
        %v5389 = vsel %vm5387, %v5378, 0
        %5391 = vmatprep.subr.bf16.mxu0 0
        %5392 = vmatpush1.bf16.msra.mxu0 %v5373
        %5393 = vmatprep.subr.bf16.mxu0 0
        %5394 = vmatpush1.bf16.msra.mxu0 %v5374
        %5395 = vmatprep.subr.bf16.mxu0 0
        %5396 = vmatpush1.bf16.msra.mxu0 %v5375
        %5397 = vmatprep.subr.bf16.mxu0 0
        %5398 = vmatpush1.bf16.msra.mxu0 %v5376
        %5399 = vmatprep.subr.bf16.mxu0 0
        %5400 = vmatpush1.bf16.msra.mxu0 %v5377
        %5401 = vmatprep.subr.bf16.mxu0 0
        %5402 = vmatpush1.bf16.msra.mxu0 %v5389
        %5403 = vmatprep.subr.bf16.mxu0 0
        %5404 = vmatpush1.bf16.msra.mxu0 0
        %5405 = vmatprep.subr.bf16.mxu0 0
        %5406 = vmatpush1.bf16.msra.mxu0 0
        %5407 = vmatprep.subr.bf16.mxu0 0
        %5408 = vmatpush1.bf16.msra.mxu0 0
        %5409 = vmatprep.subr.bf16.mxu0 0
        %5410 = vmatpush1.bf16.msra.mxu0 0
        %5411 = vmatprep.subr.bf16.mxu0 0
        %5412 = vmatpush1.bf16.msra.mxu0 0
        %5413 = vmatprep.subr.bf16.mxu0 0
        %5414 = vmatpush1.bf16.msra.mxu0 0
        %5415 = vmatprep.subr.bf16.mxu0 0
        %5416 = vmatpush1.bf16.msra.mxu0 0
        %5417 = vmatprep.subr.bf16.mxu0 0
        %5418 = vmatpush1.bf16.msra.mxu0 0
        %5419 = vmatprep.subr.bf16.mxu0 0
        %5420 = vmatpush1.bf16.msra.mxu0 0
        %5421 = vmatprep.subr.bf16.mxu0 0
        %5422 = vmatpush1.bf16.msra.mxu0 0
        %5423 = vmatprep.mubr.bf16.mxu0 0
        %5424 = vmatmul.mubr.bf16.gmra.mrb[0].mxu0 %v5385
        %v5425 = vpop.f32.mrb[0].mxu0
        %v5426 = vadd.f32 %v5349, %v5425
        %v5427 = vpop.f32.mrb[0].mxu0
        %v5428 = vpop.f32.mrb[0].mxu0
        %v5429 = vadd.f32 %v5349, %v5428
        %v5430 = vpop.f32.mrb[0].mxu0
        %5431 = vdwg.mxu0
        %5432 = vmax.xlane.f32.xlu0 %v5426
        %v5433 = vpop.xlane.xlu0 %5432
        %5434 = vmax.xlane.f32.xlu0 %v5429
        %v5435 = vpop.xlane.xlu0 %5434
        %v5436 = vsub.f32 %v5426, %v5433
        %v5437 = vsub.f32 %v5429, %v5435
        %v5438 = vmul.f32 %v5436, 1.442695
        %v5439 = vpow.pop %v5438
        %v5440 = vmul.f32 %v5437, 1.442695
        %v5441 = vpow.pop %v5440
        %5442 = vadd.xlane.f32.xlu0 %v5439
        %v5443 = vpop.xlane.xlu0 %5442
        %5444 = vadd.xlane.f32.xlu0 %v5441
        %v5445 = vpop.xlane.xlu0 %5444
        %v5446 = vrcp.pop %v5443
        %v5447 = vmul.f32 %v5439, %v5446
        %v5448 = vrcp.pop %v5445
        %v5449 = vmul.f32 %v5441, %v5448
        %5450 = vst [vmem:[%s595] sm:$0xff] %v5447
        %5451 = vst [vmem:[%s595 + $0x8] sm:$0xff] %v5449
        %s5452 = smul.u32 2, %s20
        %p5453 = scmp.lt.s32.totalorder %s5452, 5
        %s5454 = scalar_select %p5453, %s5452, 5
        %s5455 = smul.addr %s5454, 8
        %s5456 = scalar_lea.vmem %s9, %s5455
        // Predicated region
        $region98: #{cnn_mnist_forward.1} parent=92 // pred_check
          %p5457 = pneg %p232
        $region99: #{cnn_mnist_forward.1} parent=92 // pred_check_branch
          %5459 = sbr.rel (%p5457) target = $region101
        $region100: #{cnn_mnist_forward.1} parent=92 // pred_region
          %s5460 = smul.u32 2, %s20
        $region101: #{cnn_mnist_forward.1} parent=92 // pred_fallthru
          _
      $region93: #{cnn_mnist_forward.1} parent=5 // pred_fallthru
        _
      %p5461 = scmp.le.s32.totalorder 2, %s15
      // Predicated region
      $region102: #{cnn_mnist_forward.1} parent=5 // pred_check
        %p5462 = pneg %p5461
      $region103: #{cnn_mnist_forward.1} parent=5 // pred_check_branch
        %5464 = sbr.rel (%p5462) target = $region105
      $region104: #{cnn_mnist_forward.1} parent=5 // pred_region
        %s5465 = ssub.s32 %s15, 2
        // Predicated region
        $region106: #{cnn_mnist_forward.1} parent=104 // pred_check
          %p5466 = pneg %p238
        $region107: #{cnn_mnist_forward.1} parent=104 // pred_check_branch
          %5468 = sbr.rel (%p5466) target = $region109
        $region108: #{cnn_mnist_forward.1} parent=104 // pred_region
          %s5469 = smul.u32 2, %s21
          %p5470 = scmp.lt.s32.totalorder %s5469, 5
          %s5471 = scalar_select %p5470, %s5469, 5
          %s5472 = smul.addr %s5471, 8
          %s5473 = scalar_lea.vmem %s9, %s5472
        $region109: #{cnn_mnist_forward.1} parent=104 // pred_fallthru
          _
      $region105: #{cnn_mnist_forward.1} parent=5 // pred_fallthru
        _
    $region6: #{cnn_mnist_forward.1} parent=1 // loop_footer
      %s19 = sadd.s32 1, %s15
    $region7: #{cnn_mnist_forward.1} parent=1 // loop_footer_branch
      %14 = sbr.rel target = $region3
    $region8: #{cnn_mnist_forward.1} parent=1 // loop_exit
      _

</llo_original>
